<compile_context>
chip_gen: v7x
topology: tpu7x:2x2x1
jax: 0.10.0
libtpu: 0.0.40
codegen_flags: <defaults>
</compile_context>

<pallas_src>
import jax
import jax.numpy as jnp
from jax.experimental import pallas as pl
from jax.experimental.pallas import tpu as pltpu

GN_GROUPS = 16
EPS = 1e-5
CMID = 128                       # channels produced by each stuff head
# Explicit scoped-VMEM budget (defaults are 16/32 MiB); keep headroom vs the 64 MiB
# physical VMEM of v7x.
VMEM_LIMIT = 48 * 1024 * 1024


# ----------------------------- in-kernel helpers -----------------------------

def _conv3x3(xp, ml, mr, w_ref, b_ref, Hs, W):
    """3x3 same-padded conv on an H-padded flat strip.

    xp    : ((Hs+2)*W, Cin) bf16 -- strip with one halo row above and below already
            concatenated (zeros at image borders).
    ml/mr : ((Hs+2)*W, 1) bf16 masks zeroing the W-wrapped left/right neighbours.
    w_ref : (3, 3, Cin, Cout) bf16 taps (kh=0 is the top tap, kw=0 the left tap);
            b_ref: (1, Cout) f32.
    Returns (Hs*W, Cout) f32.

    W-shifted copies are built with static sublane slices + concat (no pltpu.roll),
    each tap is its own K=Cin bf16 MXU matmul (9 dots) -- no 3*Cin K-concat buffer is
    materialized and everything stays bf16 until the f32 MXU accumulator.
    """
    G, cin = xp.shape
    HW = Hs * W
    cout = w_ref.shape[-1]
    zrow = jnp.zeros((1, cin), jnp.bfloat16)
    xl = jnp.concatenate([zrow, xp[:G - 1]], axis=0) * ml       # x[h, w-1]
    xr = jnp.concatenate([xp[1:], zrow], axis=0) * mr           # x[h, w+1]
    shifted = (xl, xp, xr)
    acc = jnp.zeros((HW, cout), jnp.float32)
    for dh in range(3):
        for dw in range(3):
            acc = acc + jnp.dot(shifted[dw][dh * W: dh * W + HW, :],
                                w_ref[dh, dw],
                                preferred_element_type=jnp.float32)
    return acc + b_ref[...]


# --------------------- head pass 1: conv1 + GN partial sums ---------------------

def _make_conv_gn_kernel(spr, W):
    def kernel(x_ref, ha_ref, hb_ref, ml_ref, mr_ref, w_ref, b_ref, a_ref, st_ref):
        s = pl.program_id(1)
        top = jnp.where(s > 0, 1.0, 0.0).astype(jnp.bfloat16)                 # zero halo at image top
        bot = jnp.where(s < pl.num_programs(1) - 1, 1.0, 0.0).astype(jnp.bfloat16)
        xp = jnp.concatenate([ha_ref[0] * top, x_ref[0], hb_ref[0] * bot], axis=0)
        a = _conv3x3(xp, ml_ref[...], mr_ref[...], w_ref, b_ref, spr, W)       # (spr*W, 128) f32
        a_ref[0] = a
        # per-strip channel sums for GroupNorm (reduced over strips in the wrapper)
        st_ref[0, 0] = jnp.concatenate(
            [jnp.sum(a, axis=0, keepdims=True),
             jnp.sum(a * a, axis=0, keepdims=True)], axis=0)                   # (2, 128)
    return kernel


def run_head_pass1(x, ml, mr, w1, b1, H, W, spr):
    N, HW, cin = x.shape
    S = H // spr
    G = (spr + 2) * W
    in_specs = [
        pl.BlockSpec((1, spr * W, cin), lambda n, s: (n, s, 0)),
        # 1-row halos: the same input array with W-row blocks indexed by image row,
        # clamped at the borders (zeroed in-kernel).
        pl.BlockSpec((1, W, cin), lambda n, s: (n, jnp.maximum(s * spr - 1, 0), 0)),
        pl.BlockSpec((1, W, cin), lambda n, s: (n, jnp.minimum((s + 1) * spr, H - 1), 0)),
        pl.BlockSpec((G, 1), lambda n, s: (0, 0)),
        pl.BlockSpec((G, 1), lambda n, s: (0, 0)),
        pl.BlockSpec((3, 3, cin, CMID), lambda n, s: (0, 0, 0, 0)),
        pl.BlockSpec((1, CMID), lambda n, s: (0, 0)),
    ]
    out_specs = (
        pl.BlockSpec((1, spr * W, CMID), lambda n, s: (n, s, 0)),
        pl.BlockSpec((1, 1, 2, CMID), lambda n, s: (n, s, 0, 0)),
    )
    return pl.pallas_call(
        _make_conv_gn_kernel(spr, W),
        out_shape=(jax.ShapeDtypeStruct((N, HW, CMID), jnp.float32),
                   jax.ShapeDtypeStruct((N, S, 2, CMID), jnp.float32)),
        grid=(N, S),
        in_specs=in_specs,
        out_specs=out_specs,
        compiler_params=pltpu.CompilerParams(
            dimension_semantics=("parallel", "parallel"),
            vmem_limit_bytes=VMEM_LIMIT),
    )(x, x, x, ml, mr, w1, b1)


# --------------- head pass 2: GN affine + conv2 + BN partial sums ---------------

def _make_gn_conv_bn_kernel(spr, W):
    def kernel(a_ref, ha_ref, hb_ref, sc_ref, sh_ref, ml_ref, mr_ref, w_ref, b_ref,
               z_ref, st_ref):
        s = pl.program_id(1)
        top = jnp.where(s > 0, 1.0, 0.0).astype(jnp.float32)
        bot = jnp.where(s < pl.num_programs(1) - 1, 1.0, 0.0).astype(jnp.float32)
        sc = sc_ref[0]                                        # (1, 128) per-sample GN scale
        sh = sh_ref[0]                                        # (1, 128) per-sample GN shift
        y_mid = a_ref[0] * sc + sh
        y_top = (ha_ref[0] * sc + sh) * top                   # zero-pad (post-GN) at image borders
        y_bot = (hb_ref[0] * sc + sh) * bot
        yp = jnp.concatenate([y_top, y_mid, y_bot], axis=0).astype(jnp.bfloat16)
        z = _conv3x3(yp, ml_ref[...], mr_ref[...], w_ref, b_ref, spr, W)       # (spr*W, 128) f32
        z_ref[0] = z.astype(jnp.bfloat16)
        # per-strip partial sums for training-mode BatchNorm (folded in the wrapper)
        st_ref[0, 0] = jnp.concatenate(
            [jnp.sum(z, axis=0, keepdims=True),
             jnp.sum(z * z, axis=0, keepdims=True)], axis=0)
    return kernel


def run_head_pass2(a, gn_scale, gn_shift, ml, mr, w2, b2, H, W, spr):
    N, HW, _ = a.shape
    S = H // spr
    G = (spr + 2) * W
    in_specs = [
        pl.BlockSpec((1, spr * W, CMID), lambda n, s: (n, s, 0)),
        pl.BlockSpec((1, W, CMID), lambda n, s: (n, jnp.maximum(s * spr - 1, 0), 0)),
        pl.BlockSpec((1, W, CMID), lambda n, s: (n, jnp.minimum((s + 1) * spr, H - 1), 0)),
        pl.BlockSpec((1, 1, CMID), lambda n, s: (n, 0, 0)),
        pl.BlockSpec((1, 1, CMID), lambda n, s: (n, 0, 0)),
        pl.BlockSpec((G, 1), lambda n, s: (0, 0)),
        pl.BlockSpec((G, 1), lambda n, s: (0, 0)),
        pl.BlockSpec((3, 3, CMID, CMID), lambda n, s: (0, 0, 0, 0)),
        pl.BlockSpec((1, CMID), lambda n, s: (0, 0)),
    ]
    out_specs = (
        pl.BlockSpec((1, spr * W, CMID), lambda n, s: (n, s, 0)),
        pl.BlockSpec((1, 1, 2, CMID), lambda n, s: (n, s, 0, 0)),
    )
    return pl.pallas_call(
        _make_gn_conv_bn_kernel(spr, W),
        out_shape=(jax.ShapeDtypeStruct((N, HW, CMID), jnp.bfloat16),
                   jax.ShapeDtypeStruct((N, S, 2, CMID), jnp.float32)),
        grid=(N, S),
        in_specs=in_specs,
        out_specs=out_specs,
        compiler_params=pltpu.CompilerParams(
            dimension_semantics=("parallel", "parallel"),
            vmem_limit_bytes=VMEM_LIMIT),
    )(a, a, a, gn_scale, gn_shift, ml, mr, w2, b2)


# -------- fused tail: classifier -> upsample-to-level0 -> sum -> x4 upsample --------

def _make_tail_kernel(T, dims, Kp, rpb):
    H0, W0 = dims[0]
    Wo = 4 * W0

    def _up_level(c, mh_ref, mw_ref, Hi, Wi):
        # Separable bilinear upsample of a (Hi*Wi, Kp) H-major map to (H0*W0, Kp).
        # Kp-narrow batched matmuls; only the (tiny) interp matrices are broadcast,
        # the data is cast to bf16 before every relayout/transpose.
        c3 = c.reshape(Hi, Wi, Kp).astype(jnp.bfloat16)
        mwb = jnp.broadcast_to(mw_ref[...][None, :, :], (Hi, W0, Wi))
        t = jnp.einsum('how,hwc->hoc', mwb, c3,
                       preferred_element_type=jnp.float32)                     # (Hi, W0, Kp)
        t = jnp.transpose(t.astype(jnp.bfloat16), (1, 0, 2))                   # (W0, Hi, Kp)
        mhb = jnp.broadcast_to(mh_ref[...][None, :, :], (W0, H0, Hi))
        o = jnp.einsum('woh,whc->woc', mhb, t,
                       preferred_element_type=jnp.float32)                     # (W0, H0, Kp)
        o = jnp.transpose(o, (1, 0, 2))                                        # (H0, W0, Kp)
        return o.reshape(H0 * W0, Kp)

    def kernel(*refs):
        z_refs = refs[:T]
        up_refs = refs[T:T + 2 * (T - 1)]
        base = T + 2 * (T - 1)
        wc_ref, bc_ref, mh4_ref, mw4t_ref = refs[base:base + 4]
        out_ref = refs[base + 4]
        s_scr = refs[base + 5]
        rb = pl.program_id(1)

        @pl.when(rb == 0)
        def _():
            # (BN-folded) 1x1 classifier applied BEFORE upsampling (exact: bilinear
            # interp commutes with a per-pixel linear map), so all tail
            # intermediates carry only Kp channels instead of 128.
            s = jnp.dot(z_refs[0][0], wc_ref[0],
                        preferred_element_type=jnp.float32) + bc_ref[...]      # (H0*W0, Kp)
            for i in range(1, T):
                Hi, Wi = dims[i]
                c = jnp.dot(z_refs[i][0], wc_ref[i],
                            preferred_element_type=jnp.float32)                # (Hi*Wi, Kp)
                s = s + _up_level(c, up_refs[2 * (i - 1)], up_refs[2 * (i - 1) + 1],
                                  Hi, Wi)
            # Cache the summed map channel-major (Kp, H0, W0): one small relayout per
            # sample instead of one per output row block.
            s3 = s.reshape(H0, W0, Kp).astype(jnp.bfloat16)
            s_scr[...] = jnp.transpose(jnp.transpose(s3, (0, 2, 1)), (1, 0, 2))

        # Final x4 bilinear upsample, one output row block per grid step:
        # H-interp as a Kp-batched matmul, W-interp as a single lane-dense matmul,
        # written directly in NCHW-compatible (Kp, rows, Wo) layout.
        mh_b = jnp.broadcast_to(mh4_ref[...][None, :, :], (Kp, rpb, H0))
        t = jnp.einsum('krh,khw->krw', mh_b, s_scr[...],
                       preferred_element_type=jnp.float32)                     # (Kp, rpb, W0)
        t2 = t.reshape(Kp * rpb, W0).astype(jnp.bfloat16)
        o = jnp.dot(t2, mw4t_ref[...], preferred_element_type=jnp.float32)     # (Kp*rpb, Wo)
        out_ref[0] = o.reshape(Kp, rpb, Wo)

    return kernel


def run_tail(zs, lvl_mats, mh4, mw4t, wc_fold, bc, dims, Kp, rpb):
    T = len(zs)
    N = zs[0].shape[0]
    H0, W0 = dims[0]
    Ho, Wo = 4 * H0, 4 * W0
    RB = Ho // rpb

    in_specs = []
    for i in range(T):
        Hi, Wi = dims[i]
        in_specs.append(pl.BlockSpec((1, Hi * Wi, CMID), lambda n, rb: (n, 0, 0)))
    for m in lvl_mats:
        in_specs.append(pl.BlockSpec(m.shape, lambda n, rb: (0, 0)))
    in_specs += [
        pl.BlockSpec((T, CMID, Kp), lambda n, rb: (0, 0, 0)),
        pl.BlockSpec((1, Kp), lambda n, rb: (0, 0)),
        pl.BlockSpec((rpb, H0), lambda n, rb: (rb, 0)),     # row block of the x4 H-interp
        pl.BlockSpec((W0, Wo), lambda n, rb: (0, 0)),
    ]
    return pl.pallas_call(
        _make_tail_kernel(T, dims, Kp, rpb),
        out_shape=jax.ShapeDtypeStruct((N, Kp, Ho, Wo), jnp.float32),
        grid=(N, RB),
        in_specs=in_specs,
        out_specs=pl.BlockSpec((1, Kp, rpb, Wo), lambda n, rb: (n, 0, rb, 0)),
        scratch_shapes=[pltpu.VMEM((Kp, H0, W0), jnp.bfloat16)],
        compiler_params=pltpu.CompilerParams(
            dimension_semantics=("parallel", "arbitrary"),
            vmem_limit_bytes=VMEM_LIMIT),
    )(*zs, *lvl_mats, wc_fold, bc, mh4, mw4t)


# ----------------------------- glue (plain JAX) -----------------------------

def _bilinear_matrix(out_size, in_size):
    """F.interpolate(mode='bilinear', align_corners=False) weights along one axis."""
    if out_size == in_size:
        return jnp.eye(out_size, dtype=jnp.float32)
    scale = in_size / out_size
    o = jnp.arange(out_size, dtype=jnp.float32)
    src = jnp.maximum((o + 0.5) * scale - 0.5, 0.0)
    i0 = jnp.minimum(jnp.floor(src).astype(jnp.int32), in_size - 1)
    i1 = jnp.minimum(i0 + 1, in_size - 1)
    w1 = src - i0.astype(jnp.float32)
    w0 = 1.0 - w1
    rows = jnp.arange(out_size)
    M = jnp.zeros((out_size, in_size), jnp.float32)
    M = M.at[rows, i0].add(w0)
    M = M.at[rows, i1].add(w1)
    return M


def _border_masks(Hs, W):
    w = jnp.arange((Hs + 2) * W, dtype=jnp.int32) % W
    ml = (w > 0).astype(jnp.bfloat16)[:, None]          # zero where w-1 is out of range
    mr = (w < W - 1).astype(jnp.bfloat16)[:, None]      # zero where w+1 is out of range
    return ml, mr


def _pick_strip(H, W, max_pixels):
    """Largest row-strip height that divides H and keeps the strip <= max_pixels."""
    best = 1
    for d in range(1, H + 1):
        if H % d == 0 and d * W <= max_pixels:
            best = d
    return best


def _pick_row_block(Ho, Wo, max_pixels):
    """Largest multiple-of-8 divisor of Ho whose output block is <= max_pixels."""
    if Ho % 8 != 0:
        return Ho
    best = None
    for d in range(8, Ho + 1, 8):
        if Ho % d == 0 and d * Wo <= max_pixels:
            best = d
    return best if best is not None else 8


def init_params(key, total_outputs, num_classes, cin=256):
    ks = jax.random.split(key, total_outputs * 4 + 2)
    heads = []
    for i in range(total_outputs):
        k1, k2, k3, k4 = ks[4 * i: 4 * i + 4]
        heads.append(dict(
            # 3x3 conv weights stored (kh, kw, Cin, Cout); to load real PyTorch
            # weights permute torch's (Cout, Cin, kh, kw) -> (kh, kw, Cin, Cout).
            w1=(jax.random.normal(k1, (3, 3, cin, CMID), jnp.float32) * 0.02
                ).astype(jnp.bfloat16),
            b1=jax.random.normal(k2, (1, CMID), jnp.float32) * 0.02,
            gn_gamma=jnp.ones((1, CMID), jnp.float32),
            gn_beta=jnp.zeros((1, CMID), jnp.float32),
            w2=(jax.random.normal(k3, (3, 3, CMID, CMID), jnp.float32) * 0.02
                ).astype(jnp.bfloat16),
            b2=jax.random.normal(k4, (1, CMID), jnp.float32) * 0.02,
            bn_gamma=jnp.ones((CMID,), jnp.float32),
            bn_beta=jnp.zeros((CMID,), jnp.float32),
        ))
    wc = jax.random.normal(ks[-2], (total_outputs, CMID, num_classes), jnp.float32) * 0.02
    bc = jax.random.normal(ks[-1], (num_classes,), jnp.float32) * 0.02
    g = jnp.arange(CMID) // (CMID // GN_GROUPS)
    proj = (g[:, None] == g[None, :]).astype(jnp.float32)   # GN group-membership projection
    return dict(heads=heads, proj=proj, wc=wc, bc=bc, num_classes=num_classes)


def tascnet_forward(fpn_outs_nchw, params, max_strip_pixels=2048, max_tail_pixels=16384):
    """Forward of _TascNet (use_aspp=False). Inputs: list of NCHW arrays [N, 256, Hi, Wi]."""
    T = len(fpn_outs_nchw)
    K = params['num_classes']
    Kp = ((K + 7) // 8) * 8                      # class dim padded to a sublane multiple
    N = fpn_outs_nchw[0].shape[0]
    proj = params['proj']

    zs, bn_stats, dims = [], [], []
    for i, x_nchw in enumerate(fpn_outs_nchw):
        _, cin, H, W = x_nchw.shape
        assert W % 8 == 0, "feature-map width must be a multiple of 8"
        p = params['heads'][i]
        x = jnp.transpose(x_nchw, (0, 2, 3, 1)).reshape(N, H * W, cin).astype(jnp.bfloat16)
        spr = _pick_strip(H, W, max_strip_pixels)
        ml, mr = _border_masks(spr, W)

        # pass 1: conv1 + per-strip GroupNorm partial sums
        a, st1 = run_head_pass1(x, ml, mr, p['w1'], p['b1'], H, W, spr)

        # GroupNorm(16, 128): reduce strip partials, expand to per-channel scale/shift.
        # TODO(synk): E[x^2]-E[x]^2 is cancellation-prone for large-mean activations;
        #             clamped at 0 here, switch to a centered pass if it matters.
        cnt = jnp.float32(H * W * (CMID // GN_GROUPS))
        gmean = (jnp.sum(st1[:, :, 0, :], axis=1) @ proj) / cnt
        gvar = jnp.maximum((jnp.sum(st1[:, :, 1, :], axis=1) @ proj) / cnt
                           - gmean * gmean, 0.0)
        gscale = p['gn_gamma'] * jax.lax.rsqrt(gvar + EPS)
        gshift = p['gn_beta'] - gmean * gscale

        # pass 2: GN affine + conv2 + per-strip BatchNorm partial sums
        z, st2 = run_head_pass2(a, gscale[:, None, :], gshift[:, None, :], ml, mr,
                                p['w2'], p['b2'], H, W, spr)
        zs.append(z)
        bn_stats.append(st2)
        dims.append((H, W))
    H0, W0 = dims[0]

    # Fold each level's training-mode BatchNorm into the 1x1 classifier (exact: the
    # per-channel affine commutes with bilinear upsampling), padding classes K -> Kp.
    bc = jnp.zeros((1, Kp), jnp.float32).at[0, :K].set(params['bc'])
    wcs = []
    for i in range(T):
        p = params['heads'][i]
        cnt = jnp.float32(N * dims[i][0] * dims[i][1])
        mean = jnp.sum(bn_stats[i][:, :, 0, :], axis=(0, 1)) / cnt
        var = jnp.maximum(jnp.sum(bn_stats[i][:, :, 1, :], axis=(0, 1)) / cnt
                          - mean * mean, 0.0)
        scale = p['bn_gamma'] * jax.lax.rsqrt(var + EPS)
        shift = p['bn_beta'] - mean * scale
        wci = jnp.zeros((CMID, Kp), jnp.float32).at[:, :K].set(params['wc'][i])
        wcs.append((wci * scale[:, None]).astype(jnp.bfloat16))
        bc = bc + jnp.dot(shift, wci)[None, :]
    wc_fold = jnp.stack(wcs, axis=0)                             # (T, 128, Kp) bf16

    # Separable bilinear-interp matrices (align_corners=False).
    lvl_mats = []
    for i in range(1, T):
        Hi, Wi = dims[i]
        lvl_mats += [_bilinear_matrix(H0, Hi).astype(jnp.bfloat16),
                     _bilinear_matrix(W0, Wi).astype(jnp.bfloat16)]
    mh4 = _bilinear_matrix(4 * H0, H0).astype(jnp.bfloat16)
    mw4t = jnp.transpose(_bilinear_matrix(4 * W0, W0)).astype(jnp.bfloat16)

    rpb = _pick_row_block(4 * H0, 4 * W0, max_tail_pixels)
    out = run_tail(zs, lvl_mats, mh4, mw4t, wc_fold, bc, dims, Kp, rpb)
    return (out[:, :K],)                                         # already NCHW


if __name__ == "__main__":
    key = jax.random.PRNGKey(0)
    k_in0, k_in1, k_par = jax.random.split(key, 3)

    N = 2
    total_outputs = 2
    num_classes = 8
    # FPN feature maps: 256 channels (fixed by the stuff head), decreasing resolution.
    fpn = [
        jax.random.normal(k_in0, (N, 256, 16, 16), jnp.float32),
        jax.random.normal(k_in1, (N, 256, 8, 8), jnp.float32),
    ]
    params = init_params(k_par, total_outputs, num_classes)

    # Small strip / row-block budgets so the spatial grid axes (head row strips,
    # tail output row blocks) are exercised even at these toy sizes.
    out = tascnet_forward(fpn, params, max_strip_pixels=128, max_tail_pixels=2048)
    out = jax.block_until_ready(out)
    assert out[0].shape == (N, num_classes, 64, 64), out[0].shape
    assert bool(jnp.all(jnp.isfinite(out[0])))
    print("KERNEL_OK")
</pallas_src>

<mosaic_0001>
module attributes {stable_mosaic.version = 11 : i64} {
  func.func @kernel(%arg0: i32, %arg1: i32, %arg2: memref<1x128x256xbf16, #tpu.memory_space<vmem>>, %arg3: memref<1x16x256xbf16, #tpu.memory_space<vmem>>, %arg4: memref<1x16x256xbf16, #tpu.memory_space<vmem>>, %arg5: memref<160x1xbf16, #tpu.memory_space<vmem>>, %arg6: memref<160x1xbf16, #tpu.memory_space<vmem>>, %arg7: memref<3x3x256x128xbf16, #tpu.memory_space<vmem>>, %arg8: memref<1x128xf32, #tpu.memory_space<vmem>>, %arg9: memref<1x128x128xf32, #tpu.memory_space<vmem>>, %arg10: memref<1x1x2x128xf32, #tpu.memory_space<vmem>>) attributes {dimension_semantics = [#tpu.dimension_semantics<parallel>, #tpu.dimension_semantics<parallel>], iteration_bounds = array<i64: 2, 2>, scalar_prefetch = 0 : i64, scratch_operands = 0 : i64, tpu.core_type = #tpu.core_type<tc>, window_params = [{transform_indices = @transform_0, window_bounds = array<i64: 1, 128, 256>}, {transform_indices = @transform_1, window_bounds = array<i64: 1, 16, 256>}, {transform_indices = @transform_2, window_bounds = array<i64: 1, 16, 256>}, {pipeline_mode = #tpu.pipeline_mode<synchronous>, transform_indices = @transform_3, window_bounds = array<i64: 160, 1>}, {pipeline_mode = #tpu.pipeline_mode<synchronous>, transform_indices = @transform_4, window_bounds = array<i64: 160, 1>}, {pipeline_mode = #tpu.pipeline_mode<synchronous>, transform_indices = @transform_5, window_bounds = array<i64: 3, 3, 256, 128>}, {pipeline_mode = #tpu.pipeline_mode<synchronous>, transform_indices = @transform_6, window_bounds = array<i64: 1, 128>}, {transform_indices = @transform_7, window_bounds = array<i64: 1, 128, 128>}, {transform_indices = @transform_8, window_bounds = array<i64: 1, 1, 2, 128>}]} {
    %c0_i32 = arith.constant 0 : i32
    %0 = arith.cmpi sgt, %arg1, %c0_i32 : i32
    %cst = arith.constant 1.000000e+00 : f32
    %cst_0 = arith.constant 0.000000e+00 : f32
    %1 = arith.select %0, %cst, %cst_0 : f32
    %2 = arith.truncf %1 : f32 to bf16
    %c1_i32 = arith.constant 1 : i32
    %3 = arith.cmpi slt, %arg1, %c1_i32 : i32
    %cst_1 = arith.constant 1.000000e+00 : f32
    %cst_2 = arith.constant 0.000000e+00 : f32
    %4 = arith.select %3, %cst_1, %cst_2 : f32
    %5 = arith.truncf %4 : f32 to bf16
    %c0 = arith.constant 0 : index
    %c0_3 = arith.constant 0 : index
    %c0_4 = arith.constant 0 : index
    %6 = vector.load %arg3[%c0, %c0_3, %c0_4] : memref<1x16x256xbf16, #tpu.memory_space<vmem>>, vector<1x16x256xbf16>
    %7 = vector.shape_cast %6 : vector<1x16x256xbf16> to vector<16x256xbf16>
    %8 = vector.broadcast %2 : bf16 to vector<16x256xbf16>
    %9 = arith.mulf %7, %8 : vector<16x256xbf16>
    %c0_5 = arith.constant 0 : index
    %c0_6 = arith.constant 0 : index
    %c0_7 = arith.constant 0 : index
    %10 = vector.load %arg2[%c0_5, %c0_6, %c0_7] : memref<1x128x256xbf16, #tpu.memory_space<vmem>>, vector<1x128x256xbf16>
    %11 = vector.shape_cast %10 : vector<1x128x256xbf16> to vector<128x256xbf16>
    %c0_8 = arith.constant 0 : index
    %c0_9 = arith.constant 0 : index
    %c0_10 = arith.constant 0 : index
    %12 = vector.load %arg4[%c0_8, %c0_9, %c0_10] : memref<1x16x256xbf16, #tpu.memory_space<vmem>>, vector<1x16x256xbf16>
    %13 = vector.shape_cast %12 : vector<1x16x256xbf16> to vector<16x256xbf16>
    %14 = vector.broadcast %5 : bf16 to vector<16x256xbf16>
    %15 = arith.mulf %13, %14 : vector<16x256xbf16>
    %16 = tpu.concatenate %9, %11, %15 in 0 : vector<16x256xbf16>, vector<128x256xbf16>, vector<16x256xbf16> -> vector<160x256xbf16>
    %c0_11 = arith.constant 0 : index
    %c0_12 = arith.constant 0 : index
    %17 = vector.load %arg5[%c0_11, %c0_12] : memref<160x1xbf16, #tpu.memory_space<vmem>>, vector<160x1xbf16>
    %c0_13 = arith.constant 0 : index
    %c0_14 = arith.constant 0 : index
    %18 = vector.load %arg6[%c0_13, %c0_14] : memref<160x1xbf16, #tpu.memory_space<vmem>>, vector<160x1xbf16>
    %cst_15 = arith.constant 0.000000e+00 : bf16
    %19 = vector.broadcast %cst_15 : bf16 to vector<1x256xbf16>
    %20 = vector.extract_strided_slice %16 {offsets = [0, 0], sizes = [159, 256], strides = [1, 1]} : vector<160x256xbf16> to vector<159x256xbf16>
    %21 = tpu.concatenate %19, %20 in 0 : vector<1x256xbf16>, vector<159x256xbf16> -> vector<160x256xbf16>
    %22 = vector.broadcast %17 : vector<160x1xbf16> to vector<160x256xbf16>
    %23 = arith.mulf %21, %22 : vector<160x256xbf16>
    %24 = vector.extract_strided_slice %16 {offsets = [1, 0], sizes = [159, 256], strides = [1, 1]} : vector<160x256xbf16> to vector<159x256xbf16>
    %25 = tpu.concatenate %24, %19 in 0 : vector<159x256xbf16>, vector<1x256xbf16> -> vector<160x256xbf16>
    %26 = vector.broadcast %18 : vector<160x1xbf16> to vector<160x256xbf16>
    %27 = arith.mulf %25, %26 : vector<160x256xbf16>
    %cst_16 = arith.constant 0.000000e+00 : f32
    %28 = vector.broadcast %cst_16 : f32 to vector<128x128xf32>
    %29 = vector.extract_strided_slice %23 {offsets = [0, 0], sizes = [128, 256], strides = [1, 1]} : vector<160x256xbf16> to vector<128x256xbf16>
    %c0_17 = arith.constant 0 : index
    %c0_18 = arith.constant 0 : index
    %c0_19 = arith.constant 0 : index
    %c0_20 = arith.constant 0 : index
    %30 = vector.load %arg7[%c0_17, %c0_18, %c0_19, %c0_20] : memref<3x3x256x128xbf16, #tpu.memory_space<vmem>>, vector<1x1x256x128xbf16>
    %31 = vector.shape_cast %30 : vector<1x1x256x128xbf16> to vector<256x128xbf16>
    %cst_21 = arith.constant dense<0.000000e+00> : vector<128x128xf32>
    %32 = tpu.matmul %29, %31, %cst_21 {dimension_numbers = #tpu.dot_dimension_numbers<[1], [0], [0], [1], [0, 0, 1, 1], [], []>} : vector<128x256xbf16>, vector<256x128xbf16>, vector<128x128xf32> -> vector<128x128xf32>
    %33 = arith.addf %28, %32 : vector<128x128xf32>
    %34 = vector.extract_strided_slice %16 {offsets = [0, 0], sizes = [128, 256], strides = [1, 1]} : vector<160x256xbf16> to vector<128x256xbf16>
    %c0_22 = arith.constant 0 : index
    %c1 = arith.constant 1 : index
    %c0_23 = arith.constant 0 : index
    %c0_24 = arith.constant 0 : index
    %35 = vector.load %arg7[%c0_22, %c1, %c0_23, %c0_24] : memref<3x3x256x128xbf16, #tpu.memory_space<vmem>>, vector<1x1x256x128xbf16>
    %36 = vector.shape_cast %35 : vector<1x1x256x128xbf16> to vector<256x128xbf16>
    %cst_25 = arith.constant dense<0.000000e+00> : vector<128x128xf32>
    %37 = tpu.matmul %34, %36, %cst_25 {dimension_numbers = #tpu.dot_dimension_numbers<[1], [0], [0], [1], [0, 0, 1, 1], [], []>} : vector<128x256xbf16>, vector<256x128xbf16>, vector<128x128xf32> -> vector<128x128xf32>
    %38 = arith.addf %33, %37 : vector<128x128xf32>
    %39 = vector.extract_strided_slice %27 {offsets = [0, 0], sizes = [128, 256], strides = [1, 1]} : vector<160x256xbf16> to vector<128x256xbf16>
    %c0_26 = arith.constant 0 : index
    %c2 = arith.constant 2 : index
    %c0_27 = arith.constant 0 : index
    %c0_28 = arith.constant 0 : index
    %40 = vector.load %arg7[%c0_26, %c2, %c0_27, %c0_28] : memref<3x3x256x128xbf16, #tpu.memory_space<vmem>>, vector<1x1x256x128xbf16>
    %41 = vector.shape_cast %40 : vector<1x1x256x128xbf16> to vector<256x128xbf16>
    %cst_29 = arith.constant dense<0.000000e+00> : vector<128x128xf32>
    %42 = tpu.matmul %39, %41, %cst_29 {dimension_numbers = #tpu.dot_dimension_numbers<[1], [0], [0], [1], [0, 0, 1, 1], [], []>} : vector<128x256xbf16>, vector<256x128xbf16>, vector<128x128xf32> -> vector<128x128xf32>
    %43 = arith.addf %38, %42 : vector<128x128xf32>
    %44 = vector.extract_strided_slice %23 {offsets = [16, 0], sizes = [128, 256], strides = [1, 1]} : vector<160x256xbf16> to vector<128x256xbf16>
    %c1_30 = arith.constant 1 : index
    %c0_31 = arith.constant 0 : index
    %c0_32 = arith.constant 0 : index
    %c0_33 = arith.constant 0 : index
    %45 = vector.load %arg7[%c1_30, %c0_31, %c0_32, %c0_33] : memref<3x3x256x128xbf16, #tpu.memory_space<vmem>>, vector<1x1x256x128xbf16>
    %46 = vector.shape_cast %45 : vector<1x1x256x128xbf16> to vector<256x128xbf16>
    %cst_34 = arith.constant dense<0.000000e+00> : vector<128x128xf32>
    %47 = tpu.matmul %44, %46, %cst_34 {dimension_numbers = #tpu.dot_dimension_numbers<[1], [0], [0], [1], [0, 0, 1, 1], [], []>} : vector<128x256xbf16>, vector<256x128xbf16>, vector<128x128xf32> -> vector<128x128xf32>
    %48 = arith.addf %43, %47 : vector<128x128xf32>
    %49 = vector.extract_strided_slice %16 {offsets = [16, 0], sizes = [128, 256], strides = [1, 1]} : vector<160x256xbf16> to vector<128x256xbf16>
    %c1_35 = arith.constant 1 : index
    %c1_36 = arith.constant 1 : index
    %c0_37 = arith.constant 0 : index
    %c0_38 = arith.constant 0 : index
    %50 = vector.load %arg7[%c1_35, %c1_36, %c0_37, %c0_38] : memref<3x3x256x128xbf16, #tpu.memory_space<vmem>>, vector<1x1x256x128xbf16>
    %51 = vector.shape_cast %50 : vector<1x1x256x128xbf16> to vector<256x128xbf16>
    %cst_39 = arith.constant dense<0.000000e+00> : vector<128x128xf32>
    %52 = tpu.matmul %49, %51, %cst_39 {dimension_numbers = #tpu.dot_dimension_numbers<[1], [0], [0], [1], [0, 0, 1, 1], [], []>} : vector<128x256xbf16>, vector<256x128xbf16>, vector<128x128xf32> -> vector<128x128xf32>
    %53 = arith.addf %48, %52 : vector<128x128xf32>
    %54 = vector.extract_strided_slice %27 {offsets = [16, 0], sizes = [128, 256], strides = [1, 1]} : vector<160x256xbf16> to vector<128x256xbf16>
    %c1_40 = arith.constant 1 : index
    %c2_41 = arith.constant 2 : index
    %c0_42 = arith.constant 0 : index
    %c0_43 = arith.constant 0 : index
    %55 = vector.load %arg7[%c1_40, %c2_41, %c0_42, %c0_43] : memref<3x3x256x128xbf16, #tpu.memory_space<vmem>>, vector<1x1x256x128xbf16>
    %56 = vector.shape_cast %55 : vector<1x1x256x128xbf16> to vector<256x128xbf16>
    %cst_44 = arith.constant dense<0.000000e+00> : vector<128x128xf32>
    %57 = tpu.matmul %54, %56, %cst_44 {dimension_numbers = #tpu.dot_dimension_numbers<[1], [0], [0], [1], [0, 0, 1, 1], [], []>} : vector<128x256xbf16>, vector<256x128xbf16>, vector<128x128xf32> -> vector<128x128xf32>
    %58 = arith.addf %53, %57 : vector<128x128xf32>
    %59 = vector.extract_strided_slice %23 {offsets = [32, 0], sizes = [128, 256], strides = [1, 1]} : vector<160x256xbf16> to vector<128x256xbf16>
    %c2_45 = arith.constant 2 : index
    %c0_46 = arith.constant 0 : index
    %c0_47 = arith.constant 0 : index
    %c0_48 = arith.constant 0 : index
    %60 = vector.load %arg7[%c2_45, %c0_46, %c0_47, %c0_48] : memref<3x3x256x128xbf16, #tpu.memory_space<vmem>>, vector<1x1x256x128xbf16>
    %61 = vector.shape_cast %60 : vector<1x1x256x128xbf16> to vector<256x128xbf16>
    %cst_49 = arith.constant dense<0.000000e+00> : vector<128x128xf32>
    %62 = tpu.matmul %59, %61, %cst_49 {dimension_numbers = #tpu.dot_dimension_numbers<[1], [0], [0], [1], [0, 0, 1, 1], [], []>} : vector<128x256xbf16>, vector<256x128xbf16>, vector<128x128xf32> -> vector<128x128xf32>
    %63 = arith.addf %58, %62 : vector<128x128xf32>
    %64 = vector.extract_strided_slice %16 {offsets = [32, 0], sizes = [128, 256], strides = [1, 1]} : vector<160x256xbf16> to vector<128x256xbf16>
    %c2_50 = arith.constant 2 : index
    %c1_51 = arith.constant 1 : index
    %c0_52 = arith.constant 0 : index
    %c0_53 = arith.constant 0 : index
    %65 = vector.load %arg7[%c2_50, %c1_51, %c0_52, %c0_53] : memref<3x3x256x128xbf16, #tpu.memory_space<vmem>>, vector<1x1x256x128xbf16>
    %66 = vector.shape_cast %65 : vector<1x1x256x128xbf16> to vector<256x128xbf16>
    %cst_54 = arith.constant dense<0.000000e+00> : vector<128x128xf32>
    %67 = tpu.matmul %64, %66, %cst_54 {dimension_numbers = #tpu.dot_dimension_numbers<[1], [0], [0], [1], [0, 0, 1, 1], [], []>} : vector<128x256xbf16>, vector<256x128xbf16>, vector<128x128xf32> -> vector<128x128xf32>
    %68 = arith.addf %63, %67 : vector<128x128xf32>
    %69 = vector.extract_strided_slice %27 {offsets = [32, 0], sizes = [128, 256], strides = [1, 1]} : vector<160x256xbf16> to vector<128x256xbf16>
    %c2_55 = arith.constant 2 : index
    %c2_56 = arith.constant 2 : index
    %c0_57 = arith.constant 0 : index
    %c0_58 = arith.constant 0 : index
    %70 = vector.load %arg7[%c2_55, %c2_56, %c0_57, %c0_58] : memref<3x3x256x128xbf16, #tpu.memory_space<vmem>>, vector<1x1x256x128xbf16>
    %71 = vector.shape_cast %70 : vector<1x1x256x128xbf16> to vector<256x128xbf16>
    %cst_59 = arith.constant dense<0.000000e+00> : vector<128x128xf32>
    %72 = tpu.matmul %69, %71, %cst_59 {dimension_numbers = #tpu.dot_dimension_numbers<[1], [0], [0], [1], [0, 0, 1, 1], [], []>} : vector<128x256xbf16>, vector<256x128xbf16>, vector<128x128xf32> -> vector<128x128xf32>
    %73 = arith.addf %68, %72 : vector<128x128xf32>
    %c0_60 = arith.constant 0 : index
    %c0_61 = arith.constant 0 : index
    %74 = vector.load %arg8[%c0_60, %c0_61] : memref<1x128xf32, #tpu.memory_space<vmem>>, vector<1x128xf32>
    %75 = vector.broadcast %74 : vector<1x128xf32> to vector<128x128xf32>
    %76 = arith.addf %73, %75 : vector<128x128xf32>
    %c0_62 = arith.constant 0 : index
    %c0_63 = arith.constant 0 : index
    %c0_64 = arith.constant 0 : index
    %77 = vector.load %arg9[%c0_62, %c0_63, %c0_64] : memref<1x128x128xf32, #tpu.memory_space<vmem>>, vector<1x128x128xf32>
    %78 = vector.shape_cast %77 : vector<1x128x128xf32> to vector<128x128xf32>
    %79 = vector.shape_cast %76 : vector<128x128xf32> to vector<1x128x128xf32>
    tpu.vector_store %arg9[%c0_62, %c0_63, %c0_64], %79 {strides = array<i32>} : memref<1x128x128xf32, #tpu.memory_space<vmem>>, vector<1x128x128xf32>,
    %cst_65 = arith.constant dense<0.000000e+00> : vector<128xf32>
    %80 = vector.multi_reduction <add>, %76, %cst_65 [0] : vector<128x128xf32> to vector<128xf32>
    %81 = vector.shape_cast %80 : vector<128xf32> to vector<1x128xf32>
    %82 = arith.mulf %76, %76 : vector<128x128xf32>
    %cst_66 = arith.constant dense<0.000000e+00> : vector<128xf32>
    %83 = vector.multi_reduction <add>, %82, %cst_66 [0] : vector<128x128xf32> to vector<128xf32>
    %84 = vector.shape_cast %83 : vector<128xf32> to vector<1x128xf32>
    %85 = tpu.concatenate %81, %84 in 0 : vector<1x128xf32>, vector<1x128xf32> -> vector<2x128xf32>
    %c0_67 = arith.constant 0 : index
    %c0_68 = arith.constant 0 : index
    %c0_69 = arith.constant 0 : index
    %c0_70 = arith.constant 0 : index
    %86 = vector.load %arg10[%c0_67, %c0_68, %c0_69, %c0_70] : memref<1x1x2x128xf32, #tpu.memory_space<vmem>>, vector<1x1x2x128xf32>
    %87 = vector.shape_cast %86 : vector<1x1x2x128xf32> to vector<2x128xf32>
    %88 = vector.shape_cast %85 : vector<2x128xf32> to vector<1x1x2x128xf32>
    tpu.vector_store %arg10[%c0_67, %c0_68, %c0_69, %c0_70], %88 {strides = array<i32>} : memref<1x1x2x128xf32, #tpu.memory_space<vmem>>, vector<1x1x2x128xf32>,
    return
  }
  func.func @transform_0(%arg0: i32, %arg1: i32) -> (i32, i32, i32) {
    %c0_i32 = arith.constant 0 : i32
    %c0_i32_0 = arith.constant 0 : i32
    return %arg0, %arg1, %c0_i32 : i32, i32, i32
  }
  func.func @transform_1(%arg0: i32, %arg1: i32) -> (i32, i32, i32) {
    %c8_i32 = arith.constant 8 : i32
    %0 = arith.muli %arg1, %c8_i32 : i32
    %c1_i32 = arith.constant 1 : i32
    %1 = arith.subi %0, %c1_i32 : i32
    %c0_i32 = arith.constant 0 : i32
    %2 = arith.maxsi %1, %c0_i32 : i32
    %c0_i32_0 = arith.constant 0 : i32
    %c0_i32_1 = arith.constant 0 : i32
    return %arg0, %2, %c0_i32_0 : i32, i32, i32
  }
  func.func @transform_2(%arg0: i32, %arg1: i32) -> (i32, i32, i32) {
    %c1_i32 = arith.constant 1 : i32
    %0 = arith.addi %arg1, %c1_i32 : i32
    %c8_i32 = arith.constant 8 : i32
    %1 = arith.muli %0, %c8_i32 : i32
    %c15_i32 = arith.constant 15 : i32
    %2 = arith.minsi %1, %c15_i32 : i32
    %c0_i32 = arith.constant 0 : i32
    %c0_i32_0 = arith.constant 0 : i32
    return %arg0, %2, %c0_i32 : i32, i32, i32
  }
  func.func @transform_3(%arg0: i32, %arg1: i32) -> (i32, i32) {
    %c0_i32 = arith.constant 0 : i32
    %c0_i32_0 = arith.constant 0 : i32
    %c0_i32_1 = arith.constant 0 : i32
    return %c0_i32, %c0_i32_0 : i32, i32
  }
  func.func @transform_4(%arg0: i32, %arg1: i32) -> (i32, i32) {
    %c0_i32 = arith.constant 0 : i32
    %c0_i32_0 = arith.constant 0 : i32
    %c0_i32_1 = arith.constant 0 : i32
    return %c0_i32, %c0_i32_0 : i32, i32
  }
  func.func @transform_5(%arg0: i32, %arg1: i32) -> (i32, i32, i32, i32) {
    %c0_i32 = arith.constant 0 : i32
    %c0_i32_0 = arith.constant 0 : i32
    %c0_i32_1 = arith.constant 0 : i32
    %c0_i32_2 = arith.constant 0 : i32
    %c0_i32_3 = arith.constant 0 : i32
    return %c0_i32, %c0_i32_0, %c0_i32_1, %c0_i32_2 : i32, i32, i32, i32
  }
  func.func @transform_6(%arg0: i32, %arg1: i32) -> (i32, i32) {
    %c0_i32 = arith.constant 0 : i32
    %c0_i32_0 = arith.constant 0 : i32
    %c0_i32_1 = arith.constant 0 : i32
    return %c0_i32, %c0_i32_0 : i32, i32
  }
  func.func @transform_7(%arg0: i32, %arg1: i32) -> (i32, i32, i32) {
    %c0_i32 = arith.constant 0 : i32
    %c0_i32_0 = arith.constant 0 : i32
    return %arg0, %arg1, %c0_i32 : i32, i32, i32
  }
  func.func @transform_8(%arg0: i32, %arg1: i32) -> (i32, i32, i32, i32) {
    %c0_i32 = arith.constant 0 : i32
    %c0_i32_0 = arith.constant 0 : i32
    %c0_i32_1 = arith.constant 0 : i32
    return %arg0, %arg1, %c0_i32, %c0_i32_0 : i32, i32, i32, i32
  }
}

</mosaic_0001>

<llo_original>
// kernel: tpu_custom_call.1
$region0: #{tpu_custom_call.1}
  #allocation0 [shape = 'u32[]', space=smem, size = 0x4, offset = 0x4, fixed_abs, tag = 'smem constant byte address 0x4 - core index']
  #allocation1 [shape = 'u32[144,128]{1,0:T(1,128)}', space=vmem, size = 0x12000, scoped, tag = 'internal scratch']
  %s0 = inlined_call_operand.hbm [shape: bf16[2,256,256], index: 0, kind: input, shape index: {}]
  %s1 = inlined_call_operand.hbm [shape: bf16[2,256,256], index: 1, kind: input, shape index: {}]
  %s2 = inlined_call_operand.hbm [shape: bf16[2,256,256], index: 2, kind: input, shape index: {}]
  %s3 = inlined_call_operand.vmem [shape: bf16[160,1], index: 3, kind: input, shape index: {}]
  %s4 = inlined_call_operand.vmem [shape: bf16[160,1], index: 4, kind: input, shape index: {}]
  %s5 = inlined_call_operand.hbm [shape: bf16[3,3,256,128], index: 5, kind: input, shape index: {}]
  %s6 = inlined_call_operand.vmem [shape: f32[1,128], index: 6, kind: input, shape index: {}]
  %s7 = inlined_call_operand.hbm [shape: f32[2,256,128], index: 7, kind: output, shape index: {0}]
  %s8 = inlined_call_operand.hbm [shape: f32[2,2,2,128], index: 8, kind: output, shape index: {1}]
  %9 = xla_tuple %s7, %s8
  %s10 = sld [smem:[#allocation0]]
  $region85: #{tpu_custom_call.1} parent=0
    _
  %s12 = ssub.s32 1, %s10
  %s13 = scalar_select 0, %s12, %s10
  $region1: #{tpu_custom_call.1} parent=0
    #allocation2 [shape = 'u8[131072]{0}', space=vmem, size = 0x20000, scoped, tag = 'input window, operand 0']
    #allocation3 [shape = 's32[2]{0}', space=sflag, size = 0x8, scoped, tag = 'scoped memory for tpu_custom_call.1']
    #allocation4 [shape = 's32[2]{0}', space=sflag, size = 0x8, scoped, tag = 'scoped memory for tpu_custom_call.1']
    #allocation5 [shape = 'u8[16384]{0}', space=vmem, size = 0x4000, scoped, tag = 'input window, operand 1']
    #allocation6 [shape = 's32[2]{0}', space=sflag, size = 0x8, scoped, tag = 'scoped memory for tpu_custom_call.1']
    #allocation7 [shape = 'u8[16384]{0}', space=vmem, size = 0x4000, scoped, tag = 'input window, operand 2']
    #allocation8 [shape = 'u8[589824]{0}', space=vmem, size = 0x90000, scoped, tag = 'input window, operand 5, single buffered']
    #allocation9 [shape = 's32[1]{0}', space=sflag, size = 0x4, scoped, tag = 'scoped memory for tpu_custom_call.1']
    #allocation10 [shape = 'u8[131072]{0}', space=vmem, size = 0x20000, scoped, tag = 'output window, operand 0']
    #allocation11 [shape = 'u8[2048]{0}', space=vmem, size = 0x800, scoped, tag = 'output window, operand 1']
    #allocation12 [shape = 's32[2]{0}', space=sflag, size = 0x8, scoped, tag = 'scoped memory for tpu_custom_call.1']
    %14 = vsyncpa [#allocation3], 0
    %s15 = scalar_lea.sflag [#allocation3], 1
    %16 = vsyncpa %s15, 0
    %17 = vsyncpa [#allocation6], 0
    %s18 = scalar_lea.sflag [#allocation6], 1
    %19 = vsyncpa %s18, 0
    %20 = vsyncpa [#allocation9], 0
    %21 = vsyncpa [#allocation4], 0
    %s22 = scalar_lea.sflag [#allocation4], 1
    %23 = vsyncpa %s22, 0
    %24 = vsyncpa [#allocation12], 0
    %s25 = scalar_lea.sflag [#allocation12], 1
    %26 = vsyncpa %s25, 0
    loop: start=0, step=1, limit=6
    $region2: #{tpu_custom_call.1} parent=1 // loop_pre_header
      _
    $region3: #{tpu_custom_call.1} parent=1 // loop_header
      %s28 = sphi 0, %s32
      %p29 = scmp.ge.s32.totalorder %s28, 6
      %s35 = sphi 0, %s47
      %s36 = sphi 0, %s43
      %s37 = sphi 0, %s35
      %s38 = sphi 0, %s36
      %s39 = sphi 0, %s37
      %s40 = sphi 0, %s38
      %s52 = sphi 0, %s54
      %s55 = sphi 0, %s52
      %s56 = sphi 0, %s55
      %s72 = sphi 0, %s56
      %s88 = sphi 0, %s90
      %s91 = sphi 0, %s88
      %s92 = sphi 0, %s91
      %s108 = sphi 0, %s92
      %s124 = sphi 0, %s126
      %s127 = sphi 0, %s124
      %s128 = sphi 0, %s127
      %s144 = sphi 0, %s128
      %s148 = sphi 0, %s148
      %s150 = sphi 0, %s148
      %s151 = sphi 0, %s150
      %s165 = sphi 0, %s151
      %s169 = sphi 0, %s169
      %s171 = sphi 0, %s169
      %s172 = sphi 0, %s171
      %s186 = sphi 0, %s172
      %s190 = sphi 0, %s190
      %s192 = sphi 0, %s190
      %s193 = sphi 0, %s192
      %s207 = sphi 0, %s193
      %s211 = sphi 0, %s211
      %s213 = sphi 0, %s211
      %s214 = sphi 0, %s213
      %s228 = sphi 0, %s214
      %s236 = sphi 0, %s238
      %s239 = sphi 0, %s236
      %s240 = sphi 0, %s239
      %s256 = sphi 0, %s240
      %s264 = sphi 0, %s266
      %s267 = sphi 0, %s264
      %s268 = sphi 0, %s267
      %s284 = sphi 0, %s268
    $region4: #{tpu_custom_call.1} parent=1 // loop_header_branch
      %31 = sbr.rel (%p29) target = $region8
    $region5: #{tpu_custom_call.1} parent=1 // loop_body
      %s33 = ssub.s32 %s28, 1
      %s34 = ssub.s32 %s28, 2
      %s41 = sadd.s32 1, %s36
      %p42 = scmp.ge.s32.totalorder %s41, 2
      %s43 = scalar_select %p42, 0, %s41
      %s44 = sadd.s32 1, %s35
      %s45 = scalar_select %p42, %s44, %s35
      %p46 = scmp.ge.s32.totalorder %s45, 2
      %s47 = scalar_select %p46, 0, %s45
      %s48 = ssub.s32 %s35, %s47
      %s49 = ssub.s32 %s36, %s43
      %s50 = sor.u32 %s48, %s49
      %p51 = scmp.eq.s32.totalorder %s50, 0
      %s53 = sadd.s32 %s52, 1
      %s54 = scalar_select %p51, %s52, %s53
      %p57 = pneg %p51
      %p58 = scmp.eq.s32.totalorder %s28, 3
      %p59 = por %p57, %p58
      %p60 = scmp.ne.s32.totalorder %s52, %s55
      %p61 = scmp.eq.s32.totalorder %s28, 0
      %p62 = por %p60, %p61
      %p63 = scmp.ne.s32.totalorder %s52, %s55
      %p64 = scmp.eq.s32.totalorder %s33, 3
      %p65 = por %p63, %p64
      %p66 = scmp.ne.s32.totalorder %s55, %s56
      %p67 = scmp.eq.s32.totalorder %s33, 0
      %p68 = por %p66, %p67
      %p69 = scmp.ne.s32.totalorder %s55, %s56
      %p70 = scmp.eq.s32.totalorder %s34, 3
      %p71 = por %p69, %p70
      %p73 = scmp.ne.s32.totalorder %s56, %s72
      %p74 = scmp.eq.s32.totalorder %s34, 0
      %p75 = por %p73, %p74
      %s76 = smul.u32 %s36, 8
      %s77 = ssub.s32 %s76, 1
      %p78 = scmp.gt.s32.totalorder %s77, 0
      %s79 = scalar_select %p78, %s77, 0
      %s80 = smul.u32 %s43, 8
      %s81 = ssub.s32 %s80, 1
      %p82 = scmp.gt.s32.totalorder %s81, 0
      %s83 = scalar_select %p82, %s81, 0
      %s84 = ssub.s32 %s35, %s47
      %s85 = ssub.s32 %s79, %s83
      %s86 = sor.u32 %s84, %s85
      %p87 = scmp.eq.s32.totalorder %s86, 0
      %s89 = sadd.s32 %s88, 1
      %s90 = scalar_select %p87, %s88, %s89
      %p93 = pneg %p87
      %p94 = scmp.eq.s32.totalorder %s28, 3
      %p95 = por %p93, %p94
      %p96 = scmp.ne.s32.totalorder %s88, %s91
      %p97 = scmp.eq.s32.totalorder %s28, 0
      %p98 = por %p96, %p97
      %p99 = scmp.ne.s32.totalorder %s88, %s91
      %p100 = scmp.eq.s32.totalorder %s33, 3
      %p101 = por %p99, %p100
      %p102 = scmp.ne.s32.totalorder %s91, %s92
      %p103 = scmp.eq.s32.totalorder %s33, 0
      %p104 = por %p102, %p103
      %p105 = scmp.ne.s32.totalorder %s91, %s92
      %p106 = scmp.eq.s32.totalorder %s34, 3
      %p107 = por %p105, %p106
      %p109 = scmp.ne.s32.totalorder %s92, %s108
      %p110 = scmp.eq.s32.totalorder %s34, 0
      %p111 = por %p109, %p110
      %s112 = sadd.s32 %s36, 1
      %s113 = smul.u32 %s112, 8
      %p114 = scmp.lt.s32.totalorder %s113, 15
      %s115 = scalar_select %p114, %s113, 15
      %s116 = sadd.s32 %s43, 1
      %s117 = smul.u32 %s116, 8
      %p118 = scmp.lt.s32.totalorder %s117, 15
      %s119 = scalar_select %p118, %s117, 15
      %s120 = ssub.s32 %s35, %s47
      %s121 = ssub.s32 %s115, %s119
      %s122 = sor.u32 %s120, %s121
      %p123 = scmp.eq.s32.totalorder %s122, 0
      %s125 = sadd.s32 %s124, 1
      %s126 = scalar_select %p123, %s124, %s125
      %p129 = pneg %p123
      %p130 = scmp.eq.s32.totalorder %s28, 3
      %p131 = por %p129, %p130
      %p132 = scmp.ne.s32.totalorder %s124, %s127
      %p133 = scmp.eq.s32.totalorder %s28, 0
      %p134 = por %p132, %p133
      %p135 = scmp.ne.s32.totalorder %s124, %s127
      %p136 = scmp.eq.s32.totalorder %s33, 3
      %p137 = por %p135, %p136
      %p138 = scmp.ne.s32.totalorder %s127, %s128
      %p139 = scmp.eq.s32.totalorder %s33, 0
      %p140 = por %p138, %p139
      %p141 = scmp.ne.s32.totalorder %s127, %s128
      %p142 = scmp.eq.s32.totalorder %s34, 3
      %p143 = por %p141, %p142
      %p145 = scmp.ne.s32.totalorder %s128, %s144
      %p146 = scmp.eq.s32.totalorder %s34, 0
      %p147 = por %p145, %p146
      %s149 = sadd.s32 %s148, 1
      %p152 = scmp.eq.s32.totalorder %s28, 3
      %p153 = scmp.ne.s32.totalorder %s148, %s150
      %p154 = scmp.eq.s32.totalorder %s28, 0
      %p155 = por %p153, %p154
      %p156 = scmp.ne.s32.totalorder %s148, %s150
      %p157 = scmp.eq.s32.totalorder %s33, 3
      %p158 = por %p156, %p157
      %p159 = scmp.ne.s32.totalorder %s150, %s151
      %p160 = scmp.eq.s32.totalorder %s33, 0
      %p161 = por %p159, %p160
      %p162 = scmp.ne.s32.totalorder %s150, %s151
      %p163 = scmp.eq.s32.totalorder %s34, 3
      %p164 = por %p162, %p163
      %p166 = scmp.ne.s32.totalorder %s151, %s165
      %p167 = scmp.eq.s32.totalorder %s34, 0
      %p168 = por %p166, %p167
      %s170 = sadd.s32 %s169, 1
      %p173 = scmp.eq.s32.totalorder %s28, 3
      %p174 = scmp.ne.s32.totalorder %s169, %s171
      %p175 = scmp.eq.s32.totalorder %s28, 0
      %p176 = por %p174, %p175
      %p177 = scmp.ne.s32.totalorder %s169, %s171
      %p178 = scmp.eq.s32.totalorder %s33, 3
      %p179 = por %p177, %p178
      %p180 = scmp.ne.s32.totalorder %s171, %s172
      %p181 = scmp.eq.s32.totalorder %s33, 0
      %p182 = por %p180, %p181
      %p183 = scmp.ne.s32.totalorder %s171, %s172
      %p184 = scmp.eq.s32.totalorder %s34, 3
      %p185 = por %p183, %p184
      %p187 = scmp.ne.s32.totalorder %s172, %s186
      %p188 = scmp.eq.s32.totalorder %s34, 0
      %p189 = por %p187, %p188
      %s191 = sadd.s32 %s190, 1
      %p194 = scmp.eq.s32.totalorder %s28, 3
      %p195 = scmp.ne.s32.totalorder %s190, %s192
      %p196 = scmp.eq.s32.totalorder %s28, 0
      %p197 = por %p195, %p196
      %p198 = scmp.ne.s32.totalorder %s190, %s192
      %p199 = scmp.eq.s32.totalorder %s33, 3
      %p200 = por %p198, %p199
      %p201 = scmp.ne.s32.totalorder %s192, %s193
      %p202 = scmp.eq.s32.totalorder %s33, 0
      %p203 = por %p201, %p202
      %p204 = scmp.ne.s32.totalorder %s192, %s193
      %p205 = scmp.eq.s32.totalorder %s34, 3
      %p206 = por %p204, %p205
      %p208 = scmp.ne.s32.totalorder %s193, %s207
      %p209 = scmp.eq.s32.totalorder %s34, 0
      %p210 = por %p208, %p209
      %s212 = sadd.s32 %s211, 1
      %p215 = scmp.eq.s32.totalorder %s28, 3
      %p216 = scmp.ne.s32.totalorder %s211, %s213
      %p217 = scmp.eq.s32.totalorder %s28, 0
      %p218 = por %p216, %p217
      %p219 = scmp.ne.s32.totalorder %s211, %s213
      %p220 = scmp.eq.s32.totalorder %s33, 3
      %p221 = por %p219, %p220
      %p222 = scmp.ne.s32.totalorder %s213, %s214
      %p223 = scmp.eq.s32.totalorder %s33, 0
      %p224 = por %p222, %p223
      %p225 = scmp.ne.s32.totalorder %s213, %s214
      %p226 = scmp.eq.s32.totalorder %s34, 3
      %p227 = por %p225, %p226
      %p229 = scmp.ne.s32.totalorder %s214, %s228
      %p230 = scmp.eq.s32.totalorder %s34, 0
      %p231 = por %p229, %p230
      %s232 = ssub.s32 %s35, %s47
      %s233 = ssub.s32 %s36, %s43
      %s234 = sor.u32 %s232, %s233
      %p235 = scmp.eq.s32.totalorder %s234, 0
      %s237 = sadd.s32 %s236, 1
      %s238 = scalar_select %p235, %s236, %s237
      %p241 = pneg %p235
      %p242 = scmp.eq.s32.totalorder %s28, 3
      %p243 = por %p241, %p242
      %p244 = scmp.ne.s32.totalorder %s236, %s239
      %p245 = scmp.eq.s32.totalorder %s28, 0
      %p246 = por %p244, %p245
      %p247 = scmp.ne.s32.totalorder %s236, %s239
      %p248 = scmp.eq.s32.totalorder %s33, 3
      %p249 = por %p247, %p248
      %p250 = scmp.ne.s32.totalorder %s239, %s240
      %p251 = scmp.eq.s32.totalorder %s33, 0
      %p252 = por %p250, %p251
      %p253 = scmp.ne.s32.totalorder %s239, %s240
      %p254 = scmp.eq.s32.totalorder %s34, 3
      %p255 = por %p253, %p254
      %p257 = scmp.ne.s32.totalorder %s240, %s256
      %p258 = scmp.eq.s32.totalorder %s34, 0
      %p259 = por %p257, %p258
      %s260 = ssub.s32 %s35, %s47
      %s261 = ssub.s32 %s36, %s43
      %s262 = sor.u32 %s260, %s261
      %p263 = scmp.eq.s32.totalorder %s262, 0
      %s265 = sadd.s32 %s264, 1
      %s266 = scalar_select %p263, %s264, %s265
      %p269 = pneg %p263
      %p270 = scmp.eq.s32.totalorder %s28, 3
      %p271 = por %p269, %p270
      %p272 = scmp.ne.s32.totalorder %s264, %s267
      %p273 = scmp.eq.s32.totalorder %s28, 0
      %p274 = por %p272, %p273
      %p275 = scmp.ne.s32.totalorder %s264, %s267
      %p276 = scmp.eq.s32.totalorder %s33, 3
      %p277 = por %p275, %p276
      %p278 = scmp.ne.s32.totalorder %s267, %s268
      %p279 = scmp.eq.s32.totalorder %s33, 0
      %p280 = por %p278, %p279
      %p281 = scmp.ne.s32.totalorder %s267, %s268
      %p282 = scmp.eq.s32.totalorder %s34, 3
      %p283 = por %p281, %p282
      %p285 = scmp.ne.s32.totalorder %s268, %s284
      %p286 = scmp.eq.s32.totalorder %s34, 0
      %p287 = por %p285, %p286
      %p288 = scmp.le.s32.totalorder 1, %s28
      %p289 = scmp.lt.s32.totalorder %s28, 5
      %p290 = pnand %p288, %p289
      %p291 = pneg %p290
      // Predicated region
      $region9: #{tpu_custom_call.1} parent=5 // pred_check
        _
      $region10: #{tpu_custom_call.1} parent=5 // pred_check_branch
        %293 = sbr.rel (%p290) target = $region12
      $region11: #{tpu_custom_call.1} parent=5 // pred_region
        %s294 = ssub.s32 %s28, 1
        // Predicated region
        $region13: #{tpu_custom_call.1} parent=11 // pred_check
          %p295 = pneg %p161
        $region14: #{tpu_custom_call.1} parent=11 // pred_check_branch
          %297 = sbr.rel (%p295) target = $region16
        $region15: #{tpu_custom_call.1} parent=11 // pred_region
          _
        $region16: #{tpu_custom_call.1} parent=11 // pred_fallthru
          _
        // Predicated region
        $region17: #{tpu_custom_call.1} parent=11 // pred_check
          %p298 = pneg %p182
        $region18: #{tpu_custom_call.1} parent=11 // pred_check_branch
          %300 = sbr.rel (%p298) target = $region20
        $region19: #{tpu_custom_call.1} parent=11 // pred_region
          _
        $region20: #{tpu_custom_call.1} parent=11 // pred_fallthru
          _
        // Predicated region
        $region21: #{tpu_custom_call.1} parent=11 // pred_check
          %p301 = pneg %p203
        $region22: #{tpu_custom_call.1} parent=11 // pred_check_branch
          %303 = sbr.rel (%p301) target = $region24
        $region23: #{tpu_custom_call.1} parent=11 // pred_region
          %s305 = ssub.s32 18432, 18432
          %306 = vsyncadd [#allocation9], %s305
          %s307 = sshll.u32 [#allocation8], 4
          %s308 = int_to_ptr.vmem [resolvable:$true] %s307
          %313 = dma.hbm_to_vmem [thread:$0]  %s5, 18432, %s308, [#allocation9], 64, 64, 4
        $region24: #{tpu_custom_call.1} parent=11 // pred_fallthru
          _
        // Predicated region
        $region25: #{tpu_custom_call.1} parent=11 // pred_check
          %p314 = pneg %p224
        $region26: #{tpu_custom_call.1} parent=11 // pred_check_branch
          %316 = sbr.rel (%p314) target = $region28
        $region27: #{tpu_custom_call.1} parent=11 // pred_region
          _
        $region28: #{tpu_custom_call.1} parent=11 // pred_fallthru
          _
      $region12: #{tpu_custom_call.1} parent=5 // pred_fallthru
        _
      %p317 = scmp.lt.s32.totalorder %s28, 4
      // Predicated region
      $region29: #{tpu_custom_call.1} parent=5 // pred_check
        %p318 = pneg %p317
      $region30: #{tpu_custom_call.1} parent=5 // pred_check_branch
        %320 = sbr.rel (%p318) target = $region32
      $region31: #{tpu_custom_call.1} parent=5 // pred_region
        // Predicated region
        $region33: #{tpu_custom_call.1} parent=31 // pred_check
          %p321 = pneg %p62
        $region34: #{tpu_custom_call.1} parent=31 // pred_check_branch
          %323 = sbr.rel (%p321) target = $region36
        $region35: #{tpu_custom_call.1} parent=31 // pred_region
          %s324 = sand.u32 %s52, 1
          %s325 = scalar_lea.sflag [#allocation3], %s324
          %s326 = sand.u32 %s52, 1
          %s327 = smul.addr %s326, 128
          %s328 = scalar_lea.vmem [#allocation2], %s327
          %s329 = smul.u32 16, %s36
          %s331 = ssub.s32 2048, 2048
          %332 = vsyncadd %s325, %s331
          %s333 = smul.addr %s329, 2
          %s334 = smul.addr %s35, 64
          %s335 = sadd.s32 %s333, %s334
          %s336 = smul.addr %s335, 64
          %s337 = scalar_lea.hbm %s0, %s336
          %s338 = sshll.u32 %s328, 4
          %s339 = int_to_ptr.vmem [resolvable:$true] %s338
          %344 = dma.hbm_to_vmem [thread:$0]  %s337, 2048, %s339, %s325, 128, 128, 8
        $region36: #{tpu_custom_call.1} parent=31 // pred_fallthru
          _
        // Predicated region
        $region37: #{tpu_custom_call.1} parent=31 // pred_check
          %p345 = pneg %p98
        $region38: #{tpu_custom_call.1} parent=31 // pred_check_branch
          %347 = sbr.rel (%p345) target = $region40
        $region39: #{tpu_custom_call.1} parent=31 // pred_region
          %s348 = sand.u32 %s28, 1
          %s349 = scalar_lea.sflag [#allocation6], %s348
          %s350 = sand.u32 %s88, 1
          %s351 = smul.addr %s350, 16
          %s352 = scalar_lea.vmem [#allocation5], %s351
          %s353 = smul.u32 %s36, 8
          %s354 = ssub.s32 %s353, 1
          %p355 = scmp.gt.s32.totalorder %s354, 0
          %s356 = scalar_select %p355, %s354, 0
          %s357 = smul.u32 2, %s356
          %s359 = ssub.s32 256, 256
          %360 = vsyncadd %s349, %s359
          %s361 = smul.addr %s357, 2
          %s362 = smul.addr %s35, 64
          %s363 = sadd.s32 %s361, %s362
          %s364 = smul.addr %s363, 64
          %s365 = scalar_lea.hbm %s1, %s364
          %s366 = sshll.u32 %s352, 4
          %s367 = int_to_ptr.vmem [resolvable:$true] %s366
          %372 = dma.hbm_to_vmem [thread:$0]  %s365, 256, %s367, %s349, 128, 128, 8
        $region40: #{tpu_custom_call.1} parent=31 // pred_fallthru
          _
        // Predicated region
        $region41: #{tpu_custom_call.1} parent=31 // pred_check
          %p373 = pneg %p134
        $region42: #{tpu_custom_call.1} parent=31 // pred_check_branch
          %375 = sbr.rel (%p373) target = $region44
        $region43: #{tpu_custom_call.1} parent=31 // pred_region
          %s376 = sand.u32 %s28, 1
          %s377 = scalar_lea.sflag [#allocation6], %s376
          %s378 = sand.u32 %s124, 1
          %s379 = smul.addr %s378, 16
          %s380 = scalar_lea.vmem [#allocation7], %s379
          %s381 = sadd.s32 %s36, 1
          %s382 = smul.u32 %s381, 8
          %p383 = scmp.lt.s32.totalorder %s382, 15
          %s384 = scalar_select %p383, %s382, 15
          %s385 = smul.u32 2, %s384
          %s387 = ssub.s32 256, 256
          %388 = vsyncadd %s377, %s387
          %s389 = smul.addr %s385, 2
          %s390 = smul.addr %s35, 64
          %s391 = sadd.s32 %s389, %s390
          %s392 = smul.addr %s391, 64
          %s393 = scalar_lea.hbm %s2, %s392
          %s394 = sshll.u32 %s380, 4
          %s395 = int_to_ptr.vmem [resolvable:$true] %s394
          %400 = dma.hbm_to_vmem [thread:$0]  %s393, 256, %s395, %s377, 128, 128, 8
        $region44: #{tpu_custom_call.1} parent=31 // pred_fallthru
          _
      $region32: #{tpu_custom_call.1} parent=5 // pred_fallthru
        _
      %p401 = scmp.le.s32.totalorder 1, %s28
      %p402 = scmp.lt.s32.totalorder %s28, 5
      %p403 = pnand %p401, %p402
      %p404 = pneg %p403
      // Predicated region
      $region45: #{tpu_custom_call.1} parent=5 // pred_check
        _
      $region46: #{tpu_custom_call.1} parent=5 // pred_check_branch
        %406 = sbr.rel (%p403) target = $region48
      $region47: #{tpu_custom_call.1} parent=5 // pred_region
        %s407 = ssub.s32 %s28, 1
        %s408 = sand.u32 %s55, 1
        %s409 = scalar_lea.sflag [#allocation3], %s408
        %s410 = sand.u32 %s55, 1
        %s411 = smul.addr %s410, 128
        %s412 = scalar_lea.vmem [#allocation2], %s411
        // Predicated region
        $region49: #{tpu_custom_call.1} parent=47 // pred_check
          %p413 = pneg %p68
        $region50: #{tpu_custom_call.1} parent=47 // pred_check_branch
          %415 = sbr.rel (%p413) target = $region52
        $region51: #{tpu_custom_call.1} parent=47 // pred_region
          %416 = dma.done %s409, 2048
        $region52: #{tpu_custom_call.1} parent=47 // pred_fallthru
          _
        %s417 = sand.u32 %s33, 1
        %s418 = scalar_lea.sflag [#allocation6], %s417
        %s419 = sand.u32 %s91, 1
        %s420 = smul.addr %s419, 16
        %s421 = scalar_lea.vmem [#allocation5], %s420
        // Predicated region
        $region53: #{tpu_custom_call.1} parent=47 // pred_check
          %p422 = pneg %p104
        $region54: #{tpu_custom_call.1} parent=47 // pred_check_branch
          %424 = sbr.rel (%p422) target = $region56
        $region55: #{tpu_custom_call.1} parent=47 // pred_region
          %425 = dma.done %s418, 256
        $region56: #{tpu_custom_call.1} parent=47 // pred_fallthru
          _
        %s426 = sand.u32 %s33, 1
        %s427 = scalar_lea.sflag [#allocation6], %s426
        %s428 = sand.u32 %s127, 1
        %s429 = smul.addr %s428, 16
        %s430 = scalar_lea.vmem [#allocation7], %s429
        // Predicated region
        $region57: #{tpu_custom_call.1} parent=47 // pred_check
          %p431 = pneg %p140
        $region58: #{tpu_custom_call.1} parent=47 // pred_check_branch
          %433 = sbr.rel (%p431) target = $region60
        $region59: #{tpu_custom_call.1} parent=47 // pred_region
          %434 = dma.done %s427, 256
        $region60: #{tpu_custom_call.1} parent=47 // pred_fallthru
          _
        // Predicated region
        $region61: #{tpu_custom_call.1} parent=47 // pred_check
          %p435 = pneg %p203
        $region62: #{tpu_custom_call.1} parent=47 // pred_check_branch
          %437 = sbr.rel (%p435) target = $region64
        $region63: #{tpu_custom_call.1} parent=47 // pred_region
          %438 = dma.done [#allocation9], 18432
        $region64: #{tpu_custom_call.1} parent=47 // pred_fallthru
          _
        %s439 = sand.u32 %s55, 1
        %s440 = scalar_lea.sflag [#allocation3], %s439
        %s441 = sand.u32 %s55, 1
        %s442 = smul.addr %s441, 128
        %s443 = scalar_lea.vmem [#allocation2], %s442
        %p444 = pneg %p68
        %p445 = pneg %p65
        %s446 = sand.u32 %s33, 1
        %s447 = scalar_lea.sflag [#allocation6], %s446
        %s448 = sand.u32 %s91, 1
        %s449 = smul.addr %s448, 16
        %s450 = scalar_lea.vmem [#allocation5], %s449
        %p451 = pneg %p104
        %p452 = pneg %p101
        %s453 = sand.u32 %s33, 1
        %s454 = scalar_lea.sflag [#allocation6], %s453
        %s455 = sand.u32 %s127, 1
        %s456 = smul.addr %s455, 16
        %s457 = scalar_lea.vmem [#allocation7], %s456
        %p458 = pneg %p140
        %p459 = pneg %p137
        %p460 = pneg %p161
        %p461 = pneg %p158
        %p462 = pneg %p182
        %p463 = pneg %p179
        %p464 = pneg %p203
        %p465 = pneg %p200
        %p466 = pneg %p224
        %p467 = pneg %p221
        %p468 = pneg %p252
        %p469 = pneg %p249
        %s470 = sand.u32 %s239, 1
        %s471 = scalar_lea.sflag [#allocation4], %s470
        %s472 = sand.u32 %s239, 1
        %s473 = smul.addr %s472, 128
        %s474 = scalar_lea.vmem [#allocation10], %s473
        %p475 = pneg %p280
        %p476 = pneg %p277
        %s477 = sand.u32 %s267, 1
        %s478 = scalar_lea.sflag [#allocation12], %s477
        %s479 = sand.u32 %s267, 1
        %s480 = smul.addr %s479, 2
        %s481 = scalar_lea.vmem [#allocation11], %s480
        %s482 = smul.u32 16, %s38
        %s483 = smul.u32 %s38, 8
        %s484 = ssub.s32 %s483, 1
        %p485 = scmp.gt.s32.totalorder %s484, 0
        %s486 = scalar_select %p485, %s484, 0
        %s487 = smul.u32 2, %s486
        %s488 = sadd.s32 %s38, 1
        %s489 = smul.u32 %s488, 8
        %p490 = scmp.lt.s32.totalorder %s489, 15
        %s491 = scalar_select %p490, %s489, 15
        %s492 = smul.u32 2, %s491
        %s493 = smul.u32 16, %s38
        %p495 = scmp.gt.s32.totalorder %s38, 0
        %s496 = scalar_select %p495, 1.0, 0.0
        %p498 = scmp.ne.f32.partialorder %s496, %s496
        %s499 = sshrl.u32 %s496, 16
        %s500 = sand.u32 %s499, 1
        %s501 = sadd.s32 32767, %s500
        %s502 = sadd.s32 %s496, %s501
        %s503 = sand.u32 %s502, 4294901760
        %s504 = scalar_select %p498, 2143289344, %s503
        %s506 = sshrl.u32 %s504, 16
        %p507 = scmp.lt.s32.totalorder %s38, 1
        %s508 = scalar_select %p507, 1.0, 0.0
        %p510 = scmp.ne.f32.partialorder %s508, %s508
        %s511 = sshrl.u32 %s508, 16
        %s512 = sand.u32 %s511, 1
        %s513 = sadd.s32 32767, %s512
        %s514 = sadd.s32 %s508, %s513
        %s515 = sand.u32 %s514, 4294901760
        %s516 = scalar_select %p510, 2143289344, %s515
        %s518 = sshrl.u32 %s516, 16
        %v519 = vld [vmem:[%s421] sm:$0xff]
        %v520 = vld [vmem:[%s421 + $0x8] sm:$0xff]
        %s521 = sshll.u32 %s506, 16
        %s522 = sor.u32 %s506, %s521
        %v523 = vstv %s522
        %v525 = vmul.bf16 %v519, %v523
        %v526 = vmul.bf16 %v520, %v523
        %v527 = vld [vmem:[%s412] sm:$0xff]
        %v528 = vld [vmem:[%s412 + $0x8] sm:$0xff]
        %v529 = vld [vmem:[%s412 + $0x10] sm:$0xff]
        %v530 = vld [vmem:[%s412 + $0x18] sm:$0xff]
        %v531 = vld [vmem:[%s412 + $0x20] sm:$0xff]
        %v532 = vld [vmem:[%s412 + $0x28] sm:$0xff]
        %v533 = vld [vmem:[%s412 + $0x30] sm:$0xff]
        %v534 = vld [vmem:[%s412 + $0x38] sm:$0xff]
        %v535 = vld [vmem:[%s412 + $0x40] sm:$0xff]
        %v536 = vld [vmem:[%s412 + $0x48] sm:$0xff]
        %v537 = vld [vmem:[%s412 + $0x50] sm:$0xff]
        %v538 = vld [vmem:[%s412 + $0x58] sm:$0xff]
        %v539 = vld [vmem:[%s412 + $0x60] sm:$0xff]
        %v540 = vld [vmem:[%s412 + $0x68] sm:$0xff]
        %v541 = vld [vmem:[%s412 + $0x70] sm:$0xff]
        %v542 = vld [vmem:[%s412 + $0x78] sm:$0xff]
        %v543 = vld [vmem:[%s430] sm:$0xff]
        %v544 = vld [vmem:[%s430 + $0x8] sm:$0xff]
        %s545 = sshll.u32 %s518, 16
        %s546 = sor.u32 %s518, %s545
        %v547 = vstv %s546
        %v549 = vmul.bf16 %v543, %v547
        %v550 = vmul.bf16 %v544, %v547
        %v553 = vunpack.c.l.b16 %v525
        %v554 = vunpack.c.h.b16 %v525
        %v555 = vunpack.c.l.b16 %v526
        %v556 = vunpack.c.h.b16 %v526
        %v557 = vpack.c.b16 %v555, %v553
        %v558 = vpack.c.b16 %v556, %v554
        %v577 = vunpack.c.l.b16 %v527
        %v578 = vunpack.c.h.b16 %v527
        %v579 = vunpack.c.l.b16 %v528
        %v580 = vunpack.c.h.b16 %v528
        %v581 = vunpack.c.l.b16 %v529
        %v582 = vunpack.c.h.b16 %v529
        %v583 = vunpack.c.l.b16 %v530
        %v584 = vunpack.c.h.b16 %v530
        %v585 = vunpack.c.l.b16 %v531
        %v586 = vunpack.c.h.b16 %v531
        %v587 = vunpack.c.l.b16 %v532
        %v588 = vunpack.c.h.b16 %v532
        %v589 = vunpack.c.l.b16 %v533
        %v590 = vunpack.c.h.b16 %v533
        %v591 = vunpack.c.l.b16 %v534
        %v592 = vunpack.c.h.b16 %v534
        %v593 = vunpack.c.l.b16 %v535
        %v594 = vunpack.c.h.b16 %v535
        %v595 = vunpack.c.l.b16 %v536
        %v596 = vunpack.c.h.b16 %v536
        %v597 = vunpack.c.l.b16 %v537
        %v598 = vunpack.c.h.b16 %v537
        %v599 = vunpack.c.l.b16 %v538
        %v600 = vunpack.c.h.b16 %v538
        %v601 = vunpack.c.l.b16 %v539
        %v602 = vunpack.c.h.b16 %v539
        %v603 = vunpack.c.l.b16 %v540
        %v604 = vunpack.c.h.b16 %v540
        %v605 = vunpack.c.l.b16 %v541
        %v606 = vunpack.c.h.b16 %v541
        %v607 = vunpack.c.l.b16 %v542
        %v608 = vunpack.c.h.b16 %v542
        %v609 = vpack.c.b16 %v579, %v577
        %v610 = vpack.c.b16 %v580, %v578
        %v611 = vpack.c.b16 %v583, %v581
        %v612 = vpack.c.b16 %v584, %v582
        %v613 = vpack.c.b16 %v587, %v585
        %v614 = vpack.c.b16 %v588, %v586
        %v615 = vpack.c.b16 %v591, %v589
        %v616 = vpack.c.b16 %v592, %v590
        %v617 = vpack.c.b16 %v595, %v593
        %v618 = vpack.c.b16 %v596, %v594
        %v619 = vpack.c.b16 %v599, %v597
        %v620 = vpack.c.b16 %v600, %v598
        %v621 = vpack.c.b16 %v603, %v601
        %v622 = vpack.c.b16 %v604, %v602
        %v623 = vpack.c.b16 %v607, %v605
        %v624 = vpack.c.b16 %v608, %v606
        %v643 = vunpack.c.l.b16 %v549
        %v644 = vunpack.c.h.b16 %v549
        %v645 = vunpack.c.l.b16 %v550
        %v646 = vunpack.c.h.b16 %v550
        %v647 = vpack.c.b16 %v645, %v643
        %v648 = vpack.c.b16 %v646, %v644
        %v651 = vld [vmem:[%s3] sm:$0xf]
        %v652 = vld [vmem:[%s3 + $0x4] sm:$0xf]
        %v653 = vld [vmem:[%s3 + $0x8] sm:$0xf]
        %v654 = vld [vmem:[%s3 + $0xc] sm:$0xf]
        %v655 = vld [vmem:[%s3 + $0x10] sm:$0xf]
        %v656 = vld [vmem:[%s3 + $0x14] sm:$0xf]
        %v657 = vld [vmem:[%s3 + $0x18] sm:$0xf]
        %v658 = vld [vmem:[%s3 + $0x1c] sm:$0xf]
        %v659 = vld [vmem:[%s3 + $0x20] sm:$0xf]
        %v660 = vld [vmem:[%s3 + $0x24] sm:$0xf]
        %v661 = vld [vmem:[%s3 + $0x28] sm:$0xf]
        %v662 = vld [vmem:[%s3 + $0x2c] sm:$0xf]
        %v663 = vld [vmem:[%s3 + $0x30] sm:$0xf]
        %v664 = vld [vmem:[%s3 + $0x34] sm:$0xf]
        %v665 = vld [vmem:[%s3 + $0x38] sm:$0xf]
        %v666 = vld [vmem:[%s3 + $0x3c] sm:$0xf]
        %v667 = vld [vmem:[%s3 + $0x40] sm:$0xf]
        %v668 = vld [vmem:[%s3 + $0x44] sm:$0xf]
        %v669 = vld [vmem:[%s3 + $0x48] sm:$0xf]
        %v670 = vld [vmem:[%s3 + $0x4c] sm:$0xf]
        %v671 = vld [vmem:[%s4] sm:$0xf]
        %v672 = vld [vmem:[%s4 + $0x4] sm:$0xf]
        %v673 = vld [vmem:[%s4 + $0x8] sm:$0xf]
        %v674 = vld [vmem:[%s4 + $0xc] sm:$0xf]
        %v675 = vld [vmem:[%s4 + $0x10] sm:$0xf]
        %v676 = vld [vmem:[%s4 + $0x14] sm:$0xf]
        %v677 = vld [vmem:[%s4 + $0x18] sm:$0xf]
        %v678 = vld [vmem:[%s4 + $0x1c] sm:$0xf]
        %v679 = vld [vmem:[%s4 + $0x20] sm:$0xf]
        %v680 = vld [vmem:[%s4 + $0x24] sm:$0xf]
        %v681 = vld [vmem:[%s4 + $0x28] sm:$0xf]
        %v682 = vld [vmem:[%s4 + $0x2c] sm:$0xf]
        %v683 = vld [vmem:[%s4 + $0x30] sm:$0xf]
        %v684 = vld [vmem:[%s4 + $0x34] sm:$0xf]
        %v685 = vld [vmem:[%s4 + $0x38] sm:$0xf]
        %v686 = vld [vmem:[%s4 + $0x3c] sm:$0xf]
        %v687 = vld [vmem:[%s4 + $0x40] sm:$0xf]
        %v688 = vld [vmem:[%s4 + $0x44] sm:$0xf]
        %v689 = vld [vmem:[%s4 + $0x48] sm:$0xf]
        %v690 = vld [vmem:[%s4 + $0x4c] sm:$0xf]
        %vm691 = vsmask.f32 256
        %v693 = vshrl.u32 %v557, 16
        %v695 = vrot.slane %v693, 7
        %v696 = vshll.u32 %v557, 16
        %v698 = vor.u32 %v695, %v696
        %v700 = vshrl.u32 %v558, 16
        %v702 = vrot.slane %v700, 7
        %v703 = vshll.u32 %v558, 16
        %v705 = vor.u32 %v702, %v703
        %v707 = vshrl.u32 %v609, 16
        %v709 = vrot.slane %v707, 7
        %v710 = vshll.u32 %v609, 16
        %v712 = vor.u32 %v709, %v710
        %v713 = vsel %vm691, %v695, %v712
        %v715 = vshrl.u32 %v610, 16
        %v717 = vrot.slane %v715, 7
        %v718 = vshll.u32 %v610, 16
        %v720 = vor.u32 %v717, %v718
        %v721 = vsel %vm691, %v702, %v720
        %v723 = vshrl.u32 %v611, 16
        %v725 = vrot.slane %v723, 7
        %v726 = vshll.u32 %v611, 16
        %v728 = vor.u32 %v725, %v726
        %v729 = vsel %vm691, %v709, %v728
        %v731 = vshrl.u32 %v612, 16
        %v733 = vrot.slane %v731, 7
        %v734 = vshll.u32 %v612, 16
        %v736 = vor.u32 %v733, %v734
        %v737 = vsel %vm691, %v717, %v736
        %v739 = vshrl.u32 %v613, 16
        %v741 = vrot.slane %v739, 7
        %v742 = vshll.u32 %v613, 16
        %v744 = vor.u32 %v741, %v742
        %v745 = vsel %vm691, %v725, %v744
        %v747 = vshrl.u32 %v614, 16
        %v749 = vrot.slane %v747, 7
        %v750 = vshll.u32 %v614, 16
        %v752 = vor.u32 %v749, %v750
        %v753 = vsel %vm691, %v733, %v752
        %v755 = vshrl.u32 %v615, 16
        %v757 = vrot.slane %v755, 7
        %v758 = vshll.u32 %v615, 16
        %v760 = vor.u32 %v757, %v758
        %v761 = vsel %vm691, %v741, %v760
        %v763 = vshrl.u32 %v616, 16
        %v765 = vrot.slane %v763, 7
        %v766 = vshll.u32 %v616, 16
        %v768 = vor.u32 %v765, %v766
        %v769 = vsel %vm691, %v749, %v768
        %v771 = vshrl.u32 %v617, 16
        %v773 = vrot.slane %v771, 7
        %v774 = vshll.u32 %v617, 16
        %v776 = vor.u32 %v773, %v774
        %v777 = vsel %vm691, %v757, %v776
        %v779 = vshrl.u32 %v618, 16
        %v781 = vrot.slane %v779, 7
        %v782 = vshll.u32 %v618, 16
        %v784 = vor.u32 %v781, %v782
        %v785 = vsel %vm691, %v765, %v784
        %v787 = vshrl.u32 %v619, 16
        %v789 = vrot.slane %v787, 7
        %v790 = vshll.u32 %v619, 16
        %v792 = vor.u32 %v789, %v790
        %v793 = vsel %vm691, %v773, %v792
        %v795 = vshrl.u32 %v620, 16
        %v797 = vrot.slane %v795, 7
        %v798 = vshll.u32 %v620, 16
        %v800 = vor.u32 %v797, %v798
        %v801 = vsel %vm691, %v781, %v800
        %v803 = vshrl.u32 %v621, 16
        %v805 = vrot.slane %v803, 7
        %v806 = vshll.u32 %v621, 16
        %v808 = vor.u32 %v805, %v806
        %v809 = vsel %vm691, %v789, %v808
        %v811 = vshrl.u32 %v622, 16
        %v813 = vrot.slane %v811, 7
        %v814 = vshll.u32 %v622, 16
        %v816 = vor.u32 %v813, %v814
        %v817 = vsel %vm691, %v797, %v816
        %v819 = vshrl.u32 %v623, 16
        %v821 = vrot.slane %v819, 7
        %v822 = vshll.u32 %v623, 16
        %v824 = vor.u32 %v821, %v822
        %v825 = vsel %vm691, %v805, %v824
        %v827 = vshrl.u32 %v624, 16
        %v829 = vrot.slane %v827, 7
        %v830 = vshll.u32 %v624, 16
        %v832 = vor.u32 %v829, %v830
        %v833 = vsel %vm691, %v813, %v832
        %v835 = vshrl.u32 %v647, 16
        %v837 = vrot.slane %v835, 7
        %v838 = vshll.u32 %v647, 16
        %v840 = vor.u32 %v837, %v838
        %v841 = vsel %vm691, %v821, %v840
        %v843 = vshrl.u32 %v648, 16
        %v845 = vrot.slane %v843, 7
        %v846 = vshll.u32 %v648, 16
        %v848 = vor.u32 %v845, %v846
        %v849 = vsel %vm691, %v829, %v848
        %vm870 = vcmask 1040384
        %vm871 = vmand %vm870, %vm691
        %v872 = vsel %vm871, 0, %v698
        %v873 = vsel %vm871, 0, %v705
        %875 = vset.pattern.permute.xlu0 0
        %876 = vperm.xlu0 %875, %v651
        %v877 = vpop.permute.xlu0 %876
        %v880 = vunpack.c.l.s4 839922192
        %v881 = vunpack.c.0.s8 %v880
        %v882 = vlaneseq
        %v883 = vshrl.u32 %v882, 7
        %v884 = vsub.s32 %v881, %v883
        %v885 = vrot.slane %v877, %v884
        %887 = vset.pattern.permute.xlu0 0
        %888 = vperm.xlu0 %887, %v652
        %v889 = vpop.permute.xlu0 %888
        %v892 = vunpack.c.l.s4 839922192
        %v893 = vunpack.c.0.s8 %v892
        %v894 = vlaneseq
        %v895 = vshrl.u32 %v894, 7
        %v896 = vsub.s32 %v893, %v895
        %v897 = vrot.slane %v889, %v896
        %899 = vset.pattern.permute.xlu0 0
        %900 = vperm.xlu0 %899, %v653
        %v901 = vpop.permute.xlu0 %900
        %v904 = vunpack.c.l.s4 839922192
        %v905 = vunpack.c.0.s8 %v904
        %v906 = vlaneseq
        %v907 = vshrl.u32 %v906, 7
        %v908 = vsub.s32 %v905, %v907
        %v909 = vrot.slane %v901, %v908
        %911 = vset.pattern.permute.xlu0 0
        %912 = vperm.xlu0 %911, %v654
        %v913 = vpop.permute.xlu0 %912
        %v916 = vunpack.c.l.s4 839922192
        %v917 = vunpack.c.0.s8 %v916
        %v918 = vlaneseq
        %v919 = vshrl.u32 %v918, 7
        %v920 = vsub.s32 %v917, %v919
        %v921 = vrot.slane %v913, %v920
        %923 = vset.pattern.permute.xlu0 0
        %924 = vperm.xlu0 %923, %v655
        %v925 = vpop.permute.xlu0 %924
        %v928 = vunpack.c.l.s4 839922192
        %v929 = vunpack.c.0.s8 %v928
        %v930 = vlaneseq
        %v931 = vshrl.u32 %v930, 7
        %v932 = vsub.s32 %v929, %v931
        %v933 = vrot.slane %v925, %v932
        %935 = vset.pattern.permute.xlu0 0
        %936 = vperm.xlu0 %935, %v656
        %v937 = vpop.permute.xlu0 %936
        %v940 = vunpack.c.l.s4 839922192
        %v941 = vunpack.c.0.s8 %v940
        %v942 = vlaneseq
        %v943 = vshrl.u32 %v942, 7
        %v944 = vsub.s32 %v941, %v943
        %v945 = vrot.slane %v937, %v944
        %947 = vset.pattern.permute.xlu0 0
        %948 = vperm.xlu0 %947, %v657
        %v949 = vpop.permute.xlu0 %948
        %v952 = vunpack.c.l.s4 839922192
        %v953 = vunpack.c.0.s8 %v952
        %v954 = vlaneseq
        %v955 = vshrl.u32 %v954, 7
        %v956 = vsub.s32 %v953, %v955
        %v957 = vrot.slane %v949, %v956
        %959 = vset.pattern.permute.xlu0 0
        %960 = vperm.xlu0 %959, %v658
        %v961 = vpop.permute.xlu0 %960
        %v964 = vunpack.c.l.s4 839922192
        %v965 = vunpack.c.0.s8 %v964
        %v966 = vlaneseq
        %v967 = vshrl.u32 %v966, 7
        %v968 = vsub.s32 %v965, %v967
        %v969 = vrot.slane %v961, %v968
        %971 = vset.pattern.permute.xlu0 0
        %972 = vperm.xlu0 %971, %v659
        %v973 = vpop.permute.xlu0 %972
        %v976 = vunpack.c.l.s4 839922192
        %v977 = vunpack.c.0.s8 %v976
        %v978 = vlaneseq
        %v979 = vshrl.u32 %v978, 7
        %v980 = vsub.s32 %v977, %v979
        %v981 = vrot.slane %v973, %v980
        %983 = vset.pattern.permute.xlu0 0
        %984 = vperm.xlu0 %983, %v660
        %v985 = vpop.permute.xlu0 %984
        %v988 = vunpack.c.l.s4 839922192
        %v989 = vunpack.c.0.s8 %v988
        %v990 = vlaneseq
        %v991 = vshrl.u32 %v990, 7
        %v992 = vsub.s32 %v989, %v991
        %v993 = vrot.slane %v985, %v992
        %995 = vset.pattern.permute.xlu0 0
        %996 = vperm.xlu0 %995, %v661
        %v997 = vpop.permute.xlu0 %996
        %v1000 = vunpack.c.l.s4 839922192
        %v1001 = vunpack.c.0.s8 %v1000
        %v1002 = vlaneseq
        %v1003 = vshrl.u32 %v1002, 7
        %v1004 = vsub.s32 %v1001, %v1003
        %v1005 = vrot.slane %v997, %v1004
        %1007 = vset.pattern.permute.xlu0 0
        %1008 = vperm.xlu0 %1007, %v662
        %v1009 = vpop.permute.xlu0 %1008
        %v1012 = vunpack.c.l.s4 839922192
        %v1013 = vunpack.c.0.s8 %v1012
        %v1014 = vlaneseq
        %v1015 = vshrl.u32 %v1014, 7
        %v1016 = vsub.s32 %v1013, %v1015
        %v1017 = vrot.slane %v1009, %v1016
        %1019 = vset.pattern.permute.xlu0 0
        %1020 = vperm.xlu0 %1019, %v663
        %v1021 = vpop.permute.xlu0 %1020
        %v1024 = vunpack.c.l.s4 839922192
        %v1025 = vunpack.c.0.s8 %v1024
        %v1026 = vlaneseq
        %v1027 = vshrl.u32 %v1026, 7
        %v1028 = vsub.s32 %v1025, %v1027
        %v1029 = vrot.slane %v1021, %v1028
        %1031 = vset.pattern.permute.xlu0 0
        %1032 = vperm.xlu0 %1031, %v664
        %v1033 = vpop.permute.xlu0 %1032
        %v1036 = vunpack.c.l.s4 839922192
        %v1037 = vunpack.c.0.s8 %v1036
        %v1038 = vlaneseq
        %v1039 = vshrl.u32 %v1038, 7
        %v1040 = vsub.s32 %v1037, %v1039
        %v1041 = vrot.slane %v1033, %v1040
        %1043 = vset.pattern.permute.xlu0 0
        %1044 = vperm.xlu0 %1043, %v665
        %v1045 = vpop.permute.xlu0 %1044
        %v1048 = vunpack.c.l.s4 839922192
        %v1049 = vunpack.c.0.s8 %v1048
        %v1050 = vlaneseq
        %v1051 = vshrl.u32 %v1050, 7
        %v1052 = vsub.s32 %v1049, %v1051
        %v1053 = vrot.slane %v1045, %v1052
        %1055 = vset.pattern.permute.xlu0 0
        %1056 = vperm.xlu0 %1055, %v666
        %v1057 = vpop.permute.xlu0 %1056
        %v1060 = vunpack.c.l.s4 839922192
        %v1061 = vunpack.c.0.s8 %v1060
        %v1062 = vlaneseq
        %v1063 = vshrl.u32 %v1062, 7
        %v1064 = vsub.s32 %v1061, %v1063
        %v1065 = vrot.slane %v1057, %v1064
        %1067 = vset.pattern.permute.xlu0 0
        %1068 = vperm.xlu0 %1067, %v667
        %v1069 = vpop.permute.xlu0 %1068
        %v1072 = vunpack.c.l.s4 839922192
        %v1073 = vunpack.c.0.s8 %v1072
        %v1074 = vlaneseq
        %v1075 = vshrl.u32 %v1074, 7
        %v1076 = vsub.s32 %v1073, %v1075
        %v1077 = vrot.slane %v1069, %v1076
        %1079 = vset.pattern.permute.xlu0 0
        %1080 = vperm.xlu0 %1079, %v668
        %v1081 = vpop.permute.xlu0 %1080
        %v1084 = vunpack.c.l.s4 839922192
        %v1085 = vunpack.c.0.s8 %v1084
        %v1086 = vlaneseq
        %v1087 = vshrl.u32 %v1086, 7
        %v1088 = vsub.s32 %v1085, %v1087
        %v1089 = vrot.slane %v1081, %v1088
        %1091 = vset.pattern.permute.xlu0 0
        %1092 = vperm.xlu0 %1091, %v669
        %v1093 = vpop.permute.xlu0 %1092
        %v1096 = vunpack.c.l.s4 839922192
        %v1097 = vunpack.c.0.s8 %v1096
        %v1098 = vlaneseq
        %v1099 = vshrl.u32 %v1098, 7
        %v1100 = vsub.s32 %v1097, %v1099
        %v1101 = vrot.slane %v1093, %v1100
        %1103 = vset.pattern.permute.xlu0 0
        %1104 = vperm.xlu0 %1103, %v670
        %v1105 = vpop.permute.xlu0 %1104
        %v1108 = vunpack.c.l.s4 839922192
        %v1109 = vunpack.c.0.s8 %v1108
        %v1110 = vlaneseq
        %v1111 = vshrl.u32 %v1110, 7
        %v1112 = vsub.s32 %v1109, %v1111
        %v1113 = vrot.slane %v1105, %v1112
        %v1134 = vunpack.c.l.b16 %v885
        %v1135 = vunpack.c.l.b16 %v897
        %v1136 = vunpack.c.l.b16 %v909
        %v1137 = vunpack.c.l.b16 %v921
        %v1138 = vunpack.c.l.b16 %v933
        %v1139 = vunpack.c.l.b16 %v945
        %v1140 = vunpack.c.l.b16 %v957
        %v1141 = vunpack.c.l.b16 %v969
        %v1142 = vunpack.c.l.b16 %v981
        %v1143 = vunpack.c.l.b16 %v993
        %v1144 = vunpack.c.l.b16 %v1005
        %v1145 = vunpack.c.l.b16 %v1017
        %v1146 = vunpack.c.l.b16 %v1029
        %v1147 = vunpack.c.l.b16 %v1041
        %v1148 = vunpack.c.l.b16 %v1053
        %v1149 = vunpack.c.l.b16 %v1065
        %v1150 = vunpack.c.l.b16 %v1077
        %v1151 = vunpack.c.l.b16 %v1089
        %v1152 = vunpack.c.l.b16 %v1101
        %v1153 = vunpack.c.l.b16 %v1113
        %v1154 = vpack.c.b16 %v1135, %v1134
        %v1155 = vpack.c.b16 %v1137, %v1136
        %v1156 = vpack.c.b16 %v1139, %v1138
        %v1157 = vpack.c.b16 %v1141, %v1140
        %v1158 = vpack.c.b16 %v1143, %v1142
        %v1159 = vpack.c.b16 %v1145, %v1144
        %v1160 = vpack.c.b16 %v1147, %v1146
        %v1161 = vpack.c.b16 %v1149, %v1148
        %v1162 = vpack.c.b16 %v1151, %v1150
        %v1163 = vpack.c.b16 %v1153, %v1152
        %v1174 = vmul.bf16 %v872, %v1154
        %v1175 = vmul.bf16 %v873, %v1154
        %v1176 = vmul.bf16 %v713, %v1155
        %v1177 = vmul.bf16 %v721, %v1155
        %v1178 = vmul.bf16 %v729, %v1156
        %v1179 = vmul.bf16 %v737, %v1156
        %v1180 = vmul.bf16 %v745, %v1157
        %v1181 = vmul.bf16 %v753, %v1157
        %v1182 = vmul.bf16 %v761, %v1158
        %v1183 = vmul.bf16 %v769, %v1158
        %v1184 = vmul.bf16 %v777, %v1159
        %v1185 = vmul.bf16 %v785, %v1159
        %v1186 = vmul.bf16 %v793, %v1160
        %v1187 = vmul.bf16 %v801, %v1160
        %v1188 = vmul.bf16 %v809, %v1161
        %v1189 = vmul.bf16 %v817, %v1161
        %v1190 = vmul.bf16 %v825, %v1162
        %v1191 = vmul.bf16 %v833, %v1162
        %v1192 = vmul.bf16 %v841, %v1163
        %v1193 = vmul.bf16 %v849, %v1163
        %vm1194 = vsmask.f32 7424
        %v1195 = vrot.slane %v696, 1
        %v1196 = vor.u32 %v693, %v1195
        %v1197 = vrot.slane %v710, 1
        %v1198 = vsel %vm1194, %v1196, %v1197
        %v1199 = vrot.slane %v703, 1
        %v1200 = vor.u32 %v700, %v1199
        %v1201 = vrot.slane %v718, 1
        %v1202 = vsel %vm1194, %v1200, %v1201
        %v1203 = vor.u32 %v707, %v1197
        %v1204 = vrot.slane %v726, 1
        %v1205 = vsel %vm1194, %v1203, %v1204
        %v1206 = vor.u32 %v715, %v1201
        %v1207 = vrot.slane %v734, 1
        %v1208 = vsel %vm1194, %v1206, %v1207
        %v1209 = vor.u32 %v723, %v1204
        %v1210 = vrot.slane %v742, 1
        %v1211 = vsel %vm1194, %v1209, %v1210
        %v1212 = vor.u32 %v731, %v1207
        %v1213 = vrot.slane %v750, 1
        %v1214 = vsel %vm1194, %v1212, %v1213
        %v1215 = vor.u32 %v739, %v1210
        %v1216 = vrot.slane %v758, 1
        %v1217 = vsel %vm1194, %v1215, %v1216
        %v1218 = vor.u32 %v747, %v1213
        %v1219 = vrot.slane %v766, 1
        %v1220 = vsel %vm1194, %v1218, %v1219
        %v1221 = vor.u32 %v755, %v1216
        %v1222 = vrot.slane %v774, 1
        %v1223 = vsel %vm1194, %v1221, %v1222
        %v1224 = vor.u32 %v763, %v1219
        %v1225 = vrot.slane %v782, 1
        %v1226 = vsel %vm1194, %v1224, %v1225
        %v1227 = vor.u32 %v771, %v1222
        %v1228 = vrot.slane %v790, 1
        %v1229 = vsel %vm1194, %v1227, %v1228
        %v1230 = vor.u32 %v779, %v1225
        %v1231 = vrot.slane %v798, 1
        %v1232 = vsel %vm1194, %v1230, %v1231
        %v1233 = vor.u32 %v787, %v1228
        %v1234 = vrot.slane %v806, 1
        %v1235 = vsel %vm1194, %v1233, %v1234
        %v1236 = vor.u32 %v795, %v1231
        %v1237 = vrot.slane %v814, 1
        %v1238 = vsel %vm1194, %v1236, %v1237
        %v1239 = vor.u32 %v803, %v1234
        %v1240 = vrot.slane %v822, 1
        %v1241 = vsel %vm1194, %v1239, %v1240
        %v1242 = vor.u32 %v811, %v1237
        %v1243 = vrot.slane %v830, 1
        %v1244 = vsel %vm1194, %v1242, %v1243
        %v1245 = vor.u32 %v819, %v1240
        %v1246 = vrot.slane %v838, 1
        %v1247 = vsel %vm1194, %v1245, %v1246
        %v1248 = vor.u32 %v827, %v1243
        %v1249 = vrot.slane %v846, 1
        %v1250 = vsel %vm1194, %v1248, %v1249
        %v1251 = vor.u32 %v835, %v1246
        %v1252 = vor.u32 %v843, %v1249
        %vm1273 = vcmask 1047552
        %vm1274 = vmand %vm1273, %vm1194
        %v1275 = vsel %vm1274, %v1251, 0
        %v1276 = vsel %vm1274, %v1252, 0
        %1278 = vset.pattern.permute.xlu0 0
        %1279 = vperm.xlu0 %1278, %v671
        %v1280 = vpop.permute.xlu0 %1279
        %v1283 = vunpack.c.l.s4 839922192
        %v1284 = vunpack.c.0.s8 %v1283
        %v1285 = vlaneseq
        %v1286 = vshrl.u32 %v1285, 7
        %v1287 = vsub.s32 %v1284, %v1286
        %v1288 = vrot.slane %v1280, %v1287
        %1290 = vset.pattern.permute.xlu0 0
        %1291 = vperm.xlu0 %1290, %v672
        %v1292 = vpop.permute.xlu0 %1291
        %v1295 = vunpack.c.l.s4 839922192
        %v1296 = vunpack.c.0.s8 %v1295
        %v1297 = vlaneseq
        %v1298 = vshrl.u32 %v1297, 7
        %v1299 = vsub.s32 %v1296, %v1298
        %v1300 = vrot.slane %v1292, %v1299
        %1302 = vset.pattern.permute.xlu0 0
        %1303 = vperm.xlu0 %1302, %v673
        %v1304 = vpop.permute.xlu0 %1303
        %v1307 = vunpack.c.l.s4 839922192
        %v1308 = vunpack.c.0.s8 %v1307
        %v1309 = vlaneseq
        %v1310 = vshrl.u32 %v1309, 7
        %v1311 = vsub.s32 %v1308, %v1310
        %v1312 = vrot.slane %v1304, %v1311
        %1314 = vset.pattern.permute.xlu0 0
        %1315 = vperm.xlu0 %1314, %v674
        %v1316 = vpop.permute.xlu0 %1315
        %v1319 = vunpack.c.l.s4 839922192
        %v1320 = vunpack.c.0.s8 %v1319
        %v1321 = vlaneseq
        %v1322 = vshrl.u32 %v1321, 7
        %v1323 = vsub.s32 %v1320, %v1322
        %v1324 = vrot.slane %v1316, %v1323
        %1326 = vset.pattern.permute.xlu0 0
        %1327 = vperm.xlu0 %1326, %v675
        %v1328 = vpop.permute.xlu0 %1327
        %v1331 = vunpack.c.l.s4 839922192
        %v1332 = vunpack.c.0.s8 %v1331
        %v1333 = vlaneseq
        %v1334 = vshrl.u32 %v1333, 7
        %v1335 = vsub.s32 %v1332, %v1334
        %v1336 = vrot.slane %v1328, %v1335
        %1338 = vset.pattern.permute.xlu0 0
        %1339 = vperm.xlu0 %1338, %v676
        %v1340 = vpop.permute.xlu0 %1339
        %v1343 = vunpack.c.l.s4 839922192
        %v1344 = vunpack.c.0.s8 %v1343
        %v1345 = vlaneseq
        %v1346 = vshrl.u32 %v1345, 7
        %v1347 = vsub.s32 %v1344, %v1346
        %v1348 = vrot.slane %v1340, %v1347
        %1350 = vset.pattern.permute.xlu0 0
        %1351 = vperm.xlu0 %1350, %v677
        %v1352 = vpop.permute.xlu0 %1351
        %v1355 = vunpack.c.l.s4 839922192
        %v1356 = vunpack.c.0.s8 %v1355
        %v1357 = vlaneseq
        %v1358 = vshrl.u32 %v1357, 7
        %v1359 = vsub.s32 %v1356, %v1358
        %v1360 = vrot.slane %v1352, %v1359
        %1362 = vset.pattern.permute.xlu0 0
        %1363 = vperm.xlu0 %1362, %v678
        %v1364 = vpop.permute.xlu0 %1363
        %v1367 = vunpack.c.l.s4 839922192
        %v1368 = vunpack.c.0.s8 %v1367
        %v1369 = vlaneseq
        %v1370 = vshrl.u32 %v1369, 7
        %v1371 = vsub.s32 %v1368, %v1370
        %v1372 = vrot.slane %v1364, %v1371
        %1374 = vset.pattern.permute.xlu0 0
        %1375 = vperm.xlu0 %1374, %v679
        %v1376 = vpop.permute.xlu0 %1375
        %v1379 = vunpack.c.l.s4 839922192
        %v1380 = vunpack.c.0.s8 %v1379
        %v1381 = vlaneseq
        %v1382 = vshrl.u32 %v1381, 7
        %v1383 = vsub.s32 %v1380, %v1382
        %v1384 = vrot.slane %v1376, %v1383
        %1386 = vset.pattern.permute.xlu0 0
        %1387 = vperm.xlu0 %1386, %v680
        %v1388 = vpop.permute.xlu0 %1387
        %v1391 = vunpack.c.l.s4 839922192
        %v1392 = vunpack.c.0.s8 %v1391
        %v1393 = vlaneseq
        %v1394 = vshrl.u32 %v1393, 7
        %v1395 = vsub.s32 %v1392, %v1394
        %v1396 = vrot.slane %v1388, %v1395
        %1398 = vset.pattern.permute.xlu0 0
        %1399 = vperm.xlu0 %1398, %v681
        %v1400 = vpop.permute.xlu0 %1399
        %v1403 = vunpack.c.l.s4 839922192
        %v1404 = vunpack.c.0.s8 %v1403
        %v1405 = vlaneseq
        %v1406 = vshrl.u32 %v1405, 7
        %v1407 = vsub.s32 %v1404, %v1406
        %v1408 = vrot.slane %v1400, %v1407
        %1410 = vset.pattern.permute.xlu0 0
        %1411 = vperm.xlu0 %1410, %v682
        %v1412 = vpop.permute.xlu0 %1411
        %v1415 = vunpack.c.l.s4 839922192
        %v1416 = vunpack.c.0.s8 %v1415
        %v1417 = vlaneseq
        %v1418 = vshrl.u32 %v1417, 7
        %v1419 = vsub.s32 %v1416, %v1418
        %v1420 = vrot.slane %v1412, %v1419
        %1422 = vset.pattern.permute.xlu0 0
        %1423 = vperm.xlu0 %1422, %v683
        %v1424 = vpop.permute.xlu0 %1423
        %v1427 = vunpack.c.l.s4 839922192
        %v1428 = vunpack.c.0.s8 %v1427
        %v1429 = vlaneseq
        %v1430 = vshrl.u32 %v1429, 7
        %v1431 = vsub.s32 %v1428, %v1430
        %v1432 = vrot.slane %v1424, %v1431
        %1434 = vset.pattern.permute.xlu0 0
        %1435 = vperm.xlu0 %1434, %v684
        %v1436 = vpop.permute.xlu0 %1435
        %v1439 = vunpack.c.l.s4 839922192
        %v1440 = vunpack.c.0.s8 %v1439
        %v1441 = vlaneseq
        %v1442 = vshrl.u32 %v1441, 7
        %v1443 = vsub.s32 %v1440, %v1442
        %v1444 = vrot.slane %v1436, %v1443
        %1446 = vset.pattern.permute.xlu0 0
        %1447 = vperm.xlu0 %1446, %v685
        %v1448 = vpop.permute.xlu0 %1447
        %v1451 = vunpack.c.l.s4 839922192
        %v1452 = vunpack.c.0.s8 %v1451
        %v1453 = vlaneseq
        %v1454 = vshrl.u32 %v1453, 7
        %v1455 = vsub.s32 %v1452, %v1454
        %v1456 = vrot.slane %v1448, %v1455
        %1458 = vset.pattern.permute.xlu0 0
        %1459 = vperm.xlu0 %1458, %v686
        %v1460 = vpop.permute.xlu0 %1459
        %v1463 = vunpack.c.l.s4 839922192
        %v1464 = vunpack.c.0.s8 %v1463
        %v1465 = vlaneseq
        %v1466 = vshrl.u32 %v1465, 7
        %v1467 = vsub.s32 %v1464, %v1466
        %v1468 = vrot.slane %v1460, %v1467
        %1470 = vset.pattern.permute.xlu0 0
        %1471 = vperm.xlu0 %1470, %v687
        %v1472 = vpop.permute.xlu0 %1471
        %v1475 = vunpack.c.l.s4 839922192
        %v1476 = vunpack.c.0.s8 %v1475
        %v1477 = vlaneseq
        %v1478 = vshrl.u32 %v1477, 7
        %v1479 = vsub.s32 %v1476, %v1478
        %v1480 = vrot.slane %v1472, %v1479
        %1482 = vset.pattern.permute.xlu0 0
        %1483 = vperm.xlu0 %1482, %v688
        %v1484 = vpop.permute.xlu0 %1483
        %v1487 = vunpack.c.l.s4 839922192
        %v1488 = vunpack.c.0.s8 %v1487
        %v1489 = vlaneseq
        %v1490 = vshrl.u32 %v1489, 7
        %v1491 = vsub.s32 %v1488, %v1490
        %v1492 = vrot.slane %v1484, %v1491
        %1494 = vset.pattern.permute.xlu0 0
        %1495 = vperm.xlu0 %1494, %v689
        %v1496 = vpop.permute.xlu0 %1495
        %v1499 = vunpack.c.l.s4 839922192
        %v1500 = vunpack.c.0.s8 %v1499
        %v1501 = vlaneseq
        %v1502 = vshrl.u32 %v1501, 7
        %v1503 = vsub.s32 %v1500, %v1502
        %v1504 = vrot.slane %v1496, %v1503
        %1506 = vset.pattern.permute.xlu0 0
        %1507 = vperm.xlu0 %1506, %v690
        %v1508 = vpop.permute.xlu0 %1507
        %v1511 = vunpack.c.l.s4 839922192
        %v1512 = vunpack.c.0.s8 %v1511
        %v1513 = vlaneseq
        %v1514 = vshrl.u32 %v1513, 7
        %v1515 = vsub.s32 %v1512, %v1514
        %v1516 = vrot.slane %v1508, %v1515
        %v1537 = vunpack.c.l.b16 %v1288
        %v1538 = vunpack.c.l.b16 %v1300
        %v1539 = vunpack.c.l.b16 %v1312
        %v1540 = vunpack.c.l.b16 %v1324
        %v1541 = vunpack.c.l.b16 %v1336
        %v1542 = vunpack.c.l.b16 %v1348
        %v1543 = vunpack.c.l.b16 %v1360
        %v1544 = vunpack.c.l.b16 %v1372
        %v1545 = vunpack.c.l.b16 %v1384
        %v1546 = vunpack.c.l.b16 %v1396
        %v1547 = vunpack.c.l.b16 %v1408
        %v1548 = vunpack.c.l.b16 %v1420
        %v1549 = vunpack.c.l.b16 %v1432
        %v1550 = vunpack.c.l.b16 %v1444
        %v1551 = vunpack.c.l.b16 %v1456
        %v1552 = vunpack.c.l.b16 %v1468
        %v1553 = vunpack.c.l.b16 %v1480
        %v1554 = vunpack.c.l.b16 %v1492
        %v1555 = vunpack.c.l.b16 %v1504
        %v1556 = vunpack.c.l.b16 %v1516
        %v1557 = vpack.c.b16 %v1538, %v1537
        %v1558 = vpack.c.b16 %v1540, %v1539
        %v1559 = vpack.c.b16 %v1542, %v1541
        %v1560 = vpack.c.b16 %v1544, %v1543
        %v1561 = vpack.c.b16 %v1546, %v1545
        %v1562 = vpack.c.b16 %v1548, %v1547
        %v1563 = vpack.c.b16 %v1550, %v1549
        %v1564 = vpack.c.b16 %v1552, %v1551
        %v1565 = vpack.c.b16 %v1554, %v1553
        %v1566 = vpack.c.b16 %v1556, %v1555
        %v1577 = vmul.bf16 %v1198, %v1557
        %v1578 = vmul.bf16 %v1202, %v1557
        %v1579 = vmul.bf16 %v1205, %v1558
        %v1580 = vmul.bf16 %v1208, %v1558
        %v1581 = vmul.bf16 %v1211, %v1559
        %v1582 = vmul.bf16 %v1214, %v1559
        %v1583 = vmul.bf16 %v1217, %v1560
        %v1584 = vmul.bf16 %v1220, %v1560
        %v1585 = vmul.bf16 %v1223, %v1561
        %v1586 = vmul.bf16 %v1226, %v1561
        %v1587 = vmul.bf16 %v1229, %v1562
        %v1588 = vmul.bf16 %v1232, %v1562
        %v1589 = vmul.bf16 %v1235, %v1563
        %v1590 = vmul.bf16 %v1238, %v1563
        %v1591 = vmul.bf16 %v1241, %v1564
        %v1592 = vmul.bf16 %v1244, %v1564
        %v1593 = vmul.bf16 %v1247, %v1565
        %v1594 = vmul.bf16 %v1250, %v1565
        %v1595 = vmul.bf16 %v1275, %v1566
        %v1596 = vmul.bf16 %v1276, %v1566
        %v1597 = vld [vmem:[#allocation8] sm:$0xf]
        %v1598 = vld [vmem:[#allocation8 + $0x4] sm:$0xf]
        %v1599 = vld [vmem:[#allocation8 + $0x8] sm:$0xf]
        %v1600 = vld [vmem:[#allocation8 + $0xc] sm:$0xf]
        %v1601 = vld [vmem:[#allocation8 + $0x10] sm:$0xf]
        %v1602 = vld [vmem:[#allocation8 + $0x14] sm:$0xf]
        %v1603 = vld [vmem:[#allocation8 + $0x18] sm:$0xf]
        %v1604 = vld [vmem:[#allocation8 + $0x1c] sm:$0xf]
        %v1605 = vld [vmem:[#allocation8 + $0x20] sm:$0xf]
        %v1606 = vld [vmem:[#allocation8 + $0x24] sm:$0xf]
        %v1607 = vld [vmem:[#allocation8 + $0x28] sm:$0xf]
        %v1608 = vld [vmem:[#allocation8 + $0x2c] sm:$0xf]
        %v1609 = vld [vmem:[#allocation8 + $0x30] sm:$0xf]
        %v1610 = vld [vmem:[#allocation8 + $0x34] sm:$0xf]
        %v1611 = vld [vmem:[#allocation8 + $0x38] sm:$0xf]
        %v1612 = vld [vmem:[#allocation8 + $0x3c] sm:$0xf]
        %v1613 = vld [vmem:[#allocation8 + $0x40] sm:$0xf]
        %v1614 = vld [vmem:[#allocation8 + $0x44] sm:$0xf]
        %v1615 = vld [vmem:[#allocation8 + $0x48] sm:$0xf]
        %v1616 = vld [vmem:[#allocation8 + $0x4c] sm:$0xf]
        %v1617 = vld [vmem:[#allocation8 + $0x50] sm:$0xf]
        %v1618 = vld [vmem:[#allocation8 + $0x54] sm:$0xf]
        %v1619 = vld [vmem:[#allocation8 + $0x58] sm:$0xf]
        %v1620 = vld [vmem:[#allocation8 + $0x5c] sm:$0xf]
        %v1621 = vld [vmem:[#allocation8 + $0x60] sm:$0xf]
        %v1622 = vld [vmem:[#allocation8 + $0x64] sm:$0xf]
        %v1623 = vld [vmem:[#allocation8 + $0x68] sm:$0xf]
        %v1624 = vld [vmem:[#allocation8 + $0x6c] sm:$0xf]
        %v1625 = vld [vmem:[#allocation8 + $0x70] sm:$0xf]
        %v1626 = vld [vmem:[#allocation8 + $0x74] sm:$0xf]
        %v1627 = vld [vmem:[#allocation8 + $0x78] sm:$0xf]
        %v1628 = vld [vmem:[#allocation8 + $0x7c] sm:$0xf]
        %s1629 = scalar_lea.vmem [#allocation8], 128
        %v1630 = vld [vmem:[%s1629] sm:$0xf]
        %v1631 = vld [vmem:[%s1629 + $0x4] sm:$0xf]
        %v1632 = vld [vmem:[%s1629 + $0x8] sm:$0xf]
        %v1633 = vld [vmem:[%s1629 + $0xc] sm:$0xf]
        %v1634 = vld [vmem:[%s1629 + $0x10] sm:$0xf]
        %v1635 = vld [vmem:[%s1629 + $0x14] sm:$0xf]
        %v1636 = vld [vmem:[%s1629 + $0x18] sm:$0xf]
        %v1637 = vld [vmem:[%s1629 + $0x1c] sm:$0xf]
        %v1638 = vld [vmem:[%s1629 + $0x20] sm:$0xf]
        %v1639 = vld [vmem:[%s1629 + $0x24] sm:$0xf]
        %v1640 = vld [vmem:[%s1629 + $0x28] sm:$0xf]
        %v1641 = vld [vmem:[%s1629 + $0x2c] sm:$0xf]
        %v1642 = vld [vmem:[%s1629 + $0x30] sm:$0xf]
        %v1643 = vld [vmem:[%s1629 + $0x34] sm:$0xf]
        %v1644 = vld [vmem:[%s1629 + $0x38] sm:$0xf]
        %v1645 = vld [vmem:[%s1629 + $0x3c] sm:$0xf]
        %v1646 = vld [vmem:[%s1629 + $0x40] sm:$0xf]
        %v1647 = vld [vmem:[%s1629 + $0x44] sm:$0xf]
        %v1648 = vld [vmem:[%s1629 + $0x48] sm:$0xf]
        %v1649 = vld [vmem:[%s1629 + $0x4c] sm:$0xf]
        %v1650 = vld [vmem:[%s1629 + $0x50] sm:$0xf]
        %v1651 = vld [vmem:[%s1629 + $0x54] sm:$0xf]
        %v1652 = vld [vmem:[%s1629 + $0x58] sm:$0xf]
        %v1653 = vld [vmem:[%s1629 + $0x5c] sm:$0xf]
        %v1654 = vld [vmem:[%s1629 + $0x60] sm:$0xf]
        %v1655 = vld [vmem:[%s1629 + $0x64] sm:$0xf]
        %v1656 = vld [vmem:[%s1629 + $0x68] sm:$0xf]
        %v1657 = vld [vmem:[%s1629 + $0x6c] sm:$0xf]
        %v1658 = vld [vmem:[%s1629 + $0x70] sm:$0xf]
        %v1659 = vld [vmem:[%s1629 + $0x74] sm:$0xf]
        %v1660 = vld [vmem:[%s1629 + $0x78] sm:$0xf]
        %v1661 = vld [vmem:[%s1629 + $0x7c] sm:$0xf]
        %v1694 = vunpack.c.l.b16 %v1630
        %v1695 = vunpack.c.l.b16 %v1631
        %v1696 = vunpack.c.l.b16 %v1632
        %v1697 = vunpack.c.l.b16 %v1633
        %v1698 = vunpack.c.l.b16 %v1634
        %v1699 = vunpack.c.l.b16 %v1635
        %v1700 = vunpack.c.l.b16 %v1636
        %v1701 = vunpack.c.l.b16 %v1637
        %v1702 = vunpack.c.l.b16 %v1638
        %v1703 = vunpack.c.l.b16 %v1639
        %v1704 = vunpack.c.l.b16 %v1640
        %v1705 = vunpack.c.l.b16 %v1641
        %v1706 = vunpack.c.l.b16 %v1642
        %v1707 = vunpack.c.l.b16 %v1643
        %v1708 = vunpack.c.l.b16 %v1644
        %v1709 = vunpack.c.l.b16 %v1645
        %v1710 = vunpack.c.l.b16 %v1646
        %v1711 = vunpack.c.l.b16 %v1647
        %v1712 = vunpack.c.l.b16 %v1648
        %v1713 = vunpack.c.l.b16 %v1649
        %v1714 = vunpack.c.l.b16 %v1650
        %v1715 = vunpack.c.l.b16 %v1651
        %v1716 = vunpack.c.l.b16 %v1652
        %v1717 = vunpack.c.l.b16 %v1653
        %v1718 = vunpack.c.l.b16 %v1654
        %v1719 = vunpack.c.l.b16 %v1655
        %v1720 = vunpack.c.l.b16 %v1656
        %v1721 = vunpack.c.l.b16 %v1657
        %v1722 = vunpack.c.l.b16 %v1658
        %v1723 = vunpack.c.l.b16 %v1659
        %v1724 = vunpack.c.l.b16 %v1660
        %v1725 = vunpack.c.l.b16 %v1661
        %v1726 = vpack.c.b16 %v1695, %v1694
        %v1727 = vpack.c.b16 %v1697, %v1696
        %v1728 = vpack.c.b16 %v1699, %v1698
        %v1729 = vpack.c.b16 %v1701, %v1700
        %v1730 = vpack.c.b16 %v1703, %v1702
        %v1731 = vpack.c.b16 %v1705, %v1704
        %v1732 = vpack.c.b16 %v1707, %v1706
        %v1733 = vpack.c.b16 %v1709, %v1708
        %v1734 = vpack.c.b16 %v1711, %v1710
        %v1735 = vpack.c.b16 %v1713, %v1712
        %v1736 = vpack.c.b16 %v1715, %v1714
        %v1737 = vpack.c.b16 %v1717, %v1716
        %v1738 = vpack.c.b16 %v1719, %v1718
        %v1739 = vpack.c.b16 %v1721, %v1720
        %v1740 = vpack.c.b16 %v1723, %v1722
        %v1741 = vpack.c.b16 %v1725, %v1724
        %1758 = vmatprep.subr.bf16.mxu0 0
        %1759 = vmatpush1.bf16.msra.mxu0 %v1726
        %1760 = vmatprep.subr.bf16.mxu0 0
        %1761 = vmatpush1.bf16.msra.mxu0 %v1727
        %1762 = vmatprep.subr.bf16.mxu0 0
        %1763 = vmatpush1.bf16.msra.mxu0 %v1728
        %1764 = vmatprep.subr.bf16.mxu0 0
        %1765 = vmatpush1.bf16.msra.mxu0 %v1729
        %1766 = vmatprep.subr.bf16.mxu0 0
        %1767 = vmatpush1.bf16.msra.mxu0 %v1730
        %1768 = vmatprep.subr.bf16.mxu0 0
        %1769 = vmatpush1.bf16.msra.mxu0 %v1731
        %1770 = vmatprep.subr.bf16.mxu0 0
        %1771 = vmatpush1.bf16.msra.mxu0 %v1732
        %1772 = vmatprep.subr.bf16.mxu0 0
        %1773 = vmatpush1.bf16.msra.mxu0 %v1733
        %1774 = vmatprep.subr.bf16.mxu0 0
        %1775 = vmatpush1.bf16.msra.mxu0 %v1734
        %1776 = vmatprep.subr.bf16.mxu0 0
        %1777 = vmatpush1.bf16.msra.mxu0 %v1735
        %1778 = vmatprep.subr.bf16.mxu0 0
        %1779 = vmatpush1.bf16.msra.mxu0 %v1736
        %1780 = vmatprep.subr.bf16.mxu0 0
        %1781 = vmatpush1.bf16.msra.mxu0 %v1737
        %1782 = vmatprep.subr.bf16.mxu0 0
        %1783 = vmatpush1.bf16.msra.mxu0 %v1738
        %1784 = vmatprep.subr.bf16.mxu0 0
        %1785 = vmatpush1.bf16.msra.mxu0 %v1739
        %1786 = vmatprep.subr.bf16.mxu0 0
        %1787 = vmatpush1.bf16.msra.mxu0 %v1740
        %1788 = vmatprep.subr.bf16.mxu0 0
        %1789 = vmatpush1.bf16.msra.mxu0 %v1741
        %1790 = vmatprep.mubr.bf16.mxu0 %v558
        %1791 = vmatmul.mubr.bf16.gmra.mrb[0].mxu0 %v557
        %v1792 = vpop.f32.mrb[0].mxu0
        %v1793 = vadd.f32 0.0, %v1792
        %v1794 = vpop.f32.mrb[0].mxu0
        %v1795 = vpop.f32.mrb[0].mxu0
        %v1796 = vadd.f32 0.0, %v1795
        %v1797 = vpop.f32.mrb[0].mxu0
        %1798 = vmatprep.mubr.bf16.mxu0 %v610
        %1799 = vmatmul.mubr.bf16.gmra.mrb[0].mxu0 %v609
        %v1800 = vpop.f32.mrb[0].mxu0
        %v1801 = vadd.f32 0.0, %v1800
        %v1802 = vpop.f32.mrb[0].mxu0
        %v1803 = vpop.f32.mrb[0].mxu0
        %v1804 = vadd.f32 0.0, %v1803
        %v1805 = vpop.f32.mrb[0].mxu0
        %1806 = vmatprep.mubr.bf16.mxu0 %v612
        %1807 = vmatmul.mubr.bf16.gmra.mrb[0].mxu0 %v611
        %v1808 = vpop.f32.mrb[0].mxu0
        %v1809 = vadd.f32 0.0, %v1808
        %v1810 = vpop.f32.mrb[0].mxu0
        %v1811 = vpop.f32.mrb[0].mxu0
        %v1812 = vadd.f32 0.0, %v1811
        %v1813 = vpop.f32.mrb[0].mxu0
        %1814 = vmatprep.mubr.bf16.mxu0 %v614
        %1815 = vmatmul.mubr.bf16.gmra.mrb[0].mxu0 %v613
        %v1816 = vpop.f32.mrb[0].mxu0
        %v1817 = vadd.f32 0.0, %v1816
        %v1818 = vpop.f32.mrb[0].mxu0
        %v1819 = vpop.f32.mrb[0].mxu0
        %v1820 = vadd.f32 0.0, %v1819
        %v1821 = vpop.f32.mrb[0].mxu0
        %1822 = vmatprep.mubr.bf16.mxu0 %v616
        %1823 = vmatmul.mubr.bf16.gmra.mrb[0].mxu0 %v615
        %v1824 = vpop.f32.mrb[0].mxu0
        %v1825 = vadd.f32 0.0, %v1824
        %v1826 = vpop.f32.mrb[0].mxu0
        %v1827 = vpop.f32.mrb[0].mxu0
        %v1828 = vadd.f32 0.0, %v1827
        %v1829 = vpop.f32.mrb[0].mxu0
        %1830 = vmatprep.mubr.bf16.mxu0 %v618
        %1831 = vmatmul.mubr.bf16.gmra.mrb[0].mxu0 %v617
        %v1832 = vpop.f32.mrb[0].mxu0
        %v1833 = vadd.f32 0.0, %v1832
        %v1834 = vpop.f32.mrb[0].mxu0
        %v1835 = vpop.f32.mrb[0].mxu0
        %v1836 = vadd.f32 0.0, %v1835
        %v1837 = vpop.f32.mrb[0].mxu0
        %1838 = vmatprep.mubr.bf16.mxu0 %v620
        %1839 = vmatmul.mubr.bf16.gmra.mrb[0].mxu0 %v619
        %v1840 = vpop.f32.mrb[0].mxu0
        %v1841 = vadd.f32 0.0, %v1840
        %v1842 = vpop.f32.mrb[0].mxu0
        %v1843 = vpop.f32.mrb[0].mxu0
        %v1844 = vadd.f32 0.0, %v1843
        %v1845 = vpop.f32.mrb[0].mxu0
        %1846 = vmatprep.mubr.bf16.mxu0 %v622
        %1847 = vmatmul.mubr.bf16.gmra.mrb[0].mxu0 %v621
        %v1848 = vpop.f32.mrb[0].mxu0
        %v1849 = vadd.f32 0.0, %v1848
        %v1850 = vpop.f32.mrb[0].mxu0
        %v1851 = vpop.f32.mrb[0].mxu0
        %v1852 = vadd.f32 0.0, %v1851
        %v1853 = vpop.f32.mrb[0].mxu0
        %1854 = vdwg.mxu0
        %v1887 = vunpack.c.l.b16 %v1597
        %v1888 = vunpack.c.l.b16 %v1598
        %v1889 = vunpack.c.l.b16 %v1599
        %v1890 = vunpack.c.l.b16 %v1600
        %v1891 = vunpack.c.l.b16 %v1601
        %v1892 = vunpack.c.l.b16 %v1602
        %v1893 = vunpack.c.l.b16 %v1603
        %v1894 = vunpack.c.l.b16 %v1604
        %v1895 = vunpack.c.l.b16 %v1605
        %v1896 = vunpack.c.l.b16 %v1606
        %v1897 = vunpack.c.l.b16 %v1607
        %v1898 = vunpack.c.l.b16 %v1608
        %v1899 = vunpack.c.l.b16 %v1609
        %v1900 = vunpack.c.l.b16 %v1610
        %v1901 = vunpack.c.l.b16 %v1611
        %v1902 = vunpack.c.l.b16 %v1612
        %v1903 = vunpack.c.l.b16 %v1613
        %v1904 = vunpack.c.l.b16 %v1614
        %v1905 = vunpack.c.l.b16 %v1615
        %v1906 = vunpack.c.l.b16 %v1616
        %v1907 = vunpack.c.l.b16 %v1617
        %v1908 = vunpack.c.l.b16 %v1618
        %v1909 = vunpack.c.l.b16 %v1619
        %v1910 = vunpack.c.l.b16 %v1620
        %v1911 = vunpack.c.l.b16 %v1621
        %v1912 = vunpack.c.l.b16 %v1622
        %v1913 = vunpack.c.l.b16 %v1623
        %v1914 = vunpack.c.l.b16 %v1624
        %v1915 = vunpack.c.l.b16 %v1625
        %v1916 = vunpack.c.l.b16 %v1626
        %v1917 = vunpack.c.l.b16 %v1627
        %v1918 = vunpack.c.l.b16 %v1628
        %v1919 = vpack.c.b16 %v1888, %v1887
        %v1920 = vpack.c.b16 %v1890, %v1889
        %v1921 = vpack.c.b16 %v1892, %v1891
        %v1922 = vpack.c.b16 %v1894, %v1893
        %v1923 = vpack.c.b16 %v1896, %v1895
        %v1924 = vpack.c.b16 %v1898, %v1897
        %v1925 = vpack.c.b16 %v1900, %v1899
        %v1926 = vpack.c.b16 %v1902, %v1901
        %v1927 = vpack.c.b16 %v1904, %v1903
        %v1928 = vpack.c.b16 %v1906, %v1905
        %v1929 = vpack.c.b16 %v1908, %v1907
        %v1930 = vpack.c.b16 %v1910, %v1909
        %v1931 = vpack.c.b16 %v1912, %v1911
        %v1932 = vpack.c.b16 %v1914, %v1913
        %v1933 = vpack.c.b16 %v1916, %v1915
        %v1934 = vpack.c.b16 %v1918, %v1917
        %1951 = vmatprep.subr.bf16.mxu0 0
        %1952 = vmatpush1.bf16.msra.mxu0 %v1919
        %1953 = vmatprep.subr.bf16.mxu0 0
        %1954 = vmatpush1.bf16.msra.mxu0 %v1920
        %1955 = vmatprep.subr.bf16.mxu0 0
        %1956 = vmatpush1.bf16.msra.mxu0 %v1921
        %1957 = vmatprep.subr.bf16.mxu0 0
        %1958 = vmatpush1.bf16.msra.mxu0 %v1922
        %1959 = vmatprep.subr.bf16.mxu0 0
        %1960 = vmatpush1.bf16.msra.mxu0 %v1923
        %1961 = vmatprep.subr.bf16.mxu0 0
        %1962 = vmatpush1.bf16.msra.mxu0 %v1924
        %1963 = vmatprep.subr.bf16.mxu0 0
        %1964 = vmatpush1.bf16.msra.mxu0 %v1925
        %1965 = vmatprep.subr.bf16.mxu0 0
        %1966 = vmatpush1.bf16.msra.mxu0 %v1926
        %1967 = vmatprep.subr.bf16.mxu0 0
        %1968 = vmatpush1.bf16.msra.mxu0 %v1927
        %1969 = vmatprep.subr.bf16.mxu0 0
        %1970 = vmatpush1.bf16.msra.mxu0 %v1928
        %1971 = vmatprep.subr.bf16.mxu0 0
        %1972 = vmatpush1.bf16.msra.mxu0 %v1929
        %1973 = vmatprep.subr.bf16.mxu0 0
        %1974 = vmatpush1.bf16.msra.mxu0 %v1930
        %1975 = vmatprep.subr.bf16.mxu0 0
        %1976 = vmatpush1.bf16.msra.mxu0 %v1931
        %1977 = vmatprep.subr.bf16.mxu0 0
        %1978 = vmatpush1.bf16.msra.mxu0 %v1932
        %1979 = vmatprep.subr.bf16.mxu0 0
        %1980 = vmatpush1.bf16.msra.mxu0 %v1933
        %1981 = vmatprep.subr.bf16.mxu0 0
        %1982 = vmatpush1.bf16.msra.mxu0 %v1934
        %1983 = vmatprep.mubr.bf16.mxu0 %v1175
        %1984 = vmatmul.mubr.bf16.gmra.mrb[0].mxu0 %v1174
        %v1985 = vpop.f32.mrb[0].mxu0
        %v1986 = vadd.f32 %v1793, %v1985
        %v1987 = vpop.f32.mrb[0].mxu0
        %v1988 = vpop.f32.mrb[0].mxu0
        %v1989 = vadd.f32 %v1796, %v1988
        %v1990 = vpop.f32.mrb[0].mxu0
        %1991 = vmatprep.mubr.bf16.mxu0 %v1177
        %1992 = vmatmul.mubr.bf16.gmra.mrb[0].mxu0 %v1176
        %v1993 = vpop.f32.mrb[0].mxu0
        %v1994 = vadd.f32 %v1801, %v1993
        %v1995 = vpop.f32.mrb[0].mxu0
        %v1996 = vpop.f32.mrb[0].mxu0
        %v1997 = vadd.f32 %v1804, %v1996
        %v1998 = vpop.f32.mrb[0].mxu0
        %1999 = vmatprep.mubr.bf16.mxu0 %v1179
        %2000 = vmatmul.mubr.bf16.gmra.mrb[0].mxu0 %v1178
        %v2001 = vpop.f32.mrb[0].mxu0
        %v2002 = vadd.f32 %v1809, %v2001
        %v2003 = vpop.f32.mrb[0].mxu0
        %v2004 = vpop.f32.mrb[0].mxu0
        %v2005 = vadd.f32 %v1812, %v2004
        %v2006 = vpop.f32.mrb[0].mxu0
        %2007 = vmatprep.mubr.bf16.mxu0 %v1181
        %2008 = vmatmul.mubr.bf16.gmra.mrb[0].mxu0 %v1180
        %v2009 = vpop.f32.mrb[0].mxu0
        %v2010 = vadd.f32 %v1817, %v2009
        %v2011 = vpop.f32.mrb[0].mxu0
        %v2012 = vpop.f32.mrb[0].mxu0
        %v2013 = vadd.f32 %v1820, %v2012
        %v2014 = vpop.f32.mrb[0].mxu0
        %2015 = vmatprep.mubr.bf16.mxu0 %v1183
        %2016 = vmatmul.mubr.bf16.gmra.mrb[0].mxu0 %v1182
        %v2017 = vpop.f32.mrb[0].mxu0
        %v2018 = vadd.f32 %v1825, %v2017
        %v2019 = vpop.f32.mrb[0].mxu0
        %v2020 = vpop.f32.mrb[0].mxu0
        %v2021 = vadd.f32 %v1828, %v2020
        %v2022 = vpop.f32.mrb[0].mxu0
        %2023 = vmatprep.mubr.bf16.mxu0 %v1185
        %2024 = vmatmul.mubr.bf16.gmra.mrb[0].mxu0 %v1184
        %v2025 = vpop.f32.mrb[0].mxu0
        %v2026 = vadd.f32 %v1833, %v2025
        %v2027 = vpop.f32.mrb[0].mxu0
        %v2028 = vpop.f32.mrb[0].mxu0
        %v2029 = vadd.f32 %v1836, %v2028
        %v2030 = vpop.f32.mrb[0].mxu0
        %2031 = vmatprep.mubr.bf16.mxu0 %v1187
        %2032 = vmatmul.mubr.bf16.gmra.mrb[0].mxu0 %v1186
        %v2033 = vpop.f32.mrb[0].mxu0
        %v2034 = vadd.f32 %v1841, %v2033
        %v2035 = vpop.f32.mrb[0].mxu0
        %v2036 = vpop.f32.mrb[0].mxu0
        %v2037 = vadd.f32 %v1844, %v2036
        %v2038 = vpop.f32.mrb[0].mxu0
        %2039 = vmatprep.mubr.bf16.mxu0 %v1189
        %2040 = vmatmul.mubr.bf16.gmra.mrb[0].mxu0 %v1188
        %v2041 = vpop.f32.mrb[0].mxu0
        %v2042 = vadd.f32 %v1849, %v2041
        %v2043 = vpop.f32.mrb[0].mxu0
        %v2044 = vpop.f32.mrb[0].mxu0
        %v2045 = vadd.f32 %v1852, %v2044
        %v2046 = vpop.f32.mrb[0].mxu0
        %2047 = vdwg.mxu0
        %s2048 = scalar_lea.vmem [#allocation8], 256
        %v2049 = vld [vmem:[%s2048] sm:$0xf]
        %v2050 = vld [vmem:[%s2048 + $0x4] sm:$0xf]
        %v2051 = vld [vmem:[%s2048 + $0x8] sm:$0xf]
        %v2052 = vld [vmem:[%s2048 + $0xc] sm:$0xf]
        %v2053 = vld [vmem:[%s2048 + $0x10] sm:$0xf]
        %v2054 = vld [vmem:[%s2048 + $0x14] sm:$0xf]
        %v2055 = vld [vmem:[%s2048 + $0x18] sm:$0xf]
        %v2056 = vld [vmem:[%s2048 + $0x1c] sm:$0xf]
        %v2057 = vld [vmem:[%s2048 + $0x20] sm:$0xf]
        %v2058 = vld [vmem:[%s2048 + $0x24] sm:$0xf]
        %v2059 = vld [vmem:[%s2048 + $0x28] sm:$0xf]
        %v2060 = vld [vmem:[%s2048 + $0x2c] sm:$0xf]
        %v2061 = vld [vmem:[%s2048 + $0x30] sm:$0xf]
        %v2062 = vld [vmem:[%s2048 + $0x34] sm:$0xf]
        %v2063 = vld [vmem:[%s2048 + $0x38] sm:$0xf]
        %v2064 = vld [vmem:[%s2048 + $0x3c] sm:$0xf]
        %v2065 = vld [vmem:[%s2048 + $0x40] sm:$0xf]
        %v2066 = vld [vmem:[%s2048 + $0x44] sm:$0xf]
        %v2067 = vld [vmem:[%s2048 + $0x48] sm:$0xf]
        %v2068 = vld [vmem:[%s2048 + $0x4c] sm:$0xf]
        %v2069 = vld [vmem:[%s2048 + $0x50] sm:$0xf]
        %v2070 = vld [vmem:[%s2048 + $0x54] sm:$0xf]
        %v2071 = vld [vmem:[%s2048 + $0x58] sm:$0xf]
        %v2072 = vld [vmem:[%s2048 + $0x5c] sm:$0xf]
        %v2073 = vld [vmem:[%s2048 + $0x60] sm:$0xf]
        %v2074 = vld [vmem:[%s2048 + $0x64] sm:$0xf]
        %v2075 = vld [vmem:[%s2048 + $0x68] sm:$0xf]
        %v2076 = vld [vmem:[%s2048 + $0x6c] sm:$0xf]
        %v2077 = vld [vmem:[%s2048 + $0x70] sm:$0xf]
        %v2078 = vld [vmem:[%s2048 + $0x74] sm:$0xf]
        %v2079 = vld [vmem:[%s2048 + $0x78] sm:$0xf]
        %v2080 = vld [vmem:[%s2048 + $0x7c] sm:$0xf]
        %v2113 = vunpack.c.l.b16 %v2049
        %v2114 = vunpack.c.l.b16 %v2050
        %v2115 = vunpack.c.l.b16 %v2051
        %v2116 = vunpack.c.l.b16 %v2052
        %v2117 = vunpack.c.l.b16 %v2053
        %v2118 = vunpack.c.l.b16 %v2054
        %v2119 = vunpack.c.l.b16 %v2055
        %v2120 = vunpack.c.l.b16 %v2056
        %v2121 = vunpack.c.l.b16 %v2057
        %v2122 = vunpack.c.l.b16 %v2058
        %v2123 = vunpack.c.l.b16 %v2059
        %v2124 = vunpack.c.l.b16 %v2060
        %v2125 = vunpack.c.l.b16 %v2061
        %v2126 = vunpack.c.l.b16 %v2062
        %v2127 = vunpack.c.l.b16 %v2063
        %v2128 = vunpack.c.l.b16 %v2064
        %v2129 = vunpack.c.l.b16 %v2065
        %v2130 = vunpack.c.l.b16 %v2066
        %v2131 = vunpack.c.l.b16 %v2067
        %v2132 = vunpack.c.l.b16 %v2068
        %v2133 = vunpack.c.l.b16 %v2069
        %v2134 = vunpack.c.l.b16 %v2070
        %v2135 = vunpack.c.l.b16 %v2071
        %v2136 = vunpack.c.l.b16 %v2072
        %v2137 = vunpack.c.l.b16 %v2073
        %v2138 = vunpack.c.l.b16 %v2074
        %v2139 = vunpack.c.l.b16 %v2075
        %v2140 = vunpack.c.l.b16 %v2076
        %v2141 = vunpack.c.l.b16 %v2077
        %v2142 = vunpack.c.l.b16 %v2078
        %v2143 = vunpack.c.l.b16 %v2079
        %v2144 = vunpack.c.l.b16 %v2080
        %v2145 = vpack.c.b16 %v2114, %v2113
        %v2146 = vpack.c.b16 %v2116, %v2115
        %v2147 = vpack.c.b16 %v2118, %v2117
        %v2148 = vpack.c.b16 %v2120, %v2119
        %v2149 = vpack.c.b16 %v2122, %v2121
        %v2150 = vpack.c.b16 %v2124, %v2123
        %v2151 = vpack.c.b16 %v2126, %v2125
        %v2152 = vpack.c.b16 %v2128, %v2127
        %v2153 = vpack.c.b16 %v2130, %v2129
        %v2154 = vpack.c.b16 %v2132, %v2131
        %v2155 = vpack.c.b16 %v2134, %v2133
        %v2156 = vpack.c.b16 %v2136, %v2135
        %v2157 = vpack.c.b16 %v2138, %v2137
        %v2158 = vpack.c.b16 %v2140, %v2139
        %v2159 = vpack.c.b16 %v2142, %v2141
        %v2160 = vpack.c.b16 %v2144, %v2143
        %2177 = vmatprep.subr.bf16.mxu0 0
        %2178 = vmatpush1.bf16.msra.mxu0 %v2145
        %2179 = vmatprep.subr.bf16.mxu0 0
        %2180 = vmatpush1.bf16.msra.mxu0 %v2146
        %2181 = vmatprep.subr.bf16.mxu0 0
        %2182 = vmatpush1.bf16.msra.mxu0 %v2147
        %2183 = vmatprep.subr.bf16.mxu0 0
        %2184 = vmatpush1.bf16.msra.mxu0 %v2148
        %2185 = vmatprep.subr.bf16.mxu0 0
        %2186 = vmatpush1.bf16.msra.mxu0 %v2149
        %2187 = vmatprep.subr.bf16.mxu0 0
        %2188 = vmatpush1.bf16.msra.mxu0 %v2150
        %2189 = vmatprep.subr.bf16.mxu0 0
        %2190 = vmatpush1.bf16.msra.mxu0 %v2151
        %2191 = vmatprep.subr.bf16.mxu0 0
        %2192 = vmatpush1.bf16.msra.mxu0 %v2152
        %2193 = vmatprep.subr.bf16.mxu0 0
        %2194 = vmatpush1.bf16.msra.mxu0 %v2153
        %2195 = vmatprep.subr.bf16.mxu0 0
        %2196 = vmatpush1.bf16.msra.mxu0 %v2154
        %2197 = vmatprep.subr.bf16.mxu0 0
        %2198 = vmatpush1.bf16.msra.mxu0 %v2155
        %2199 = vmatprep.subr.bf16.mxu0 0
        %2200 = vmatpush1.bf16.msra.mxu0 %v2156
        %2201 = vmatprep.subr.bf16.mxu0 0
        %2202 = vmatpush1.bf16.msra.mxu0 %v2157
        %2203 = vmatprep.subr.bf16.mxu0 0
        %2204 = vmatpush1.bf16.msra.mxu0 %v2158
        %2205 = vmatprep.subr.bf16.mxu0 0
        %2206 = vmatpush1.bf16.msra.mxu0 %v2159
        %2207 = vmatprep.subr.bf16.mxu0 0
        %2208 = vmatpush1.bf16.msra.mxu0 %v2160
        %2209 = vmatprep.mubr.bf16.mxu0 %v1578
        %2210 = vmatmul.mubr.bf16.gmra.mrb[0].mxu0 %v1577
        %v2211 = vpop.f32.mrb[0].mxu0
        %v2212 = vadd.f32 0.0, %v2211
        %v2213 = vpop.f32.mrb[0].mxu0
        %v2214 = vpop.f32.mrb[0].mxu0
        %v2215 = vadd.f32 0.0, %v2214
        %v2216 = vpop.f32.mrb[0].mxu0
        %2217 = vmatprep.mubr.bf16.mxu0 %v1580
        %2218 = vmatmul.mubr.bf16.gmra.mrb[0].mxu0 %v1579
        %v2219 = vpop.f32.mrb[0].mxu0
        %v2220 = vadd.f32 0.0, %v2219
        %v2221 = vpop.f32.mrb[0].mxu0
        %v2222 = vpop.f32.mrb[0].mxu0
        %v2223 = vadd.f32 0.0, %v2222
        %v2224 = vpop.f32.mrb[0].mxu0
        %2225 = vmatprep.mubr.bf16.mxu0 %v1582
        %2226 = vmatmul.mubr.bf16.gmra.mrb[0].mxu0 %v1581
        %v2227 = vpop.f32.mrb[0].mxu0
        %v2228 = vadd.f32 0.0, %v2227
        %v2229 = vpop.f32.mrb[0].mxu0
        %v2230 = vpop.f32.mrb[0].mxu0
        %v2231 = vadd.f32 0.0, %v2230
        %v2232 = vpop.f32.mrb[0].mxu0
        %2233 = vmatprep.mubr.bf16.mxu0 %v1584
        %2234 = vmatmul.mubr.bf16.gmra.mrb[0].mxu0 %v1583
        %v2235 = vpop.f32.mrb[0].mxu0
        %v2236 = vadd.f32 0.0, %v2235
        %v2237 = vpop.f32.mrb[0].mxu0
        %v2238 = vpop.f32.mrb[0].mxu0
        %v2239 = vadd.f32 0.0, %v2238
        %v2240 = vpop.f32.mrb[0].mxu0
        %2241 = vmatprep.mubr.bf16.mxu0 %v1586
        %2242 = vmatmul.mubr.bf16.gmra.mrb[0].mxu0 %v1585
        %v2243 = vpop.f32.mrb[0].mxu0
        %v2244 = vadd.f32 0.0, %v2243
        %v2245 = vpop.f32.mrb[0].mxu0
        %v2246 = vpop.f32.mrb[0].mxu0
        %v2247 = vadd.f32 0.0, %v2246
        %v2248 = vpop.f32.mrb[0].mxu0
        %2249 = vmatprep.mubr.bf16.mxu0 %v1588
        %2250 = vmatmul.mubr.bf16.gmra.mrb[0].mxu0 %v1587
        %v2251 = vpop.f32.mrb[0].mxu0
        %v2252 = vadd.f32 0.0, %v2251
        %v2253 = vpop.f32.mrb[0].mxu0
        %v2254 = vpop.f32.mrb[0].mxu0
        %v2255 = vadd.f32 0.0, %v2254
        %v2256 = vpop.f32.mrb[0].mxu0
        %2257 = vmatprep.mubr.bf16.mxu0 %v1590
        %2258 = vmatmul.mubr.bf16.gmra.mrb[0].mxu0 %v1589
        %v2259 = vpop.f32.mrb[0].mxu0
        %v2260 = vadd.f32 0.0, %v2259
        %v2261 = vpop.f32.mrb[0].mxu0
        %v2262 = vpop.f32.mrb[0].mxu0
        %v2263 = vadd.f32 0.0, %v2262
        %v2264 = vpop.f32.mrb[0].mxu0
        %2265 = vmatprep.mubr.bf16.mxu0 %v1592
        %2266 = vmatmul.mubr.bf16.gmra.mrb[0].mxu0 %v1591
        %v2267 = vpop.f32.mrb[0].mxu0
        %v2268 = vadd.f32 0.0, %v2267
        %v2269 = vpop.f32.mrb[0].mxu0
        %v2270 = vpop.f32.mrb[0].mxu0
        %v2271 = vadd.f32 0.0, %v2270
        %v2272 = vpop.f32.mrb[0].mxu0
        %2273 = vdwg.mxu0
        %v2274 = vadd.f32 %v1986, %v2212
        %v2275 = vadd.f32 %v1989, %v2215
        %v2276 = vadd.f32 %v1994, %v2220
        %v2277 = vadd.f32 %v1997, %v2223
        %v2278 = vadd.f32 %v2002, %v2228
        %v2279 = vadd.f32 %v2005, %v2231
        %v2280 = vadd.f32 %v2010, %v2236
        %v2281 = vadd.f32 %v2013, %v2239
        %v2282 = vadd.f32 %v2018, %v2244
        %v2283 = vadd.f32 %v2021, %v2247
        %v2284 = vadd.f32 %v2026, %v2252
        %v2285 = vadd.f32 %v2029, %v2255
        %v2286 = vadd.f32 %v2034, %v2260
        %v2287 = vadd.f32 %v2037, %v2263
        %v2288 = vadd.f32 %v2042, %v2268
        %v2289 = vadd.f32 %v2045, %v2271
        %s2290 = scalar_lea.vmem [#allocation8], 384
        %v2291 = vld [vmem:[%s2290] sm:$0xf]
        %v2292 = vld [vmem:[%s2290 + $0x4] sm:$0xf]
        %v2293 = vld [vmem:[%s2290 + $0x8] sm:$0xf]
        %v2294 = vld [vmem:[%s2290 + $0xc] sm:$0xf]
        %v2295 = vld [vmem:[%s2290 + $0x10] sm:$0xf]
        %v2296 = vld [vmem:[%s2290 + $0x14] sm:$0xf]
        %v2297 = vld [vmem:[%s2290 + $0x18] sm:$0xf]
        %v2298 = vld [vmem:[%s2290 + $0x1c] sm:$0xf]
        %v2299 = vld [vmem:[%s2290 + $0x20] sm:$0xf]
        %v2300 = vld [vmem:[%s2290 + $0x24] sm:$0xf]
        %v2301 = vld [vmem:[%s2290 + $0x28] sm:$0xf]
        %v2302 = vld [vmem:[%s2290 + $0x2c] sm:$0xf]
        %v2303 = vld [vmem:[%s2290 + $0x30] sm:$0xf]
        %v2304 = vld [vmem:[%s2290 + $0x34] sm:$0xf]
        %v2305 = vld [vmem:[%s2290 + $0x38] sm:$0xf]
        %v2306 = vld [vmem:[%s2290 + $0x3c] sm:$0xf]
        %v2307 = vld [vmem:[%s2290 + $0x40] sm:$0xf]
        %v2308 = vld [vmem:[%s2290 + $0x44] sm:$0xf]
        %v2309 = vld [vmem:[%s2290 + $0x48] sm:$0xf]
        %v2310 = vld [vmem:[%s2290 + $0x4c] sm:$0xf]
        %v2311 = vld [vmem:[%s2290 + $0x50] sm:$0xf]
        %v2312 = vld [vmem:[%s2290 + $0x54] sm:$0xf]
        %v2313 = vld [vmem:[%s2290 + $0x58] sm:$0xf]
        %v2314 = vld [vmem:[%s2290 + $0x5c] sm:$0xf]
        %v2315 = vld [vmem:[%s2290 + $0x60] sm:$0xf]
        %v2316 = vld [vmem:[%s2290 + $0x64] sm:$0xf]
        %v2317 = vld [vmem:[%s2290 + $0x68] sm:$0xf]
        %v2318 = vld [vmem:[%s2290 + $0x6c] sm:$0xf]
        %v2319 = vld [vmem:[%s2290 + $0x70] sm:$0xf]
        %v2320 = vld [vmem:[%s2290 + $0x74] sm:$0xf]
        %v2321 = vld [vmem:[%s2290 + $0x78] sm:$0xf]
        %v2322 = vld [vmem:[%s2290 + $0x7c] sm:$0xf]
        %v2355 = vunpack.c.l.b16 %v2291
        %v2356 = vunpack.c.l.b16 %v2292
        %v2357 = vunpack.c.l.b16 %v2293
        %v2358 = vunpack.c.l.b16 %v2294
        %v2359 = vunpack.c.l.b16 %v2295
        %v2360 = vunpack.c.l.b16 %v2296
        %v2361 = vunpack.c.l.b16 %v2297
        %v2362 = vunpack.c.l.b16 %v2298
        %v2363 = vunpack.c.l.b16 %v2299
        %v2364 = vunpack.c.l.b16 %v2300
        %v2365 = vunpack.c.l.b16 %v2301
        %v2366 = vunpack.c.l.b16 %v2302
        %v2367 = vunpack.c.l.b16 %v2303
        %v2368 = vunpack.c.l.b16 %v2304
        %v2369 = vunpack.c.l.b16 %v2305
        %v2370 = vunpack.c.l.b16 %v2306
        %v2371 = vunpack.c.l.b16 %v2307
        %v2372 = vunpack.c.l.b16 %v2308
        %v2373 = vunpack.c.l.b16 %v2309
        %v2374 = vunpack.c.l.b16 %v2310
        %v2375 = vunpack.c.l.b16 %v2311
        %v2376 = vunpack.c.l.b16 %v2312
        %v2377 = vunpack.c.l.b16 %v2313
        %v2378 = vunpack.c.l.b16 %v2314
        %v2379 = vunpack.c.l.b16 %v2315
        %v2380 = vunpack.c.l.b16 %v2316
        %v2381 = vunpack.c.l.b16 %v2317
        %v2382 = vunpack.c.l.b16 %v2318
        %v2383 = vunpack.c.l.b16 %v2319
        %v2384 = vunpack.c.l.b16 %v2320
        %v2385 = vunpack.c.l.b16 %v2321
        %v2386 = vunpack.c.l.b16 %v2322
        %v2387 = vpack.c.b16 %v2356, %v2355
        %v2388 = vpack.c.b16 %v2358, %v2357
        %v2389 = vpack.c.b16 %v2360, %v2359
        %v2390 = vpack.c.b16 %v2362, %v2361
        %v2391 = vpack.c.b16 %v2364, %v2363
        %v2392 = vpack.c.b16 %v2366, %v2365
        %v2393 = vpack.c.b16 %v2368, %v2367
        %v2394 = vpack.c.b16 %v2370, %v2369
        %v2395 = vpack.c.b16 %v2372, %v2371
        %v2396 = vpack.c.b16 %v2374, %v2373
        %v2397 = vpack.c.b16 %v2376, %v2375
        %v2398 = vpack.c.b16 %v2378, %v2377
        %v2399 = vpack.c.b16 %v2380, %v2379
        %v2400 = vpack.c.b16 %v2382, %v2381
        %v2401 = vpack.c.b16 %v2384, %v2383
        %v2402 = vpack.c.b16 %v2386, %v2385
        %2419 = vmatprep.subr.bf16.mxu0 0
        %2420 = vmatpush1.bf16.msra.mxu0 %v2387
        %2421 = vmatprep.subr.bf16.mxu0 0
        %2422 = vmatpush1.bf16.msra.mxu0 %v2388
        %2423 = vmatprep.subr.bf16.mxu0 0
        %2424 = vmatpush1.bf16.msra.mxu0 %v2389
        %2425 = vmatprep.subr.bf16.mxu0 0
        %2426 = vmatpush1.bf16.msra.mxu0 %v2390
        %2427 = vmatprep.subr.bf16.mxu0 0
        %2428 = vmatpush1.bf16.msra.mxu0 %v2391
        %2429 = vmatprep.subr.bf16.mxu0 0
        %2430 = vmatpush1.bf16.msra.mxu0 %v2392
        %2431 = vmatprep.subr.bf16.mxu0 0
        %2432 = vmatpush1.bf16.msra.mxu0 %v2393
        %2433 = vmatprep.subr.bf16.mxu0 0
        %2434 = vmatpush1.bf16.msra.mxu0 %v2394
        %2435 = vmatprep.subr.bf16.mxu0 0
        %2436 = vmatpush1.bf16.msra.mxu0 %v2395
        %2437 = vmatprep.subr.bf16.mxu0 0
        %2438 = vmatpush1.bf16.msra.mxu0 %v2396
        %2439 = vmatprep.subr.bf16.mxu0 0
        %2440 = vmatpush1.bf16.msra.mxu0 %v2397
        %2441 = vmatprep.subr.bf16.mxu0 0
        %2442 = vmatpush1.bf16.msra.mxu0 %v2398
        %2443 = vmatprep.subr.bf16.mxu0 0
        %2444 = vmatpush1.bf16.msra.mxu0 %v2399
        %2445 = vmatprep.subr.bf16.mxu0 0
        %2446 = vmatpush1.bf16.msra.mxu0 %v2400
        %2447 = vmatprep.subr.bf16.mxu0 0
        %2448 = vmatpush1.bf16.msra.mxu0 %v2401
        %2449 = vmatprep.subr.bf16.mxu0 0
        %2450 = vmatpush1.bf16.msra.mxu0 %v2402
        %2451 = vmatprep.mubr.bf16.mxu0 %v1177
        %2452 = vmatmul.mubr.bf16.gmra.mrb[0].mxu0 %v1176
        %v2453 = vpop.f32.mrb[0].mxu0
        %v2454 = vadd.f32 0.0, %v2453
        %v2455 = vpop.f32.mrb[0].mxu0
        %v2456 = vpop.f32.mrb[0].mxu0
        %v2457 = vadd.f32 0.0, %v2456
        %v2458 = vpop.f32.mrb[0].mxu0
        %2459 = vmatprep.mubr.bf16.mxu0 %v1179
        %2460 = vmatmul.mubr.bf16.gmra.mrb[0].mxu0 %v1178
        %v2461 = vpop.f32.mrb[0].mxu0
        %v2462 = vadd.f32 0.0, %v2461
        %v2463 = vpop.f32.mrb[0].mxu0
        %v2464 = vpop.f32.mrb[0].mxu0
        %v2465 = vadd.f32 0.0, %v2464
        %v2466 = vpop.f32.mrb[0].mxu0
        %2467 = vmatprep.mubr.bf16.mxu0 %v1181
        %2468 = vmatmul.mubr.bf16.gmra.mrb[0].mxu0 %v1180
        %v2469 = vpop.f32.mrb[0].mxu0
        %v2470 = vadd.f32 0.0, %v2469
        %v2471 = vpop.f32.mrb[0].mxu0
        %v2472 = vpop.f32.mrb[0].mxu0
        %v2473 = vadd.f32 0.0, %v2472
        %v2474 = vpop.f32.mrb[0].mxu0
        %2475 = vmatprep.mubr.bf16.mxu0 %v1183
        %2476 = vmatmul.mubr.bf16.gmra.mrb[0].mxu0 %v1182
        %v2477 = vpop.f32.mrb[0].mxu0
        %v2478 = vadd.f32 0.0, %v2477
        %v2479 = vpop.f32.mrb[0].mxu0
        %v2480 = vpop.f32.mrb[0].mxu0
        %v2481 = vadd.f32 0.0, %v2480
        %v2482 = vpop.f32.mrb[0].mxu0
        %2483 = vmatprep.mubr.bf16.mxu0 %v1185
        %2484 = vmatmul.mubr.bf16.gmra.mrb[0].mxu0 %v1184
        %v2485 = vpop.f32.mrb[0].mxu0
        %v2486 = vadd.f32 0.0, %v2485
        %v2487 = vpop.f32.mrb[0].mxu0
        %v2488 = vpop.f32.mrb[0].mxu0
        %v2489 = vadd.f32 0.0, %v2488
        %v2490 = vpop.f32.mrb[0].mxu0
        %2491 = vmatprep.mubr.bf16.mxu0 %v1187
        %2492 = vmatmul.mubr.bf16.gmra.mrb[0].mxu0 %v1186
        %v2493 = vpop.f32.mrb[0].mxu0
        %v2494 = vadd.f32 0.0, %v2493
        %v2495 = vpop.f32.mrb[0].mxu0
        %v2496 = vpop.f32.mrb[0].mxu0
        %v2497 = vadd.f32 0.0, %v2496
        %v2498 = vpop.f32.mrb[0].mxu0
        %2499 = vmatprep.mubr.bf16.mxu0 %v1189
        %2500 = vmatmul.mubr.bf16.gmra.mrb[0].mxu0 %v1188
        %v2501 = vpop.f32.mrb[0].mxu0
        %v2502 = vadd.f32 0.0, %v2501
        %v2503 = vpop.f32.mrb[0].mxu0
        %v2504 = vpop.f32.mrb[0].mxu0
        %v2505 = vadd.f32 0.0, %v2504
        %v2506 = vpop.f32.mrb[0].mxu0
        %2507 = vmatprep.mubr.bf16.mxu0 %v1191
        %2508 = vmatmul.mubr.bf16.gmra.mrb[0].mxu0 %v1190
        %v2509 = vpop.f32.mrb[0].mxu0
        %v2510 = vadd.f32 0.0, %v2509
        %v2511 = vpop.f32.mrb[0].mxu0
        %v2512 = vpop.f32.mrb[0].mxu0
        %v2513 = vadd.f32 0.0, %v2512
        %v2514 = vpop.f32.mrb[0].mxu0
        %2515 = vdwg.mxu0
        %v2516 = vadd.f32 %v2274, %v2454
        %v2517 = vadd.f32 %v2275, %v2457
        %v2518 = vadd.f32 %v2276, %v2462
        %v2519 = vadd.f32 %v2277, %v2465
        %v2520 = vadd.f32 %v2278, %v2470
        %v2521 = vadd.f32 %v2279, %v2473
        %v2522 = vadd.f32 %v2280, %v2478
        %v2523 = vadd.f32 %v2281, %v2481
        %v2524 = vadd.f32 %v2282, %v2486
        %v2525 = vadd.f32 %v2283, %v2489
        %v2526 = vadd.f32 %v2284, %v2494
        %v2527 = vadd.f32 %v2285, %v2497
        %v2528 = vadd.f32 %v2286, %v2502
        %v2529 = vadd.f32 %v2287, %v2505
        %v2530 = vadd.f32 %v2288, %v2510
        %v2531 = vadd.f32 %v2289, %v2513
        %s2532 = scalar_lea.vmem [#allocation8], 512
        %v2533 = vld [vmem:[%s2532] sm:$0xf]
        %v2534 = vld [vmem:[%s2532 + $0x4] sm:$0xf]
        %v2535 = vld [vmem:[%s2532 + $0x8] sm:$0xf]
        %v2536 = vld [vmem:[%s2532 + $0xc] sm:$0xf]
        %v2537 = vld [vmem:[%s2532 + $0x10] sm:$0xf]
        %v2538 = vld [vmem:[%s2532 + $0x14] sm:$0xf]
        %v2539 = vld [vmem:[%s2532 + $0x18] sm:$0xf]
        %v2540 = vld [vmem:[%s2532 + $0x1c] sm:$0xf]
        %v2541 = vld [vmem:[%s2532 + $0x20] sm:$0xf]
        %v2542 = vld [vmem:[%s2532 + $0x24] sm:$0xf]
        %v2543 = vld [vmem:[%s2532 + $0x28] sm:$0xf]
        %v2544 = vld [vmem:[%s2532 + $0x2c] sm:$0xf]
        %v2545 = vld [vmem:[%s2532 + $0x30] sm:$0xf]
        %v2546 = vld [vmem:[%s2532 + $0x34] sm:$0xf]
        %v2547 = vld [vmem:[%s2532 + $0x38] sm:$0xf]
        %v2548 = vld [vmem:[%s2532 + $0x3c] sm:$0xf]
        %v2549 = vld [vmem:[%s2532 + $0x40] sm:$0xf]
        %v2550 = vld [vmem:[%s2532 + $0x44] sm:$0xf]
        %v2551 = vld [vmem:[%s2532 + $0x48] sm:$0xf]
        %v2552 = vld [vmem:[%s2532 + $0x4c] sm:$0xf]
        %v2553 = vld [vmem:[%s2532 + $0x50] sm:$0xf]
        %v2554 = vld [vmem:[%s2532 + $0x54] sm:$0xf]
        %v2555 = vld [vmem:[%s2532 + $0x58] sm:$0xf]
        %v2556 = vld [vmem:[%s2532 + $0x5c] sm:$0xf]
        %v2557 = vld [vmem:[%s2532 + $0x60] sm:$0xf]
        %v2558 = vld [vmem:[%s2532 + $0x64] sm:$0xf]
        %v2559 = vld [vmem:[%s2532 + $0x68] sm:$0xf]
        %v2560 = vld [vmem:[%s2532 + $0x6c] sm:$0xf]
        %v2561 = vld [vmem:[%s2532 + $0x70] sm:$0xf]
        %v2562 = vld [vmem:[%s2532 + $0x74] sm:$0xf]
        %v2563 = vld [vmem:[%s2532 + $0x78] sm:$0xf]
        %v2564 = vld [vmem:[%s2532 + $0x7c] sm:$0xf]
        %v2597 = vunpack.c.l.b16 %v2533
        %v2598 = vunpack.c.l.b16 %v2534
        %v2599 = vunpack.c.l.b16 %v2535
        %v2600 = vunpack.c.l.b16 %v2536
        %v2601 = vunpack.c.l.b16 %v2537
        %v2602 = vunpack.c.l.b16 %v2538
        %v2603 = vunpack.c.l.b16 %v2539
        %v2604 = vunpack.c.l.b16 %v2540
        %v2605 = vunpack.c.l.b16 %v2541
        %v2606 = vunpack.c.l.b16 %v2542
        %v2607 = vunpack.c.l.b16 %v2543
        %v2608 = vunpack.c.l.b16 %v2544
        %v2609 = vunpack.c.l.b16 %v2545
        %v2610 = vunpack.c.l.b16 %v2546
        %v2611 = vunpack.c.l.b16 %v2547
        %v2612 = vunpack.c.l.b16 %v2548
        %v2613 = vunpack.c.l.b16 %v2549
        %v2614 = vunpack.c.l.b16 %v2550
        %v2615 = vunpack.c.l.b16 %v2551
        %v2616 = vunpack.c.l.b16 %v2552
        %v2617 = vunpack.c.l.b16 %v2553
        %v2618 = vunpack.c.l.b16 %v2554
        %v2619 = vunpack.c.l.b16 %v2555
        %v2620 = vunpack.c.l.b16 %v2556
        %v2621 = vunpack.c.l.b16 %v2557
        %v2622 = vunpack.c.l.b16 %v2558
        %v2623 = vunpack.c.l.b16 %v2559
        %v2624 = vunpack.c.l.b16 %v2560
        %v2625 = vunpack.c.l.b16 %v2561
        %v2626 = vunpack.c.l.b16 %v2562
        %v2627 = vunpack.c.l.b16 %v2563
        %v2628 = vunpack.c.l.b16 %v2564
        %v2629 = vpack.c.b16 %v2598, %v2597
        %v2630 = vpack.c.b16 %v2600, %v2599
        %v2631 = vpack.c.b16 %v2602, %v2601
        %v2632 = vpack.c.b16 %v2604, %v2603
        %v2633 = vpack.c.b16 %v2606, %v2605
        %v2634 = vpack.c.b16 %v2608, %v2607
        %v2635 = vpack.c.b16 %v2610, %v2609
        %v2636 = vpack.c.b16 %v2612, %v2611
        %v2637 = vpack.c.b16 %v2614, %v2613
        %v2638 = vpack.c.b16 %v2616, %v2615
        %v2639 = vpack.c.b16 %v2618, %v2617
        %v2640 = vpack.c.b16 %v2620, %v2619
        %v2641 = vpack.c.b16 %v2622, %v2621
        %v2642 = vpack.c.b16 %v2624, %v2623
        %v2643 = vpack.c.b16 %v2626, %v2625
        %v2644 = vpack.c.b16 %v2628, %v2627
        %2661 = vmatprep.subr.bf16.mxu0 0
        %2662 = vmatpush1.bf16.msra.mxu0 %v2629
        %2663 = vmatprep.subr.bf16.mxu0 0
        %2664 = vmatpush1.bf16.msra.mxu0 %v2630
        %2665 = vmatprep.subr.bf16.mxu0 0
        %2666 = vmatpush1.bf16.msra.mxu0 %v2631
        %2667 = vmatprep.subr.bf16.mxu0 0
        %2668 = vmatpush1.bf16.msra.mxu0 %v2632
        %2669 = vmatprep.subr.bf16.mxu0 0
        %2670 = vmatpush1.bf16.msra.mxu0 %v2633
        %2671 = vmatprep.subr.bf16.mxu0 0
        %2672 = vmatpush1.bf16.msra.mxu0 %v2634
        %2673 = vmatprep.subr.bf16.mxu0 0
        %2674 = vmatpush1.bf16.msra.mxu0 %v2635
        %2675 = vmatprep.subr.bf16.mxu0 0
        %2676 = vmatpush1.bf16.msra.mxu0 %v2636
        %2677 = vmatprep.subr.bf16.mxu0 0
        %2678 = vmatpush1.bf16.msra.mxu0 %v2637
        %2679 = vmatprep.subr.bf16.mxu0 0
        %2680 = vmatpush1.bf16.msra.mxu0 %v2638
        %2681 = vmatprep.subr.bf16.mxu0 0
        %2682 = vmatpush1.bf16.msra.mxu0 %v2639
        %2683 = vmatprep.subr.bf16.mxu0 0
        %2684 = vmatpush1.bf16.msra.mxu0 %v2640
        %2685 = vmatprep.subr.bf16.mxu0 0
        %2686 = vmatpush1.bf16.msra.mxu0 %v2641
        %2687 = vmatprep.subr.bf16.mxu0 0
        %2688 = vmatpush1.bf16.msra.mxu0 %v2642
        %2689 = vmatprep.subr.bf16.mxu0 0
        %2690 = vmatpush1.bf16.msra.mxu0 %v2643
        %2691 = vmatprep.subr.bf16.mxu0 0
        %2692 = vmatpush1.bf16.msra.mxu0 %v2644
        %2693 = vmatprep.mubr.bf16.mxu0 %v610
        %2694 = vmatmul.mubr.bf16.gmra.mrb[0].mxu0 %v609
        %v2695 = vpop.f32.mrb[0].mxu0
        %v2696 = vadd.f32 0.0, %v2695
        %v2697 = vpop.f32.mrb[0].mxu0
        %v2698 = vpop.f32.mrb[0].mxu0
        %v2699 = vadd.f32 0.0, %v2698
        %v2700 = vpop.f32.mrb[0].mxu0
        %2701 = vmatprep.mubr.bf16.mxu0 %v612
        %2702 = vmatmul.mubr.bf16.gmra.mrb[0].mxu0 %v611
        %v2703 = vpop.f32.mrb[0].mxu0
        %v2704 = vadd.f32 0.0, %v2703
        %v2705 = vpop.f32.mrb[0].mxu0
        %v2706 = vpop.f32.mrb[0].mxu0
        %v2707 = vadd.f32 0.0, %v2706
        %v2708 = vpop.f32.mrb[0].mxu0
        %2709 = vmatprep.mubr.bf16.mxu0 %v614
        %2710 = vmatmul.mubr.bf16.gmra.mrb[0].mxu0 %v613
        %v2711 = vpop.f32.mrb[0].mxu0
        %v2712 = vadd.f32 0.0, %v2711
        %v2713 = vpop.f32.mrb[0].mxu0
        %v2714 = vpop.f32.mrb[0].mxu0
        %v2715 = vadd.f32 0.0, %v2714
        %v2716 = vpop.f32.mrb[0].mxu0
        %2717 = vmatprep.mubr.bf16.mxu0 %v616
        %2718 = vmatmul.mubr.bf16.gmra.mrb[0].mxu0 %v615
        %v2719 = vpop.f32.mrb[0].mxu0
        %v2720 = vadd.f32 0.0, %v2719
        %v2721 = vpop.f32.mrb[0].mxu0
        %v2722 = vpop.f32.mrb[0].mxu0
        %v2723 = vadd.f32 0.0, %v2722
        %v2724 = vpop.f32.mrb[0].mxu0
        %2725 = vmatprep.mubr.bf16.mxu0 %v618
        %2726 = vmatmul.mubr.bf16.gmra.mrb[0].mxu0 %v617
        %v2727 = vpop.f32.mrb[0].mxu0
        %v2728 = vadd.f32 0.0, %v2727
        %v2729 = vpop.f32.mrb[0].mxu0
        %v2730 = vpop.f32.mrb[0].mxu0
        %v2731 = vadd.f32 0.0, %v2730
        %v2732 = vpop.f32.mrb[0].mxu0
        %2733 = vmatprep.mubr.bf16.mxu0 %v620
        %2734 = vmatmul.mubr.bf16.gmra.mrb[0].mxu0 %v619
        %v2735 = vpop.f32.mrb[0].mxu0
        %v2736 = vadd.f32 0.0, %v2735
        %v2737 = vpop.f32.mrb[0].mxu0
        %v2738 = vpop.f32.mrb[0].mxu0
        %v2739 = vadd.f32 0.0, %v2738
        %v2740 = vpop.f32.mrb[0].mxu0
        %2741 = vmatprep.mubr.bf16.mxu0 %v622
        %2742 = vmatmul.mubr.bf16.gmra.mrb[0].mxu0 %v621
        %v2743 = vpop.f32.mrb[0].mxu0
        %v2744 = vadd.f32 0.0, %v2743
        %v2745 = vpop.f32.mrb[0].mxu0
        %v2746 = vpop.f32.mrb[0].mxu0
        %v2747 = vadd.f32 0.0, %v2746
        %v2748 = vpop.f32.mrb[0].mxu0
        %2749 = vmatprep.mubr.bf16.mxu0 %v624
        %2750 = vmatmul.mubr.bf16.gmra.mrb[0].mxu0 %v623
        %v2751 = vpop.f32.mrb[0].mxu0
        %v2752 = vadd.f32 0.0, %v2751
        %v2753 = vpop.f32.mrb[0].mxu0
        %v2754 = vpop.f32.mrb[0].mxu0
        %v2755 = vadd.f32 0.0, %v2754
        %v2756 = vpop.f32.mrb[0].mxu0
        %2757 = vdwg.mxu0
        %v2758 = vadd.f32 %v2516, %v2696
        %v2759 = vadd.f32 %v2517, %v2699
        %v2760 = vadd.f32 %v2518, %v2704
        %v2761 = vadd.f32 %v2519, %v2707
        %v2762 = vadd.f32 %v2520, %v2712
        %v2763 = vadd.f32 %v2521, %v2715
        %v2764 = vadd.f32 %v2522, %v2720
        %v2765 = vadd.f32 %v2523, %v2723
        %v2766 = vadd.f32 %v2524, %v2728
        %v2767 = vadd.f32 %v2525, %v2731
        %v2768 = vadd.f32 %v2526, %v2736
        %v2769 = vadd.f32 %v2527, %v2739
        %v2770 = vadd.f32 %v2528, %v2744
        %v2771 = vadd.f32 %v2529, %v2747
        %v2772 = vadd.f32 %v2530, %v2752
        %v2773 = vadd.f32 %v2531, %v2755
        %s2774 = scalar_lea.vmem [#allocation8], 640
        %v2775 = vld [vmem:[%s2774] sm:$0xf]
        %v2776 = vld [vmem:[%s2774 + $0x4] sm:$0xf]
        %v2777 = vld [vmem:[%s2774 + $0x8] sm:$0xf]
        %v2778 = vld [vmem:[%s2774 + $0xc] sm:$0xf]
        %v2779 = vld [vmem:[%s2774 + $0x10] sm:$0xf]
        %v2780 = vld [vmem:[%s2774 + $0x14] sm:$0xf]
        %v2781 = vld [vmem:[%s2774 + $0x18] sm:$0xf]
        %v2782 = vld [vmem:[%s2774 + $0x1c] sm:$0xf]
        %v2783 = vld [vmem:[%s2774 + $0x20] sm:$0xf]
        %v2784 = vld [vmem:[%s2774 + $0x24] sm:$0xf]
        %v2785 = vld [vmem:[%s2774 + $0x28] sm:$0xf]
        %v2786 = vld [vmem:[%s2774 + $0x2c] sm:$0xf]
        %v2787 = vld [vmem:[%s2774 + $0x30] sm:$0xf]
        %v2788 = vld [vmem:[%s2774 + $0x34] sm:$0xf]
        %v2789 = vld [vmem:[%s2774 + $0x38] sm:$0xf]
        %v2790 = vld [vmem:[%s2774 + $0x3c] sm:$0xf]
        %v2791 = vld [vmem:[%s2774 + $0x40] sm:$0xf]
        %v2792 = vld [vmem:[%s2774 + $0x44] sm:$0xf]
        %v2793 = vld [vmem:[%s2774 + $0x48] sm:$0xf]
        %v2794 = vld [vmem:[%s2774 + $0x4c] sm:$0xf]
        %v2795 = vld [vmem:[%s2774 + $0x50] sm:$0xf]
        %v2796 = vld [vmem:[%s2774 + $0x54] sm:$0xf]
        %v2797 = vld [vmem:[%s2774 + $0x58] sm:$0xf]
        %v2798 = vld [vmem:[%s2774 + $0x5c] sm:$0xf]
        %v2799 = vld [vmem:[%s2774 + $0x60] sm:$0xf]
        %v2800 = vld [vmem:[%s2774 + $0x64] sm:$0xf]
        %v2801 = vld [vmem:[%s2774 + $0x68] sm:$0xf]
        %v2802 = vld [vmem:[%s2774 + $0x6c] sm:$0xf]
        %v2803 = vld [vmem:[%s2774 + $0x70] sm:$0xf]
        %v2804 = vld [vmem:[%s2774 + $0x74] sm:$0xf]
        %v2805 = vld [vmem:[%s2774 + $0x78] sm:$0xf]
        %v2806 = vld [vmem:[%s2774 + $0x7c] sm:$0xf]
        %v2839 = vunpack.c.l.b16 %v2775
        %v2840 = vunpack.c.l.b16 %v2776
        %v2841 = vunpack.c.l.b16 %v2777
        %v2842 = vunpack.c.l.b16 %v2778
        %v2843 = vunpack.c.l.b16 %v2779
        %v2844 = vunpack.c.l.b16 %v2780
        %v2845 = vunpack.c.l.b16 %v2781
        %v2846 = vunpack.c.l.b16 %v2782
        %v2847 = vunpack.c.l.b16 %v2783
        %v2848 = vunpack.c.l.b16 %v2784
        %v2849 = vunpack.c.l.b16 %v2785
        %v2850 = vunpack.c.l.b16 %v2786
        %v2851 = vunpack.c.l.b16 %v2787
        %v2852 = vunpack.c.l.b16 %v2788
        %v2853 = vunpack.c.l.b16 %v2789
        %v2854 = vunpack.c.l.b16 %v2790
        %v2855 = vunpack.c.l.b16 %v2791
        %v2856 = vunpack.c.l.b16 %v2792
        %v2857 = vunpack.c.l.b16 %v2793
        %v2858 = vunpack.c.l.b16 %v2794
        %v2859 = vunpack.c.l.b16 %v2795
        %v2860 = vunpack.c.l.b16 %v2796
        %v2861 = vunpack.c.l.b16 %v2797
        %v2862 = vunpack.c.l.b16 %v2798
        %v2863 = vunpack.c.l.b16 %v2799
        %v2864 = vunpack.c.l.b16 %v2800
        %v2865 = vunpack.c.l.b16 %v2801
        %v2866 = vunpack.c.l.b16 %v2802
        %v2867 = vunpack.c.l.b16 %v2803
        %v2868 = vunpack.c.l.b16 %v2804
        %v2869 = vunpack.c.l.b16 %v2805
        %v2870 = vunpack.c.l.b16 %v2806
        %v2871 = vpack.c.b16 %v2840, %v2839
        %v2872 = vpack.c.b16 %v2842, %v2841
        %v2873 = vpack.c.b16 %v2844, %v2843
        %v2874 = vpack.c.b16 %v2846, %v2845
        %v2875 = vpack.c.b16 %v2848, %v2847
        %v2876 = vpack.c.b16 %v2850, %v2849
        %v2877 = vpack.c.b16 %v2852, %v2851
        %v2878 = vpack.c.b16 %v2854, %v2853
        %v2879 = vpack.c.b16 %v2856, %v2855
        %v2880 = vpack.c.b16 %v2858, %v2857
        %v2881 = vpack.c.b16 %v2860, %v2859
        %v2882 = vpack.c.b16 %v2862, %v2861
        %v2883 = vpack.c.b16 %v2864, %v2863
        %v2884 = vpack.c.b16 %v2866, %v2865
        %v2885 = vpack.c.b16 %v2868, %v2867
        %v2886 = vpack.c.b16 %v2870, %v2869
        %2903 = vmatprep.subr.bf16.mxu0 0
        %2904 = vmatpush1.bf16.msra.mxu0 %v2871
        %2905 = vmatprep.subr.bf16.mxu0 0
        %2906 = vmatpush1.bf16.msra.mxu0 %v2872
        %2907 = vmatprep.subr.bf16.mxu0 0
        %2908 = vmatpush1.bf16.msra.mxu0 %v2873
        %2909 = vmatprep.subr.bf16.mxu0 0
        %2910 = vmatpush1.bf16.msra.mxu0 %v2874
        %2911 = vmatprep.subr.bf16.mxu0 0
        %2912 = vmatpush1.bf16.msra.mxu0 %v2875
        %2913 = vmatprep.subr.bf16.mxu0 0
        %2914 = vmatpush1.bf16.msra.mxu0 %v2876
        %2915 = vmatprep.subr.bf16.mxu0 0
        %2916 = vmatpush1.bf16.msra.mxu0 %v2877
        %2917 = vmatprep.subr.bf16.mxu0 0
        %2918 = vmatpush1.bf16.msra.mxu0 %v2878
        %2919 = vmatprep.subr.bf16.mxu0 0
        %2920 = vmatpush1.bf16.msra.mxu0 %v2879
        %2921 = vmatprep.subr.bf16.mxu0 0
        %2922 = vmatpush1.bf16.msra.mxu0 %v2880
        %2923 = vmatprep.subr.bf16.mxu0 0
        %2924 = vmatpush1.bf16.msra.mxu0 %v2881
        %2925 = vmatprep.subr.bf16.mxu0 0
        %2926 = vmatpush1.bf16.msra.mxu0 %v2882
        %2927 = vmatprep.subr.bf16.mxu0 0
        %2928 = vmatpush1.bf16.msra.mxu0 %v2883
        %2929 = vmatprep.subr.bf16.mxu0 0
        %2930 = vmatpush1.bf16.msra.mxu0 %v2884
        %2931 = vmatprep.subr.bf16.mxu0 0
        %2932 = vmatpush1.bf16.msra.mxu0 %v2885
        %2933 = vmatprep.subr.bf16.mxu0 0
        %2934 = vmatpush1.bf16.msra.mxu0 %v2886
        %2935 = vmatprep.mubr.bf16.mxu0 %v1580
        %2936 = vmatmul.mubr.bf16.gmra.mrb[0].mxu0 %v1579
        %v2937 = vpop.f32.mrb[0].mxu0
        %v2938 = vadd.f32 0.0, %v2937
        %v2939 = vpop.f32.mrb[0].mxu0
        %v2940 = vpop.f32.mrb[0].mxu0
        %v2941 = vadd.f32 0.0, %v2940
        %v2942 = vpop.f32.mrb[0].mxu0
        %2943 = vmatprep.mubr.bf16.mxu0 %v1582
        %2944 = vmatmul.mubr.bf16.gmra.mrb[0].mxu0 %v1581
        %v2945 = vpop.f32.mrb[0].mxu0
        %v2946 = vadd.f32 0.0, %v2945
        %v2947 = vpop.f32.mrb[0].mxu0
        %v2948 = vpop.f32.mrb[0].mxu0
        %v2949 = vadd.f32 0.0, %v2948
        %v2950 = vpop.f32.mrb[0].mxu0
        %2951 = vmatprep.mubr.bf16.mxu0 %v1584
        %2952 = vmatmul.mubr.bf16.gmra.mrb[0].mxu0 %v1583
        %v2953 = vpop.f32.mrb[0].mxu0
        %v2954 = vadd.f32 0.0, %v2953
        %v2955 = vpop.f32.mrb[0].mxu0
        %v2956 = vpop.f32.mrb[0].mxu0
        %v2957 = vadd.f32 0.0, %v2956
        %v2958 = vpop.f32.mrb[0].mxu0
        %2959 = vmatprep.mubr.bf16.mxu0 %v1586
        %2960 = vmatmul.mubr.bf16.gmra.mrb[0].mxu0 %v1585
        %v2961 = vpop.f32.mrb[0].mxu0
        %v2962 = vadd.f32 0.0, %v2961
        %v2963 = vpop.f32.mrb[0].mxu0
        %v2964 = vpop.f32.mrb[0].mxu0
        %v2965 = vadd.f32 0.0, %v2964
        %v2966 = vpop.f32.mrb[0].mxu0
        %2967 = vmatprep.mubr.bf16.mxu0 %v1588
        %2968 = vmatmul.mubr.bf16.gmra.mrb[0].mxu0 %v1587
        %v2969 = vpop.f32.mrb[0].mxu0
        %v2970 = vadd.f32 0.0, %v2969
        %v2971 = vpop.f32.mrb[0].mxu0
        %v2972 = vpop.f32.mrb[0].mxu0
        %v2973 = vadd.f32 0.0, %v2972
        %v2974 = vpop.f32.mrb[0].mxu0
        %2975 = vmatprep.mubr.bf16.mxu0 %v1590
        %2976 = vmatmul.mubr.bf16.gmra.mrb[0].mxu0 %v1589
        %v2977 = vpop.f32.mrb[0].mxu0
        %v2978 = vadd.f32 0.0, %v2977
        %v2979 = vpop.f32.mrb[0].mxu0
        %v2980 = vpop.f32.mrb[0].mxu0
        %v2981 = vadd.f32 0.0, %v2980
        %v2982 = vpop.f32.mrb[0].mxu0
        %2983 = vmatprep.mubr.bf16.mxu0 %v1592
        %2984 = vmatmul.mubr.bf16.gmra.mrb[0].mxu0 %v1591
        %v2985 = vpop.f32.mrb[0].mxu0
        %v2986 = vadd.f32 0.0, %v2985
        %v2987 = vpop.f32.mrb[0].mxu0
        %v2988 = vpop.f32.mrb[0].mxu0
        %v2989 = vadd.f32 0.0, %v2988
        %v2990 = vpop.f32.mrb[0].mxu0
        %2991 = vmatprep.mubr.bf16.mxu0 %v1594
        %2992 = vmatmul.mubr.bf16.gmra.mrb[0].mxu0 %v1593
        %v2993 = vpop.f32.mrb[0].mxu0
        %v2994 = vadd.f32 0.0, %v2993
        %v2995 = vpop.f32.mrb[0].mxu0
        %v2996 = vpop.f32.mrb[0].mxu0
        %v2997 = vadd.f32 0.0, %v2996
        %v2998 = vpop.f32.mrb[0].mxu0
        %2999 = vdwg.mxu0
        %v3000 = vadd.f32 %v2758, %v2938
        %v3001 = vadd.f32 %v2759, %v2941
        %v3002 = vadd.f32 %v2760, %v2946
        %v3003 = vadd.f32 %v2761, %v2949
        %v3004 = vadd.f32 %v2762, %v2954
        %v3005 = vadd.f32 %v2763, %v2957
        %v3006 = vadd.f32 %v2764, %v2962
        %v3007 = vadd.f32 %v2765, %v2965
        %v3008 = vadd.f32 %v2766, %v2970
        %v3009 = vadd.f32 %v2767, %v2973
        %v3010 = vadd.f32 %v2768, %v2978
        %v3011 = vadd.f32 %v2769, %v2981
        %v3012 = vadd.f32 %v2770, %v2986
        %v3013 = vadd.f32 %v2771, %v2989
        %v3014 = vadd.f32 %v2772, %v2994
        %v3015 = vadd.f32 %v2773, %v2997
        %s3016 = scalar_lea.vmem [#allocation8], 768
        %v3017 = vld [vmem:[%s3016] sm:$0xf]
        %v3018 = vld [vmem:[%s3016 + $0x4] sm:$0xf]
        %v3019 = vld [vmem:[%s3016 + $0x8] sm:$0xf]
        %v3020 = vld [vmem:[%s3016 + $0xc] sm:$0xf]
        %v3021 = vld [vmem:[%s3016 + $0x10] sm:$0xf]
        %v3022 = vld [vmem:[%s3016 + $0x14] sm:$0xf]
        %v3023 = vld [vmem:[%s3016 + $0x18] sm:$0xf]
        %v3024 = vld [vmem:[%s3016 + $0x1c] sm:$0xf]
        %v3025 = vld [vmem:[%s3016 + $0x20] sm:$0xf]
        %v3026 = vld [vmem:[%s3016 + $0x24] sm:$0xf]
        %v3027 = vld [vmem:[%s3016 + $0x28] sm:$0xf]
        %v3028 = vld [vmem:[%s3016 + $0x2c] sm:$0xf]
        %v3029 = vld [vmem:[%s3016 + $0x30] sm:$0xf]
        %v3030 = vld [vmem:[%s3016 + $0x34] sm:$0xf]
        %v3031 = vld [vmem:[%s3016 + $0x38] sm:$0xf]
        %v3032 = vld [vmem:[%s3016 + $0x3c] sm:$0xf]
        %v3033 = vld [vmem:[%s3016 + $0x40] sm:$0xf]
        %v3034 = vld [vmem:[%s3016 + $0x44] sm:$0xf]
        %v3035 = vld [vmem:[%s3016 + $0x48] sm:$0xf]
        %v3036 = vld [vmem:[%s3016 + $0x4c] sm:$0xf]
        %v3037 = vld [vmem:[%s3016 + $0x50] sm:$0xf]
        %v3038 = vld [vmem:[%s3016 + $0x54] sm:$0xf]
        %v3039 = vld [vmem:[%s3016 + $0x58] sm:$0xf]
        %v3040 = vld [vmem:[%s3016 + $0x5c] sm:$0xf]
        %v3041 = vld [vmem:[%s3016 + $0x60] sm:$0xf]
        %v3042 = vld [vmem:[%s3016 + $0x64] sm:$0xf]
        %v3043 = vld [vmem:[%s3016 + $0x68] sm:$0xf]
        %v3044 = vld [vmem:[%s3016 + $0x6c] sm:$0xf]
        %v3045 = vld [vmem:[%s3016 + $0x70] sm:$0xf]
        %v3046 = vld [vmem:[%s3016 + $0x74] sm:$0xf]
        %v3047 = vld [vmem:[%s3016 + $0x78] sm:$0xf]
        %v3048 = vld [vmem:[%s3016 + $0x7c] sm:$0xf]
        %v3081 = vunpack.c.l.b16 %v3017
        %v3082 = vunpack.c.l.b16 %v3018
        %v3083 = vunpack.c.l.b16 %v3019
        %v3084 = vunpack.c.l.b16 %v3020
        %v3085 = vunpack.c.l.b16 %v3021
        %v3086 = vunpack.c.l.b16 %v3022
        %v3087 = vunpack.c.l.b16 %v3023
        %v3088 = vunpack.c.l.b16 %v3024
        %v3089 = vunpack.c.l.b16 %v3025
        %v3090 = vunpack.c.l.b16 %v3026
        %v3091 = vunpack.c.l.b16 %v3027
        %v3092 = vunpack.c.l.b16 %v3028
        %v3093 = vunpack.c.l.b16 %v3029
        %v3094 = vunpack.c.l.b16 %v3030
        %v3095 = vunpack.c.l.b16 %v3031
        %v3096 = vunpack.c.l.b16 %v3032
        %v3097 = vunpack.c.l.b16 %v3033
        %v3098 = vunpack.c.l.b16 %v3034
        %v3099 = vunpack.c.l.b16 %v3035
        %v3100 = vunpack.c.l.b16 %v3036
        %v3101 = vunpack.c.l.b16 %v3037
        %v3102 = vunpack.c.l.b16 %v3038
        %v3103 = vunpack.c.l.b16 %v3039
        %v3104 = vunpack.c.l.b16 %v3040
        %v3105 = vunpack.c.l.b16 %v3041
        %v3106 = vunpack.c.l.b16 %v3042
        %v3107 = vunpack.c.l.b16 %v3043
        %v3108 = vunpack.c.l.b16 %v3044
        %v3109 = vunpack.c.l.b16 %v3045
        %v3110 = vunpack.c.l.b16 %v3046
        %v3111 = vunpack.c.l.b16 %v3047
        %v3112 = vunpack.c.l.b16 %v3048
        %v3113 = vpack.c.b16 %v3082, %v3081
        %v3114 = vpack.c.b16 %v3084, %v3083
        %v3115 = vpack.c.b16 %v3086, %v3085
        %v3116 = vpack.c.b16 %v3088, %v3087
        %v3117 = vpack.c.b16 %v3090, %v3089
        %v3118 = vpack.c.b16 %v3092, %v3091
        %v3119 = vpack.c.b16 %v3094, %v3093
        %v3120 = vpack.c.b16 %v3096, %v3095
        %v3121 = vpack.c.b16 %v3098, %v3097
        %v3122 = vpack.c.b16 %v3100, %v3099
        %v3123 = vpack.c.b16 %v3102, %v3101
        %v3124 = vpack.c.b16 %v3104, %v3103
        %v3125 = vpack.c.b16 %v3106, %v3105
        %v3126 = vpack.c.b16 %v3108, %v3107
        %v3127 = vpack.c.b16 %v3110, %v3109
        %v3128 = vpack.c.b16 %v3112, %v3111
        %3145 = vmatprep.subr.bf16.mxu0 0
        %3146 = vmatpush1.bf16.msra.mxu0 %v3113
        %3147 = vmatprep.subr.bf16.mxu0 0
        %3148 = vmatpush1.bf16.msra.mxu0 %v3114
        %3149 = vmatprep.subr.bf16.mxu0 0
        %3150 = vmatpush1.bf16.msra.mxu0 %v3115
        %3151 = vmatprep.subr.bf16.mxu0 0
        %3152 = vmatpush1.bf16.msra.mxu0 %v3116
        %3153 = vmatprep.subr.bf16.mxu0 0
        %3154 = vmatpush1.bf16.msra.mxu0 %v3117
        %3155 = vmatprep.subr.bf16.mxu0 0
        %3156 = vmatpush1.bf16.msra.mxu0 %v3118
        %3157 = vmatprep.subr.bf16.mxu0 0
        %3158 = vmatpush1.bf16.msra.mxu0 %v3119
        %3159 = vmatprep.subr.bf16.mxu0 0
        %3160 = vmatpush1.bf16.msra.mxu0 %v3120
        %3161 = vmatprep.subr.bf16.mxu0 0
        %3162 = vmatpush1.bf16.msra.mxu0 %v3121
        %3163 = vmatprep.subr.bf16.mxu0 0
        %3164 = vmatpush1.bf16.msra.mxu0 %v3122
        %3165 = vmatprep.subr.bf16.mxu0 0
        %3166 = vmatpush1.bf16.msra.mxu0 %v3123
        %3167 = vmatprep.subr.bf16.mxu0 0
        %3168 = vmatpush1.bf16.msra.mxu0 %v3124
        %3169 = vmatprep.subr.bf16.mxu0 0
        %3170 = vmatpush1.bf16.msra.mxu0 %v3125
        %3171 = vmatprep.subr.bf16.mxu0 0
        %3172 = vmatpush1.bf16.msra.mxu0 %v3126
        %3173 = vmatprep.subr.bf16.mxu0 0
        %3174 = vmatpush1.bf16.msra.mxu0 %v3127
        %3175 = vmatprep.subr.bf16.mxu0 0
        %3176 = vmatpush1.bf16.msra.mxu0 %v3128
        %3177 = vmatprep.mubr.bf16.mxu0 %v1179
        %3178 = vmatmul.mubr.bf16.gmra.mrb[0].mxu0 %v1178
        %v3179 = vpop.f32.mrb[0].mxu0
        %v3180 = vadd.f32 0.0, %v3179
        %v3181 = vpop.f32.mrb[0].mxu0
        %v3182 = vpop.f32.mrb[0].mxu0
        %v3183 = vadd.f32 0.0, %v3182
        %v3184 = vpop.f32.mrb[0].mxu0
        %3185 = vmatprep.mubr.bf16.mxu0 %v1181
        %3186 = vmatmul.mubr.bf16.gmra.mrb[0].mxu0 %v1180
        %v3187 = vpop.f32.mrb[0].mxu0
        %v3188 = vadd.f32 0.0, %v3187
        %v3189 = vpop.f32.mrb[0].mxu0
        %v3190 = vpop.f32.mrb[0].mxu0
        %v3191 = vadd.f32 0.0, %v3190
        %v3192 = vpop.f32.mrb[0].mxu0
        %3193 = vmatprep.mubr.bf16.mxu0 %v1183
        %3194 = vmatmul.mubr.bf16.gmra.mrb[0].mxu0 %v1182
        %v3195 = vpop.f32.mrb[0].mxu0
        %v3196 = vadd.f32 0.0, %v3195
        %v3197 = vpop.f32.mrb[0].mxu0
        %v3198 = vpop.f32.mrb[0].mxu0
        %v3199 = vadd.f32 0.0, %v3198
        %v3200 = vpop.f32.mrb[0].mxu0
        %3201 = vmatprep.mubr.bf16.mxu0 %v1185
        %3202 = vmatmul.mubr.bf16.gmra.mrb[0].mxu0 %v1184
        %v3203 = vpop.f32.mrb[0].mxu0
        %v3204 = vadd.f32 0.0, %v3203
        %v3205 = vpop.f32.mrb[0].mxu0
        %v3206 = vpop.f32.mrb[0].mxu0
        %v3207 = vadd.f32 0.0, %v3206
        %v3208 = vpop.f32.mrb[0].mxu0
        %3209 = vmatprep.mubr.bf16.mxu0 %v1187
        %3210 = vmatmul.mubr.bf16.gmra.mrb[0].mxu0 %v1186
        %v3211 = vpop.f32.mrb[0].mxu0
        %v3212 = vadd.f32 0.0, %v3211
        %v3213 = vpop.f32.mrb[0].mxu0
        %v3214 = vpop.f32.mrb[0].mxu0
        %v3215 = vadd.f32 0.0, %v3214
        %v3216 = vpop.f32.mrb[0].mxu0
        %3217 = vmatprep.mubr.bf16.mxu0 %v1189
        %3218 = vmatmul.mubr.bf16.gmra.mrb[0].mxu0 %v1188
        %v3219 = vpop.f32.mrb[0].mxu0
        %v3220 = vadd.f32 0.0, %v3219
        %v3221 = vpop.f32.mrb[0].mxu0
        %v3222 = vpop.f32.mrb[0].mxu0
        %v3223 = vadd.f32 0.0, %v3222
        %v3224 = vpop.f32.mrb[0].mxu0
        %3225 = vmatprep.mubr.bf16.mxu0 %v1191
        %3226 = vmatmul.mubr.bf16.gmra.mrb[0].mxu0 %v1190
        %v3227 = vpop.f32.mrb[0].mxu0
        %v3228 = vadd.f32 0.0, %v3227
        %v3229 = vpop.f32.mrb[0].mxu0
        %v3230 = vpop.f32.mrb[0].mxu0
        %v3231 = vadd.f32 0.0, %v3230
        %v3232 = vpop.f32.mrb[0].mxu0
        %3233 = vmatprep.mubr.bf16.mxu0 %v1193
        %3234 = vmatmul.mubr.bf16.gmra.mrb[0].mxu0 %v1192
        %v3235 = vpop.f32.mrb[0].mxu0
        %v3236 = vadd.f32 0.0, %v3235
        %v3237 = vpop.f32.mrb[0].mxu0
        %v3238 = vpop.f32.mrb[0].mxu0
        %v3239 = vadd.f32 0.0, %v3238
        %v3240 = vpop.f32.mrb[0].mxu0
        %3241 = vdwg.mxu0
        %v3242 = vadd.f32 %v3000, %v3180
        %v3243 = vadd.f32 %v3001, %v3183
        %v3244 = vadd.f32 %v3002, %v3188
        %v3245 = vadd.f32 %v3003, %v3191
        %v3246 = vadd.f32 %v3004, %v3196
        %v3247 = vadd.f32 %v3005, %v3199
        %v3248 = vadd.f32 %v3006, %v3204
        %v3249 = vadd.f32 %v3007, %v3207
        %v3250 = vadd.f32 %v3008, %v3212
        %v3251 = vadd.f32 %v3009, %v3215
        %v3252 = vadd.f32 %v3010, %v3220
        %v3253 = vadd.f32 %v3011, %v3223
        %v3254 = vadd.f32 %v3012, %v3228
        %v3255 = vadd.f32 %v3013, %v3231
        %v3256 = vadd.f32 %v3014, %v3236
        %v3257 = vadd.f32 %v3015, %v3239
        %s3258 = scalar_lea.vmem [#allocation8], 896
        %v3259 = vld [vmem:[%s3258] sm:$0xf]
        %v3260 = vld [vmem:[%s3258 + $0x4] sm:$0xf]
        %v3261 = vld [vmem:[%s3258 + $0x8] sm:$0xf]
        %v3262 = vld [vmem:[%s3258 + $0xc] sm:$0xf]
        %v3263 = vld [vmem:[%s3258 + $0x10] sm:$0xf]
        %v3264 = vld [vmem:[%s3258 + $0x14] sm:$0xf]
        %v3265 = vld [vmem:[%s3258 + $0x18] sm:$0xf]
        %v3266 = vld [vmem:[%s3258 + $0x1c] sm:$0xf]
        %v3267 = vld [vmem:[%s3258 + $0x20] sm:$0xf]
        %v3268 = vld [vmem:[%s3258 + $0x24] sm:$0xf]
        %v3269 = vld [vmem:[%s3258 + $0x28] sm:$0xf]
        %v3270 = vld [vmem:[%s3258 + $0x2c] sm:$0xf]
        %v3271 = vld [vmem:[%s3258 + $0x30] sm:$0xf]
        %v3272 = vld [vmem:[%s3258 + $0x34] sm:$0xf]
        %v3273 = vld [vmem:[%s3258 + $0x38] sm:$0xf]
        %v3274 = vld [vmem:[%s3258 + $0x3c] sm:$0xf]
        %v3275 = vld [vmem:[%s3258 + $0x40] sm:$0xf]
        %v3276 = vld [vmem:[%s3258 + $0x44] sm:$0xf]
        %v3277 = vld [vmem:[%s3258 + $0x48] sm:$0xf]
        %v3278 = vld [vmem:[%s3258 + $0x4c] sm:$0xf]
        %v3279 = vld [vmem:[%s3258 + $0x50] sm:$0xf]
        %v3280 = vld [vmem:[%s3258 + $0x54] sm:$0xf]
        %v3281 = vld [vmem:[%s3258 + $0x58] sm:$0xf]
        %v3282 = vld [vmem:[%s3258 + $0x5c] sm:$0xf]
        %v3283 = vld [vmem:[%s3258 + $0x60] sm:$0xf]
        %v3284 = vld [vmem:[%s3258 + $0x64] sm:$0xf]
        %v3285 = vld [vmem:[%s3258 + $0x68] sm:$0xf]
        %v3286 = vld [vmem:[%s3258 + $0x6c] sm:$0xf]
        %v3287 = vld [vmem:[%s3258 + $0x70] sm:$0xf]
        %v3288 = vld [vmem:[%s3258 + $0x74] sm:$0xf]
        %v3289 = vld [vmem:[%s3258 + $0x78] sm:$0xf]
        %v3290 = vld [vmem:[%s3258 + $0x7c] sm:$0xf]
        %v3323 = vunpack.c.l.b16 %v3259
        %v3324 = vunpack.c.l.b16 %v3260
        %v3325 = vunpack.c.l.b16 %v3261
        %v3326 = vunpack.c.l.b16 %v3262
        %v3327 = vunpack.c.l.b16 %v3263
        %v3328 = vunpack.c.l.b16 %v3264
        %v3329 = vunpack.c.l.b16 %v3265
        %v3330 = vunpack.c.l.b16 %v3266
        %v3331 = vunpack.c.l.b16 %v3267
        %v3332 = vunpack.c.l.b16 %v3268
        %v3333 = vunpack.c.l.b16 %v3269
        %v3334 = vunpack.c.l.b16 %v3270
        %v3335 = vunpack.c.l.b16 %v3271
        %v3336 = vunpack.c.l.b16 %v3272
        %v3337 = vunpack.c.l.b16 %v3273
        %v3338 = vunpack.c.l.b16 %v3274
        %v3339 = vunpack.c.l.b16 %v3275
        %v3340 = vunpack.c.l.b16 %v3276
        %v3341 = vunpack.c.l.b16 %v3277
        %v3342 = vunpack.c.l.b16 %v3278
        %v3343 = vunpack.c.l.b16 %v3279
        %v3344 = vunpack.c.l.b16 %v3280
        %v3345 = vunpack.c.l.b16 %v3281
        %v3346 = vunpack.c.l.b16 %v3282
        %v3347 = vunpack.c.l.b16 %v3283
        %v3348 = vunpack.c.l.b16 %v3284
        %v3349 = vunpack.c.l.b16 %v3285
        %v3350 = vunpack.c.l.b16 %v3286
        %v3351 = vunpack.c.l.b16 %v3287
        %v3352 = vunpack.c.l.b16 %v3288
        %v3353 = vunpack.c.l.b16 %v3289
        %v3354 = vunpack.c.l.b16 %v3290
        %v3355 = vpack.c.b16 %v3324, %v3323
        %v3356 = vpack.c.b16 %v3326, %v3325
        %v3357 = vpack.c.b16 %v3328, %v3327
        %v3358 = vpack.c.b16 %v3330, %v3329
        %v3359 = vpack.c.b16 %v3332, %v3331
        %v3360 = vpack.c.b16 %v3334, %v3333
        %v3361 = vpack.c.b16 %v3336, %v3335
        %v3362 = vpack.c.b16 %v3338, %v3337
        %v3363 = vpack.c.b16 %v3340, %v3339
        %v3364 = vpack.c.b16 %v3342, %v3341
        %v3365 = vpack.c.b16 %v3344, %v3343
        %v3366 = vpack.c.b16 %v3346, %v3345
        %v3367 = vpack.c.b16 %v3348, %v3347
        %v3368 = vpack.c.b16 %v3350, %v3349
        %v3369 = vpack.c.b16 %v3352, %v3351
        %v3370 = vpack.c.b16 %v3354, %v3353
        %3387 = vmatprep.subr.bf16.mxu0 0
        %3388 = vmatpush1.bf16.msra.mxu0 %v3355
        %3389 = vmatprep.subr.bf16.mxu0 0
        %3390 = vmatpush1.bf16.msra.mxu0 %v3356
        %3391 = vmatprep.subr.bf16.mxu0 0
        %3392 = vmatpush1.bf16.msra.mxu0 %v3357
        %3393 = vmatprep.subr.bf16.mxu0 0
        %3394 = vmatpush1.bf16.msra.mxu0 %v3358
        %3395 = vmatprep.subr.bf16.mxu0 0
        %3396 = vmatpush1.bf16.msra.mxu0 %v3359
        %3397 = vmatprep.subr.bf16.mxu0 0
        %3398 = vmatpush1.bf16.msra.mxu0 %v3360
        %3399 = vmatprep.subr.bf16.mxu0 0
        %3400 = vmatpush1.bf16.msra.mxu0 %v3361
        %3401 = vmatprep.subr.bf16.mxu0 0
        %3402 = vmatpush1.bf16.msra.mxu0 %v3362
        %3403 = vmatprep.subr.bf16.mxu0 0
        %3404 = vmatpush1.bf16.msra.mxu0 %v3363
        %3405 = vmatprep.subr.bf16.mxu0 0
        %3406 = vmatpush1.bf16.msra.mxu0 %v3364
        %3407 = vmatprep.subr.bf16.mxu0 0
        %3408 = vmatpush1.bf16.msra.mxu0 %v3365
        %3409 = vmatprep.subr.bf16.mxu0 0
        %3410 = vmatpush1.bf16.msra.mxu0 %v3366
        %3411 = vmatprep.subr.bf16.mxu0 0
        %3412 = vmatpush1.bf16.msra.mxu0 %v3367
        %3413 = vmatprep.subr.bf16.mxu0 0
        %3414 = vmatpush1.bf16.msra.mxu0 %v3368
        %3415 = vmatprep.subr.bf16.mxu0 0
        %3416 = vmatpush1.bf16.msra.mxu0 %v3369
        %3417 = vmatprep.subr.bf16.mxu0 0
        %3418 = vmatpush1.bf16.msra.mxu0 %v3370
        %3419 = vmatprep.mubr.bf16.mxu0 %v612
        %3420 = vmatmul.mubr.bf16.gmra.mrb[0].mxu0 %v611
        %v3421 = vpop.f32.mrb[0].mxu0
        %v3422 = vadd.f32 0.0, %v3421
        %v3423 = vpop.f32.mrb[0].mxu0
        %v3424 = vpop.f32.mrb[0].mxu0
        %v3425 = vadd.f32 0.0, %v3424
        %v3426 = vpop.f32.mrb[0].mxu0
        %3427 = vmatprep.mubr.bf16.mxu0 %v614
        %3428 = vmatmul.mubr.bf16.gmra.mrb[0].mxu0 %v613
        %v3429 = vpop.f32.mrb[0].mxu0
        %v3430 = vadd.f32 0.0, %v3429
        %v3431 = vpop.f32.mrb[0].mxu0
        %v3432 = vpop.f32.mrb[0].mxu0
        %v3433 = vadd.f32 0.0, %v3432
        %v3434 = vpop.f32.mrb[0].mxu0
        %3435 = vmatprep.mubr.bf16.mxu0 %v616
        %3436 = vmatmul.mubr.bf16.gmra.mrb[0].mxu0 %v615
        %v3437 = vpop.f32.mrb[0].mxu0
        %v3438 = vadd.f32 0.0, %v3437
        %v3439 = vpop.f32.mrb[0].mxu0
        %v3440 = vpop.f32.mrb[0].mxu0
        %v3441 = vadd.f32 0.0, %v3440
        %v3442 = vpop.f32.mrb[0].mxu0
        %3443 = vmatprep.mubr.bf16.mxu0 %v618
        %3444 = vmatmul.mubr.bf16.gmra.mrb[0].mxu0 %v617
        %v3445 = vpop.f32.mrb[0].mxu0
        %v3446 = vadd.f32 0.0, %v3445
        %v3447 = vpop.f32.mrb[0].mxu0
        %v3448 = vpop.f32.mrb[0].mxu0
        %v3449 = vadd.f32 0.0, %v3448
        %v3450 = vpop.f32.mrb[0].mxu0
        %3451 = vmatprep.mubr.bf16.mxu0 %v620
        %3452 = vmatmul.mubr.bf16.gmra.mrb[0].mxu0 %v619
        %v3453 = vpop.f32.mrb[0].mxu0
        %v3454 = vadd.f32 0.0, %v3453
        %v3455 = vpop.f32.mrb[0].mxu0
        %v3456 = vpop.f32.mrb[0].mxu0
        %v3457 = vadd.f32 0.0, %v3456
        %v3458 = vpop.f32.mrb[0].mxu0
        %3459 = vmatprep.mubr.bf16.mxu0 %v622
        %3460 = vmatmul.mubr.bf16.gmra.mrb[0].mxu0 %v621
        %v3461 = vpop.f32.mrb[0].mxu0
        %v3462 = vadd.f32 0.0, %v3461
        %v3463 = vpop.f32.mrb[0].mxu0
        %v3464 = vpop.f32.mrb[0].mxu0
        %v3465 = vadd.f32 0.0, %v3464
        %v3466 = vpop.f32.mrb[0].mxu0
        %3467 = vmatprep.mubr.bf16.mxu0 %v624
        %3468 = vmatmul.mubr.bf16.gmra.mrb[0].mxu0 %v623
        %v3469 = vpop.f32.mrb[0].mxu0
        %v3470 = vadd.f32 0.0, %v3469
        %v3471 = vpop.f32.mrb[0].mxu0
        %v3472 = vpop.f32.mrb[0].mxu0
        %v3473 = vadd.f32 0.0, %v3472
        %v3474 = vpop.f32.mrb[0].mxu0
        %3475 = vmatprep.mubr.bf16.mxu0 %v648
        %3476 = vmatmul.mubr.bf16.gmra.mrb[0].mxu0 %v647
        %v3477 = vpop.f32.mrb[0].mxu0
        %v3478 = vadd.f32 0.0, %v3477
        %v3479 = vpop.f32.mrb[0].mxu0
        %v3480 = vpop.f32.mrb[0].mxu0
        %v3481 = vadd.f32 0.0, %v3480
        %v3482 = vpop.f32.mrb[0].mxu0
        %3483 = vdwg.mxu0
        %v3484 = vadd.f32 %v3242, %v3422
        %v3485 = vadd.f32 %v3243, %v3425
        %v3486 = vadd.f32 %v3244, %v3430
        %v3487 = vadd.f32 %v3245, %v3433
        %v3488 = vadd.f32 %v3246, %v3438
        %v3489 = vadd.f32 %v3247, %v3441
        %v3490 = vadd.f32 %v3248, %v3446
        %v3491 = vadd.f32 %v3249, %v3449
        %v3492 = vadd.f32 %v3250, %v3454
        %v3493 = vadd.f32 %v3251, %v3457
        %v3494 = vadd.f32 %v3252, %v3462
        %v3495 = vadd.f32 %v3253, %v3465
        %v3496 = vadd.f32 %v3254, %v3470
        %v3497 = vadd.f32 %v3255, %v3473
        %v3498 = vadd.f32 %v3256, %v3478
        %v3499 = vadd.f32 %v3257, %v3481
        %s3500 = scalar_lea.vmem [#allocation8], 1024
        %v3501 = vld [vmem:[%s3500] sm:$0xf]
        %v3502 = vld [vmem:[%s3500 + $0x4] sm:$0xf]
        %v3503 = vld [vmem:[%s3500 + $0x8] sm:$0xf]
        %v3504 = vld [vmem:[%s3500 + $0xc] sm:$0xf]
        %v3505 = vld [vmem:[%s3500 + $0x10] sm:$0xf]
        %v3506 = vld [vmem:[%s3500 + $0x14] sm:$0xf]
        %v3507 = vld [vmem:[%s3500 + $0x18] sm:$0xf]
        %v3508 = vld [vmem:[%s3500 + $0x1c] sm:$0xf]
        %v3509 = vld [vmem:[%s3500 + $0x20] sm:$0xf]
        %v3510 = vld [vmem:[%s3500 + $0x24] sm:$0xf]
        %v3511 = vld [vmem:[%s3500 + $0x28] sm:$0xf]
        %v3512 = vld [vmem:[%s3500 + $0x2c] sm:$0xf]
        %v3513 = vld [vmem:[%s3500 + $0x30] sm:$0xf]
        %v3514 = vld [vmem:[%s3500 + $0x34] sm:$0xf]
        %v3515 = vld [vmem:[%s3500 + $0x38] sm:$0xf]
        %v3516 = vld [vmem:[%s3500 + $0x3c] sm:$0xf]
        %v3517 = vld [vmem:[%s3500 + $0x40] sm:$0xf]
        %v3518 = vld [vmem:[%s3500 + $0x44] sm:$0xf]
        %v3519 = vld [vmem:[%s3500 + $0x48] sm:$0xf]
        %v3520 = vld [vmem:[%s3500 + $0x4c] sm:$0xf]
        %v3521 = vld [vmem:[%s3500 + $0x50] sm:$0xf]
        %v3522 = vld [vmem:[%s3500 + $0x54] sm:$0xf]
        %v3523 = vld [vmem:[%s3500 + $0x58] sm:$0xf]
        %v3524 = vld [vmem:[%s3500 + $0x5c] sm:$0xf]
        %v3525 = vld [vmem:[%s3500 + $0x60] sm:$0xf]
        %v3526 = vld [vmem:[%s3500 + $0x64] sm:$0xf]
        %v3527 = vld [vmem:[%s3500 + $0x68] sm:$0xf]
        %v3528 = vld [vmem:[%s3500 + $0x6c] sm:$0xf]
        %v3529 = vld [vmem:[%s3500 + $0x70] sm:$0xf]
        %v3530 = vld [vmem:[%s3500 + $0x74] sm:$0xf]
        %v3531 = vld [vmem:[%s3500 + $0x78] sm:$0xf]
        %v3532 = vld [vmem:[%s3500 + $0x7c] sm:$0xf]
        %v3565 = vunpack.c.l.b16 %v3501
        %v3566 = vunpack.c.l.b16 %v3502
        %v3567 = vunpack.c.l.b16 %v3503
        %v3568 = vunpack.c.l.b16 %v3504
        %v3569 = vunpack.c.l.b16 %v3505
        %v3570 = vunpack.c.l.b16 %v3506
        %v3571 = vunpack.c.l.b16 %v3507
        %v3572 = vunpack.c.l.b16 %v3508
        %v3573 = vunpack.c.l.b16 %v3509
        %v3574 = vunpack.c.l.b16 %v3510
        %v3575 = vunpack.c.l.b16 %v3511
        %v3576 = vunpack.c.l.b16 %v3512
        %v3577 = vunpack.c.l.b16 %v3513
        %v3578 = vunpack.c.l.b16 %v3514
        %v3579 = vunpack.c.l.b16 %v3515
        %v3580 = vunpack.c.l.b16 %v3516
        %v3581 = vunpack.c.l.b16 %v3517
        %v3582 = vunpack.c.l.b16 %v3518
        %v3583 = vunpack.c.l.b16 %v3519
        %v3584 = vunpack.c.l.b16 %v3520
        %v3585 = vunpack.c.l.b16 %v3521
        %v3586 = vunpack.c.l.b16 %v3522
        %v3587 = vunpack.c.l.b16 %v3523
        %v3588 = vunpack.c.l.b16 %v3524
        %v3589 = vunpack.c.l.b16 %v3525
        %v3590 = vunpack.c.l.b16 %v3526
        %v3591 = vunpack.c.l.b16 %v3527
        %v3592 = vunpack.c.l.b16 %v3528
        %v3593 = vunpack.c.l.b16 %v3529
        %v3594 = vunpack.c.l.b16 %v3530
        %v3595 = vunpack.c.l.b16 %v3531
        %v3596 = vunpack.c.l.b16 %v3532
        %v3597 = vpack.c.b16 %v3566, %v3565
        %v3598 = vpack.c.b16 %v3568, %v3567
        %v3599 = vpack.c.b16 %v3570, %v3569
        %v3600 = vpack.c.b16 %v3572, %v3571
        %v3601 = vpack.c.b16 %v3574, %v3573
        %v3602 = vpack.c.b16 %v3576, %v3575
        %v3603 = vpack.c.b16 %v3578, %v3577
        %v3604 = vpack.c.b16 %v3580, %v3579
        %v3605 = vpack.c.b16 %v3582, %v3581
        %v3606 = vpack.c.b16 %v3584, %v3583
        %v3607 = vpack.c.b16 %v3586, %v3585
        %v3608 = vpack.c.b16 %v3588, %v3587
        %v3609 = vpack.c.b16 %v3590, %v3589
        %v3610 = vpack.c.b16 %v3592, %v3591
        %v3611 = vpack.c.b16 %v3594, %v3593
        %v3612 = vpack.c.b16 %v3596, %v3595
        %3629 = vmatprep.subr.bf16.mxu0 0
        %3630 = vmatpush1.bf16.msra.mxu0 %v3597
        %3631 = vmatprep.subr.bf16.mxu0 0
        %3632 = vmatpush1.bf16.msra.mxu0 %v3598
        %3633 = vmatprep.subr.bf16.mxu0 0
        %3634 = vmatpush1.bf16.msra.mxu0 %v3599
        %3635 = vmatprep.subr.bf16.mxu0 0
        %3636 = vmatpush1.bf16.msra.mxu0 %v3600
        %3637 = vmatprep.subr.bf16.mxu0 0
        %3638 = vmatpush1.bf16.msra.mxu0 %v3601
        %3639 = vmatprep.subr.bf16.mxu0 0
        %3640 = vmatpush1.bf16.msra.mxu0 %v3602
        %3641 = vmatprep.subr.bf16.mxu0 0
        %3642 = vmatpush1.bf16.msra.mxu0 %v3603
        %3643 = vmatprep.subr.bf16.mxu0 0
        %3644 = vmatpush1.bf16.msra.mxu0 %v3604
        %3645 = vmatprep.subr.bf16.mxu0 0
        %3646 = vmatpush1.bf16.msra.mxu0 %v3605
        %3647 = vmatprep.subr.bf16.mxu0 0
        %3648 = vmatpush1.bf16.msra.mxu0 %v3606
        %3649 = vmatprep.subr.bf16.mxu0 0
        %3650 = vmatpush1.bf16.msra.mxu0 %v3607
        %3651 = vmatprep.subr.bf16.mxu0 0
        %3652 = vmatpush1.bf16.msra.mxu0 %v3608
        %3653 = vmatprep.subr.bf16.mxu0 0
        %3654 = vmatpush1.bf16.msra.mxu0 %v3609
        %3655 = vmatprep.subr.bf16.mxu0 0
        %3656 = vmatpush1.bf16.msra.mxu0 %v3610
        %3657 = vmatprep.subr.bf16.mxu0 0
        %3658 = vmatpush1.bf16.msra.mxu0 %v3611
        %3659 = vmatprep.subr.bf16.mxu0 0
        %3660 = vmatpush1.bf16.msra.mxu0 %v3612
        %3661 = vmatprep.mubr.bf16.mxu0 %v1582
        %3662 = vmatmul.mubr.bf16.gmra.mrb[0].mxu0 %v1581
        %v3663 = vpop.f32.mrb[0].mxu0
        %v3664 = vadd.f32 0.0, %v3663
        %v3665 = vpop.f32.mrb[0].mxu0
        %v3666 = vpop.f32.mrb[0].mxu0
        %v3667 = vadd.f32 0.0, %v3666
        %v3668 = vpop.f32.mrb[0].mxu0
        %3669 = vmatprep.mubr.bf16.mxu0 %v1584
        %3670 = vmatmul.mubr.bf16.gmra.mrb[0].mxu0 %v1583
        %v3671 = vpop.f32.mrb[0].mxu0
        %v3672 = vadd.f32 0.0, %v3671
        %v3673 = vpop.f32.mrb[0].mxu0
        %v3674 = vpop.f32.mrb[0].mxu0
        %v3675 = vadd.f32 0.0, %v3674
        %v3676 = vpop.f32.mrb[0].mxu0
        %3677 = vmatprep.mubr.bf16.mxu0 %v1586
        %3678 = vmatmul.mubr.bf16.gmra.mrb[0].mxu0 %v1585
        %v3679 = vpop.f32.mrb[0].mxu0
        %v3680 = vadd.f32 0.0, %v3679
        %v3681 = vpop.f32.mrb[0].mxu0
        %v3682 = vpop.f32.mrb[0].mxu0
        %v3683 = vadd.f32 0.0, %v3682
        %v3684 = vpop.f32.mrb[0].mxu0
        %3685 = vmatprep.mubr.bf16.mxu0 %v1588
        %3686 = vmatmul.mubr.bf16.gmra.mrb[0].mxu0 %v1587
        %v3687 = vpop.f32.mrb[0].mxu0
        %v3688 = vadd.f32 0.0, %v3687
        %v3689 = vpop.f32.mrb[0].mxu0
        %v3690 = vpop.f32.mrb[0].mxu0
        %v3691 = vadd.f32 0.0, %v3690
        %v3692 = vpop.f32.mrb[0].mxu0
        %3693 = vmatprep.mubr.bf16.mxu0 %v1590
        %3694 = vmatmul.mubr.bf16.gmra.mrb[0].mxu0 %v1589
        %v3695 = vpop.f32.mrb[0].mxu0
        %v3696 = vadd.f32 0.0, %v3695
        %v3697 = vpop.f32.mrb[0].mxu0
        %v3698 = vpop.f32.mrb[0].mxu0
        %v3699 = vadd.f32 0.0, %v3698
        %v3700 = vpop.f32.mrb[0].mxu0
        %3701 = vmatprep.mubr.bf16.mxu0 %v1592
        %3702 = vmatmul.mubr.bf16.gmra.mrb[0].mxu0 %v1591
        %v3703 = vpop.f32.mrb[0].mxu0
        %v3704 = vadd.f32 0.0, %v3703
        %v3705 = vpop.f32.mrb[0].mxu0
        %v3706 = vpop.f32.mrb[0].mxu0
        %v3707 = vadd.f32 0.0, %v3706
        %v3708 = vpop.f32.mrb[0].mxu0
        %3709 = vmatprep.mubr.bf16.mxu0 %v1594
        %3710 = vmatmul.mubr.bf16.gmra.mrb[0].mxu0 %v1593
        %v3711 = vpop.f32.mrb[0].mxu0
        %v3712 = vadd.f32 0.0, %v3711
        %v3713 = vpop.f32.mrb[0].mxu0
        %v3714 = vpop.f32.mrb[0].mxu0
        %v3715 = vadd.f32 0.0, %v3714
        %v3716 = vpop.f32.mrb[0].mxu0
        %3717 = vmatprep.mubr.bf16.mxu0 %v1596
        %3718 = vmatmul.mubr.bf16.gmra.mrb[0].mxu0 %v1595
        %v3719 = vpop.f32.mrb[0].mxu0
        %v3720 = vadd.f32 0.0, %v3719
        %v3721 = vpop.f32.mrb[0].mxu0
        %v3722 = vpop.f32.mrb[0].mxu0
        %v3723 = vadd.f32 0.0, %v3722
        %v3724 = vpop.f32.mrb[0].mxu0
        %3725 = vdwg.mxu0
        %v3726 = vadd.f32 %v3484, %v3664
        %v3727 = vadd.f32 %v3485, %v3667
        %v3728 = vadd.f32 %v3486, %v3672
        %v3729 = vadd.f32 %v3487, %v3675
        %v3730 = vadd.f32 %v3488, %v3680
        %v3731 = vadd.f32 %v3489, %v3683
        %v3732 = vadd.f32 %v3490, %v3688
        %v3733 = vadd.f32 %v3491, %v3691
        %v3734 = vadd.f32 %v3492, %v3696
        %v3735 = vadd.f32 %v3493, %v3699
        %v3736 = vadd.f32 %v3494, %v3704
        %v3737 = vadd.f32 %v3495, %v3707
        %v3738 = vadd.f32 %v3496, %v3712
        %v3739 = vadd.f32 %v3497, %v3715
        %v3740 = vadd.f32 %v3498, %v3720
        %v3741 = vadd.f32 %v3499, %v3723
        %v3742 = vld [vmem:[%s6] sm:$0x1]
        %v3744 = vlaneseq
        %v3745 = vshrl.u32 %v3744, 7
        %v3746 = vsub.s32 0, %v3745
        %v3747 = vrot.slane %v3742, %v3746
        %v3749 = vadd.f32 %v3726, %v3747
        %v3750 = vadd.f32 %v3727, %v3747
        %v3751 = vadd.f32 %v3728, %v3747
        %v3752 = vadd.f32 %v3729, %v3747
        %v3753 = vadd.f32 %v3730, %v3747
        %v3754 = vadd.f32 %v3731, %v3747
        %v3755 = vadd.f32 %v3732, %v3747
        %v3756 = vadd.f32 %v3733, %v3747
        %v3757 = vadd.f32 %v3734, %v3747
        %v3758 = vadd.f32 %v3735, %v3747
        %v3759 = vadd.f32 %v3736, %v3747
        %v3760 = vadd.f32 %v3737, %v3747
        %v3761 = vadd.f32 %v3738, %v3747
        %v3762 = vadd.f32 %v3739, %v3747
        %v3763 = vadd.f32 %v3740, %v3747
        %v3764 = vadd.f32 %v3741, %v3747
        %3765 = vst [vmem:[%s474] sm:$0xff] %v3749
        %3766 = vst [vmem:[%s474 + $0x8] sm:$0xff] %v3750
        %3767 = vst [vmem:[%s474 + $0x10] sm:$0xff] %v3751
        %3768 = vst [vmem:[%s474 + $0x18] sm:$0xff] %v3752
        %3769 = vst [vmem:[%s474 + $0x20] sm:$0xff] %v3753
        %3770 = vst [vmem:[%s474 + $0x28] sm:$0xff] %v3754
        %3771 = vst [vmem:[%s474 + $0x30] sm:$0xff] %v3755
        %3772 = vst [vmem:[%s474 + $0x38] sm:$0xff] %v3756
        %3773 = vst [vmem:[%s474 + $0x40] sm:$0xff] %v3757
        %3774 = vst [vmem:[%s474 + $0x48] sm:$0xff] %v3758
        %3775 = vst [vmem:[%s474 + $0x50] sm:$0xff] %v3759
        %3776 = vst [vmem:[%s474 + $0x58] sm:$0xff] %v3760
        %3777 = vst [vmem:[%s474 + $0x60] sm:$0xff] %v3761
        %3778 = vst [vmem:[%s474 + $0x68] sm:$0xff] %v3762
        %3779 = vst [vmem:[%s474 + $0x70] sm:$0xff] %v3763
        %3780 = vst [vmem:[%s474 + $0x78] sm:$0xff] %v3764
        %v3781 = vadd.f32 %v3749, %v3750
        %v3782 = vadd.f32 %v3781, %v3751
        %v3783 = vadd.f32 %v3782, %v3752
        %v3784 = vadd.f32 %v3783, %v3753
        %v3785 = vadd.f32 %v3784, %v3754
        %v3786 = vadd.f32 %v3785, %v3755
        %v3787 = vadd.f32 %v3786, %v3756
        %v3788 = vadd.f32 %v3787, %v3757
        %v3789 = vadd.f32 %v3788, %v3758
        %v3790 = vadd.f32 %v3789, %v3759
        %v3791 = vadd.f32 %v3790, %v3760
        %v3792 = vadd.f32 %v3791, %v3761
        %v3793 = vadd.f32 %v3792, %v3762
        %v3794 = vadd.f32 %v3793, %v3763
        %v3795 = vadd.f32 %v3794, %v3764
        %v3796 = vrot.slane %v3795, 4
        %v3797 = vadd.f32 %v3795, %v3796
        %v3798 = vrot.slane %v3797, 2
        %v3799 = vadd.f32 %v3797, %v3798
        %v3800 = vrot.slane %v3799, 1
        %v3801 = vadd.f32 %v3799, %v3800
        %v3802 = vmul.f32 %v3749, %v3749
        %v3803 = vmul.f32 %v3750, %v3750
        %v3804 = vmul.f32 %v3751, %v3751
        %v3805 = vmul.f32 %v3752, %v3752
        %v3806 = vmul.f32 %v3753, %v3753
        %v3807 = vmul.f32 %v3754, %v3754
        %v3808 = vmul.f32 %v3755, %v3755
        %v3809 = vmul.f32 %v3756, %v3756
        %v3810 = vmul.f32 %v3757, %v3757
        %v3811 = vmul.f32 %v3758, %v3758
        %v3812 = vmul.f32 %v3759, %v3759
        %v3813 = vmul.f32 %v3760, %v3760
        %v3814 = vmul.f32 %v3761, %v3761
        %v3815 = vmul.f32 %v3762, %v3762
        %v3816 = vmul.f32 %v3763, %v3763
        %v3817 = vmul.f32 %v3764, %v3764
        %v3818 = vadd.f32 %v3802, %v3803
        %v3819 = vadd.f32 %v3818, %v3804
        %v3820 = vadd.f32 %v3819, %v3805
        %v3821 = vadd.f32 %v3820, %v3806
        %v3822 = vadd.f32 %v3821, %v3807
        %v3823 = vadd.f32 %v3822, %v3808
        %v3824 = vadd.f32 %v3823, %v3809
        %v3825 = vadd.f32 %v3824, %v3810
        %v3826 = vadd.f32 %v3825, %v3811
        %v3827 = vadd.f32 %v3826, %v3812
        %v3828 = vadd.f32 %v3827, %v3813
        %v3829 = vadd.f32 %v3828, %v3814
        %v3830 = vadd.f32 %v3829, %v3815
        %v3831 = vadd.f32 %v3830, %v3816
        %v3832 = vadd.f32 %v3831, %v3817
        %v3833 = vrot.slane %v3832, 4
        %v3834 = vadd.f32 %v3832, %v3833
        %v3835 = vrot.slane %v3834, 2
        %v3836 = vadd.f32 %v3834, %v3835
        %v3837 = vrot.slane %v3836, 1
        %v3838 = vadd.f32 %v3836, %v3837
        %vm3839 = vcmask 1040384
        %v3840 = vsel %vm3839, %v3801, %v3838
        %3841 = vst [vmem:[%s481] sm:$0x3] %v3840
        %s3842 = sand.u32 %s239, 1
        %s3843 = scalar_lea.sflag [#allocation4], %s3842
        %s3844 = sand.u32 %s239, 1
        %s3845 = smul.addr %s3844, 128
        %s3846 = scalar_lea.vmem [#allocation10], %s3845
        %s3847 = sand.u32 %s267, 1
        %s3848 = scalar_lea.sflag [#allocation12], %s3847
        %s3849 = sand.u32 %s267, 1
        %s3850 = smul.addr %s3849, 2
        %s3851 = scalar_lea.vmem [#allocation11], %s3850
        // Predicated region
        $region65: #{tpu_custom_call.1} parent=47 // pred_check
          %p3852 = pneg %p249
        $region66: #{tpu_custom_call.1} parent=47 // pred_check_branch
          %3854 = sbr.rel (%p3852) target = $region68
        $region67: #{tpu_custom_call.1} parent=47 // pred_region
          %s3855 = smul.u32 16, %s38
          %s3857 = ssub.s32 2048, 2048
          %3858 = vsyncadd %s3843, %s3857
          %s3859 = smul.addr %s37, 32
          %s3860 = sadd.s32 %s3855, %s3859
          %s3861 = smul.addr %s3860, 128
          %s3862 = scalar_lea.hbm %s7, %s3861
          %s3863 = sshll.u32 %s3846, 4
          %s3864 = int_to_ptr.vmem [resolvable:$true] %s3863
          %3869 = dma.vmem_to_hbm [thread:$0]  %s3864, 2048, %s3862, %s3843, 128, 128, 8
        $region68: #{tpu_custom_call.1} parent=47 // pred_fallthru
          _
        // Predicated region
        $region69: #{tpu_custom_call.1} parent=47 // pred_check
          %p3870 = pneg %p277
        $region70: #{tpu_custom_call.1} parent=47 // pred_check_branch
          %3872 = sbr.rel (%p3870) target = $region72
        $region71: #{tpu_custom_call.1} parent=47 // pred_region
          %s3874 = ssub.s32 32, 32
          %3875 = vsyncadd %s3848, %s3874
          %s3876 = smul.addr %s37, 2
          %s3877 = sadd.s32 %s38, %s3876
          %s3878 = smul.addr %s3877, 32
          %s3879 = scalar_lea.hbm %s8, %s3878
          %s3881 = sshll.u32 %s3851, 4
          %s3882 = int_to_ptr.vmem [resolvable:$true] %s3881
          %3884 = dma.vmem_to_hbm [thread:$0]  %s3882, 32, %s3879, %s3848
        $region72: #{tpu_custom_call.1} parent=47 // pred_fallthru
          _
      $region48: #{tpu_custom_call.1} parent=5 // pred_fallthru
        _
      %p3885 = scmp.le.s32.totalorder 2, %s28
      // Predicated region
      $region73: #{tpu_custom_call.1} parent=5 // pred_check
        %p3886 = pneg %p3885
      $region74: #{tpu_custom_call.1} parent=5 // pred_check_branch
        %3888 = sbr.rel (%p3886) target = $region76
      $region75: #{tpu_custom_call.1} parent=5 // pred_region
        %s3889 = ssub.s32 %s28, 2
        // Predicated region
        $region77: #{tpu_custom_call.1} parent=75 // pred_check
          %p3890 = pneg %p255
        $region78: #{tpu_custom_call.1} parent=75 // pred_check_branch
          %3892 = sbr.rel (%p3890) target = $region80
        $region79: #{tpu_custom_call.1} parent=75 // pred_region
          %s3893 = sand.u32 %s240, 1
          %s3894 = scalar_lea.sflag [#allocation4], %s3893
          %s3895 = sand.u32 %s240, 1
          %s3896 = smul.addr %s3895, 128
          %s3897 = scalar_lea.vmem [#allocation10], %s3896
          %3898 = dma.done %s3894, 2048
        $region80: #{tpu_custom_call.1} parent=75 // pred_fallthru
          _
        // Predicated region
        $region81: #{tpu_custom_call.1} parent=75 // pred_check
          %p3899 = pneg %p283
        $region82: #{tpu_custom_call.1} parent=75 // pred_check_branch
          %3901 = sbr.rel (%p3899) target = $region84
        $region83: #{tpu_custom_call.1} parent=75 // pred_region
          %s3902 = sand.u32 %s268, 1
          %s3903 = scalar_lea.sflag [#allocation12], %s3902
          %s3904 = sand.u32 %s268, 1
          %s3905 = smul.addr %s3904, 2
          %s3906 = scalar_lea.vmem [#allocation11], %s3905
          %3907 = dma.done %s3903, 32
        $region84: #{tpu_custom_call.1} parent=75 // pred_fallthru
          _
      $region76: #{tpu_custom_call.1} parent=5 // pred_fallthru
        _
    $region6: #{tpu_custom_call.1} parent=1 // loop_footer
      %s32 = sadd.s32 1, %s28
    $region7: #{tpu_custom_call.1} parent=1 // loop_footer_branch
      %27 = sbr.rel target = $region3
    $region8: #{tpu_custom_call.1} parent=1 // loop_exit
      _
    %3908 = vsyncpa [#allocation3], 1
    %s3909 = scalar_lea.sflag [#allocation3], 1
    %3910 = vsyncpa %s3909, 1
    %3911 = vsyncpa [#allocation6], 1
    %s3912 = scalar_lea.sflag [#allocation6], 1
    %3913 = vsyncpa %s3912, 1
    %3914 = vsyncpa [#allocation9], 1
    %3915 = vsyncpa [#allocation4], 1
    %s3916 = scalar_lea.sflag [#allocation4], 1
    %3917 = vsyncpa %s3916, 1
    %3918 = vsyncpa [#allocation12], 1
    %s3919 = scalar_lea.sflag [#allocation12], 1
    %3920 = vsyncpa %s3919, 1

</llo_original>
